<compile_context>
chip_gen: v5e
topology: v5e:2x2
jax: 0.10.0
libtpu: 0.0.40
codegen_flags: <defaults>
</compile_context>

<pallas_src>
import math

import jax
import jax.numpy as jnp
from jax import lax
from jax.experimental import pallas as pl
from jax.experimental.pallas import tpu as pltpu

# ---- model hyper-parameters (small, consistent with the module) -------------
TGT_VOCAB = 16
D_MODEL = 32
N_LAYERS = 2
D_FF = 64
D_K = 8
D_V = 8
N_HEADS = 4

NEG_INF = -1e9
LN_EPS = 1e-5  # torch.nn.LayerNorm default


# ---------------------------- in-kernel helpers -------------------------------
def _layer_norm(y):
    # LayerNorm constructed fresh in the PyTorch forward -> weight=1, bias=0.
    mean = jnp.mean(y, axis=-1, keepdims=True)
    var = jnp.mean((y - mean) ** 2, axis=-1, keepdims=True)
    return (y - mean) * lax.rsqrt(var + LN_EPS)


def _mha_block(x_flat, kv_flat, B, Lq, Lk, mask_add, wq, wk, wv, wo, ctx_scr):
    """Multi-head attention + residual + LayerNorm.

    x_flat:   (B*Lq, D)  queries / residual input (flat, lane-dense)
    kv_flat:  (B*Lk, D)  keys == values source
    mask_add: (B, Lq, Lk) additive mask (0 / -1e9), shared by all heads
    wq:       (D, H*d_k)  with 1/sqrt(d_k) pre-folded
    wk:       (D, H*d_k)   wv: (D, H*d_v)   wo: (H*d_v, D)
    ctx_scr:  (B*Lq, H*d_v) VMEM scratch (concat-heads buffer)

    Returns (y_flat (B*Lq, D), [attn_h (B, Lq, Lk)] * H).
    """
    # Dense flat projections: (B*L, D) x (D, H*dh) MXU matmuls (no per-head splits).
    q = jnp.dot(x_flat, wq, preferred_element_type=jnp.float32)    # (B*Lq, H*dk)
    k = jnp.dot(kv_flat, wk, preferred_element_type=jnp.float32)   # (B*Lk, H*dk)
    v = jnp.dot(kv_flat, wv, preferred_element_type=jnp.float32)   # (B*Lk, H*dv)

    # Major-axis split of the batch only; heads stay in the lane dim.
    q3 = q.reshape(B, Lq, N_HEADS * D_K)
    k3 = k.reshape(B, Lk, N_HEADS * D_K)
    v3 = v.reshape(B, Lk, N_HEADS * D_V)

    attn_heads = []
    for h in range(N_HEADS):                       # static unroll (H=4)
        qh = q3[:, :, h * D_K:(h + 1) * D_K]       # static lane slices
        kh = k3[:, :, h * D_K:(h + 1) * D_K]
        vh = v3[:, :, h * D_V:(h + 1) * D_V]

        s = jnp.einsum('bqd,bkd->bqk', qh, kh,
                       preferred_element_type=jnp.float32) + mask_add
        m = jnp.max(s, axis=-1, keepdims=True)
        e = jnp.exp(s - m)
        a = e * pl.reciprocal(jnp.sum(e, axis=-1, keepdims=True), approx=True)
        attn_heads.append(a)

        ctx = jnp.einsum('bqk,bkd->bqd', a, vh,
                         preferred_element_type=jnp.float32)       # (B, Lq, dv)
        # concat-heads layout (heads slow, d_v fast) via a static lane-slice store
        ctx_scr[:, h * D_V:(h + 1) * D_V] = ctx.reshape(B * Lq, D_V)

    # Single dense output projection on the concat-heads context.
    out = jnp.dot(ctx_scr[...], wo, preferred_element_type=jnp.float32)
    return _layer_norm(out + x_flat), attn_heads


def _ffn_block(x_flat, w1, w2):
    """PoswiseFeedForwardNet + residual + LayerNorm, whole batch flattened."""
    h = jnp.maximum(jnp.dot(x_flat, w1, preferred_element_type=jnp.float32), 0.0)
    o = jnp.dot(h, w2, preferred_element_type=jnp.float32)
    return _layer_norm(o + x_flat)


# ---------------------------- fused Pallas kernel ------------------------------
def decoder_kernel(dec_emb_ref, enc_out_ref, self_mask_ref, enc_mask_ref,
                   wq1_ref, wk1_ref, wv1_ref, wo1_ref,
                   wq2_ref, wk2_ref, wv2_ref, wo2_ref,
                   wff1_ref, wff2_ref,
                   out_ref, self_attn_ref, enc_attn_ref,
                   ctx_scr):
    """Entire decoder forward: N_LAYERS x (self-MHA, enc-dec MHA, FFN)."""
    B, Lq, D = dec_emb_ref.shape
    Lk = enc_out_ref.shape[1]

    x = dec_emb_ref[...].reshape(B * Lq, D)        # flat, lane-dense activations
    enc = enc_out_ref[...].reshape(B * Lk, D)
    self_mask = self_mask_ref[...]                 # (B, Lq, Lq) additive
    enc_mask = enc_mask_ref[...]                   # (B, Lq, Lk) additive

    for li in range(N_LAYERS):                     # static, tiny -> unrolled
        x, sa = _mha_block(x, x, B, Lq, Lq, self_mask,
                           wq1_ref[li], wk1_ref[li], wv1_ref[li], wo1_ref[li],
                           ctx_scr)
        for h in range(N_HEADS):                   # lane-dense attention output
            self_attn_ref[li, :, :, h * Lq:(h + 1) * Lq] = sa[h]

        x, ea = _mha_block(x, enc, B, Lq, Lk, enc_mask,
                           wq2_ref[li], wk2_ref[li], wv2_ref[li], wo2_ref[li],
                           ctx_scr)
        for h in range(N_HEADS):
            enc_attn_ref[li, :, :, h * Lk:(h + 1) * Lk] = ea[h]

        x = _ffn_block(x, wff1_ref[li], wff2_ref[li])

    out_ref[...] = x.reshape(B, Lq, D)


def _decoder_cost(B, Lq, Lk):
    """Rough FLOP / transcendental counts for pl.CostEstimate (advisory only)."""
    fq, fk = B * Lq, B * Lk

    def mha(kv_rows, kv_len):
        proj = (2 * fq * D_MODEL * (N_HEADS * D_K)
                + 2 * kv_rows * D_MODEL * (N_HEADS * (D_K + D_V)))
        core = 2 * 2 * B * N_HEADS * Lq * kv_len * D_K
        outp = 2 * fq * (N_HEADS * D_V) * D_MODEL
        return proj + core + outp

    ffn = 2 * 2 * fq * D_MODEL * D_FF
    flops = N_LAYERS * (mha(fq, Lq) + mha(fk, Lk) + ffn)
    transcendentals = N_LAYERS * (B * N_HEADS * Lq * (Lq + Lk)   # exp
                                  + 2 * B * N_HEADS * Lq         # reciprocal
                                  + 3 * fq)                      # rsqrt (LN)
    return int(flops), int(transcendentals)


def fused_decoder(dec_emb, enc_outputs, self_mask_add, enc_mask_add,
                  stacked_weights):
    B, Lq, D = dec_emb.shape
    Lk = enc_outputs.shape[1]

    vmem = pl.BlockSpec(memory_space=pltpu.MemorySpace.VMEM)
    inputs = (dec_emb, enc_outputs, self_mask_add, enc_mask_add) + tuple(stacked_weights)

    out_shapes = (
        jax.ShapeDtypeStruct((B, Lq, D), jnp.float32),
        # lane-dense attention maps: last dim = H*L (=32), re-laid out in JAX
        jax.ShapeDtypeStruct((N_LAYERS, B, Lq, N_HEADS * Lq), jnp.float32),
        jax.ShapeDtypeStruct((N_LAYERS, B, Lq, N_HEADS * Lk), jnp.float32),
    )

    in_bytes = sum(int(x.size) * x.dtype.itemsize for x in inputs)
    out_bytes = sum(math.prod(s.shape) * s.dtype.itemsize for s in out_shapes)
    flops, transc = _decoder_cost(B, Lq, Lk)

    # Single-step (no-grid) call: whole model state is a few hundred KB, well
    # inside scoped VMEM on v5e/v6e/v7x.
    # TODO(synk): for large B add a "parallel" batch grid axis (v7x 2nd TC) and
    # sequence tiling before scaling L (v7x has only 64 MiB VMEM).
    return pl.pallas_call(
        decoder_kernel,
        out_shape=out_shapes,
        in_specs=[vmem] * len(inputs),
        out_specs=(vmem, vmem, vmem),
        scratch_shapes=[pltpu.VMEM((B * Lq, N_HEADS * D_V), jnp.float32)],
        cost_estimate=pl.CostEstimate(flops=flops, transcendentals=transc,
                                      bytes_accessed=in_bytes + out_bytes),
    )(*inputs)


# ---------------------------- plain-JAX glue -----------------------------------
def positional_encoding(max_len, d_model):
    position = jnp.arange(max_len, dtype=jnp.float32)[:, None]
    div_term = jnp.exp(jnp.arange(0, d_model, 2, dtype=jnp.float32)
                       * (-math.log(10000.0) / d_model))
    pe = jnp.zeros((max_len, d_model), jnp.float32)
    pe = pe.at[:, 0::2].set(jnp.sin(position * div_term))
    pe = pe.at[:, 1::2].set(jnp.cos(position * div_term))
    return pe


def get_attn_pad_mask(seq_q, seq_k):
    B, len_q = seq_q.shape
    len_k = seq_k.shape[1]
    pad = (seq_k == 0).astype(jnp.float32)[:, None, :]          # (B, 1, len_k)
    return jnp.broadcast_to(pad, (B, len_q, len_k))


def get_attn_subsequence_mask(seq):
    B, L = seq.shape
    sub = jnp.triu(jnp.ones((L, L), jnp.float32), k=1)[None, :, :]
    return jnp.broadcast_to(sub, (B, L, L))


def _prepare_weights(params):
    """Layer-stack weights (no head-split, no batch replication).

    1/sqrt(d_k) is folded into W_Q so the kernel needs no score scaling."""
    layers = params["layers"]
    scale = jnp.float32(1.0 / math.sqrt(D_K))
    wq1 = jnp.stack([l["wq1"] for l in layers]) * scale   # (L, D, H*dk)
    wk1 = jnp.stack([l["wk1"] for l in layers])
    wv1 = jnp.stack([l["wv1"] for l in layers])
    wo1 = jnp.stack([l["wo1"] for l in layers])            # (L, H*dv, D)
    wq2 = jnp.stack([l["wq2"] for l in layers]) * scale
    wk2 = jnp.stack([l["wk2"] for l in layers])
    wv2 = jnp.stack([l["wv2"] for l in layers])
    wo2 = jnp.stack([l["wo2"] for l in layers])
    wff1 = jnp.stack([l["w_ff1"] for l in layers])          # (L, D, D_FF)
    wff2 = jnp.stack([l["w_ff2"] for l in layers])          # (L, D_FF, D)
    return (wq1, wk1, wv1, wo1, wq2, wk2, wv2, wo2, wff1, wff2)


def init_params(key):
    # TODO(synk): the reference tutorial's MHA/FFN Linears are bias-free; add
    # bias terms here if the actual module uses nn.Linear(bias=True).
    keys = jax.random.split(key, 1 + N_LAYERS)
    params = {"tgt_emb": jax.random.normal(keys[0], (TGT_VOCAB, D_MODEL), jnp.float32)}
    layers = []
    for li in range(N_LAYERS):
        lk = jax.random.split(keys[1 + li], 10)
        s = 0.1
        layers.append({
            "wq1": jax.random.normal(lk[0], (D_MODEL, N_HEADS * D_K), jnp.float32) * s,
            "wk1": jax.random.normal(lk[1], (D_MODEL, N_HEADS * D_K), jnp.float32) * s,
            "wv1": jax.random.normal(lk[2], (D_MODEL, N_HEADS * D_V), jnp.float32) * s,
            "wo1": jax.random.normal(lk[3], (N_HEADS * D_V, D_MODEL), jnp.float32) * s,
            "wq2": jax.random.normal(lk[4], (D_MODEL, N_HEADS * D_K), jnp.float32) * s,
            "wk2": jax.random.normal(lk[5], (D_MODEL, N_HEADS * D_K), jnp.float32) * s,
            "wv2": jax.random.normal(lk[6], (D_MODEL, N_HEADS * D_V), jnp.float32) * s,
            "wo2": jax.random.normal(lk[7], (N_HEADS * D_V, D_MODEL), jnp.float32) * s,
            "w_ff1": jax.random.normal(lk[8], (D_MODEL, D_FF), jnp.float32) * s,
            "w_ff2": jax.random.normal(lk[9], (D_FF, D_MODEL), jnp.float32) * s,
        })
    params["layers"] = layers
    return params


@jax.jit
def decoder_forward(params, dec_inputs, enc_inputs, enc_outputs):
    B, tgt_len = dec_inputs.shape
    src_len = enc_inputs.shape[1]

    # embedding + positional encoding (data-dependent gather -> plain JAX)
    word_emb = params["tgt_emb"][dec_inputs]                    # (B, tgt_len, D)
    pe = positional_encoding(tgt_len, D_MODEL)
    dec_emb = word_emb + pe[None, :, :]
    # TODO(synk): PositionalEncoding dropout (p=0.1) is identity in eval mode; omitted.

    # additive masks ({0, -1e9}), shared by all heads (no replication)
    self_mask01 = (get_attn_pad_mask(dec_inputs, dec_inputs)
                   + get_attn_subsequence_mask(dec_inputs)) > 0
    enc_mask01 = get_attn_pad_mask(dec_inputs, enc_inputs) > 0
    self_mask_add = jnp.where(self_mask01, NEG_INF, 0.0).astype(jnp.float32)
    enc_mask_add = jnp.where(enc_mask01, NEG_INF, 0.0).astype(jnp.float32)

    stacked = _prepare_weights(params)

    dec_out, self_attn_cat, enc_attn_cat = fused_decoder(
        dec_emb, enc_outputs, self_mask_add, enc_mask_add, stacked)

    # lane-dense (L, B, Lq, H*Lk) -> PyTorch layout (L, B, H, Lq, Lk)
    self_attn = self_attn_cat.reshape(N_LAYERS, B, tgt_len, N_HEADS, tgt_len)
    self_attn = jnp.transpose(self_attn, (0, 1, 3, 2, 4))
    enc_attn = enc_attn_cat.reshape(N_LAYERS, B, tgt_len, N_HEADS, src_len)
    enc_attn = jnp.transpose(enc_attn, (0, 1, 3, 2, 4))

    dec_self_attns = [self_attn[i] for i in range(N_LAYERS)]
    dec_enc_attns = [enc_attn[i] for i in range(N_LAYERS)]
    return dec_out, dec_self_attns, dec_enc_attns


# ---------------------------- main ---------------------------------------------
if __name__ == "__main__":
    key = jax.random.PRNGKey(0)
    p_key, e_key = jax.random.split(key)
    params = init_params(p_key)

    batch, tgt_len, src_len = 2, 8, 8
    dec_inputs = jnp.array([[1, 2, 3, 4, 5, 6, 7, 0],
                            [2, 3, 4, 5, 6, 7, 1, 0]], dtype=jnp.int32)
    enc_inputs = jnp.array([[1, 5, 6, 2, 3, 4, 0, 0],
                            [4, 3, 2, 1, 7, 6, 5, 0]], dtype=jnp.int32)
    enc_outputs = jax.random.normal(e_key, (batch, src_len, D_MODEL), jnp.float32)

    dec_out, self_attns, enc_attns = decoder_forward(
        params, dec_inputs, enc_inputs, enc_outputs)
    jax.block_until_ready(dec_out)
    jax.block_until_ready(self_attns)
    jax.block_until_ready(enc_attns)

    assert dec_out.shape == (batch, tgt_len, D_MODEL)
    assert len(self_attns) == N_LAYERS and len(enc_attns) == N_LAYERS
    assert self_attns[0].shape == (batch, N_HEADS, tgt_len, tgt_len)
    assert enc_attns[0].shape == (batch, N_HEADS, tgt_len, src_len)
    assert bool(jnp.all(jnp.isfinite(dec_out)))
    # softmax rows sum to 1 (approx reciprocal -> ~1e-4 relative error)
    assert bool(jnp.all(jnp.abs(jnp.sum(self_attns[0], axis=-1) - 1.0) < 5e-3))
    assert bool(jnp.all(jnp.abs(jnp.sum(enc_attns[0], axis=-1) - 1.0) < 5e-3))
    print("KERNEL_OK")
</pallas_src>

<mosaic_0001>
module attributes {stable_mosaic.version = 11 : i64} {
  func.func @decoder_kernel(%arg0: memref<2x8x32xf32, #tpu.memory_space<vmem>>, %arg1: memref<2x8x32xf32, #tpu.memory_space<vmem>>, %arg2: memref<2x8x8xf32, #tpu.memory_space<vmem>>, %arg3: memref<2x8x8xf32, #tpu.memory_space<vmem>>, %arg4: memref<2x32x32xf32, #tpu.memory_space<vmem>>, %arg5: memref<2x32x32xf32, #tpu.memory_space<vmem>>, %arg6: memref<2x32x32xf32, #tpu.memory_space<vmem>>, %arg7: memref<2x32x32xf32, #tpu.memory_space<vmem>>, %arg8: memref<2x32x32xf32, #tpu.memory_space<vmem>>, %arg9: memref<2x32x32xf32, #tpu.memory_space<vmem>>, %arg10: memref<2x32x32xf32, #tpu.memory_space<vmem>>, %arg11: memref<2x32x32xf32, #tpu.memory_space<vmem>>, %arg12: memref<2x32x64xf32, #tpu.memory_space<vmem>>, %arg13: memref<2x64x32xf32, #tpu.memory_space<vmem>>, %arg14: memref<2x8x32xf32, #tpu.memory_space<vmem>>, %arg15: memref<2x2x8x32xf32, #tpu.memory_space<vmem>>, %arg16: memref<2x2x8x32xf32, #tpu.memory_space<vmem>>, %arg17: memref<16x32xf32, #tpu.memory_space<vmem>>) attributes {dimension_semantics = [], scalar_prefetch = 0 : i64, scratch_operands = 1 : i64, tpu.core_type = #tpu.core_type<tc>} {
    %c0 = arith.constant 0 : index
    %c0_0 = arith.constant 0 : index
    %c0_1 = arith.constant 0 : index
    %0 = vector.load %arg0[%c0, %c0_0, %c0_1] : memref<2x8x32xf32, #tpu.memory_space<vmem>>, vector<2x8x32xf32>
    %1 = vector.shape_cast %0 : vector<2x8x32xf32> to vector<16x32xf32>
    %c0_2 = arith.constant 0 : index
    %c0_3 = arith.constant 0 : index
    %c0_4 = arith.constant 0 : index
    %2 = vector.load %arg1[%c0_2, %c0_3, %c0_4] : memref<2x8x32xf32, #tpu.memory_space<vmem>>, vector<2x8x32xf32>
    %3 = vector.shape_cast %2 : vector<2x8x32xf32> to vector<16x32xf32>
    %c0_5 = arith.constant 0 : index
    %c0_6 = arith.constant 0 : index
    %c0_7 = arith.constant 0 : index
    %4 = vector.load %arg2[%c0_5, %c0_6, %c0_7] : memref<2x8x8xf32, #tpu.memory_space<vmem>>, vector<2x8x8xf32>
    %c0_8 = arith.constant 0 : index
    %c0_9 = arith.constant 0 : index
    %c0_10 = arith.constant 0 : index
    %5 = vector.load %arg3[%c0_8, %c0_9, %c0_10] : memref<2x8x8xf32, #tpu.memory_space<vmem>>, vector<2x8x8xf32>
    %c0_11 = arith.constant 0 : index
    %c0_12 = arith.constant 0 : index
    %c0_13 = arith.constant 0 : index
    %6 = vector.load %arg4[%c0_11, %c0_12, %c0_13] : memref<2x32x32xf32, #tpu.memory_space<vmem>>, vector<1x32x32xf32>
    %7 = vector.shape_cast %6 : vector<1x32x32xf32> to vector<32x32xf32>
    %c0_14 = arith.constant 0 : index
    %c0_15 = arith.constant 0 : index
    %c0_16 = arith.constant 0 : index
    %8 = vector.load %arg5[%c0_14, %c0_15, %c0_16] : memref<2x32x32xf32, #tpu.memory_space<vmem>>, vector<1x32x32xf32>
    %9 = vector.shape_cast %8 : vector<1x32x32xf32> to vector<32x32xf32>
    %c0_17 = arith.constant 0 : index
    %c0_18 = arith.constant 0 : index
    %c0_19 = arith.constant 0 : index
    %10 = vector.load %arg6[%c0_17, %c0_18, %c0_19] : memref<2x32x32xf32, #tpu.memory_space<vmem>>, vector<1x32x32xf32>
    %11 = vector.shape_cast %10 : vector<1x32x32xf32> to vector<32x32xf32>
    %c0_20 = arith.constant 0 : index
    %c0_21 = arith.constant 0 : index
    %c0_22 = arith.constant 0 : index
    %12 = vector.load %arg7[%c0_20, %c0_21, %c0_22] : memref<2x32x32xf32, #tpu.memory_space<vmem>>, vector<1x32x32xf32>
    %13 = vector.shape_cast %12 : vector<1x32x32xf32> to vector<32x32xf32>
    %cst = arith.constant dense<0.000000e+00> : vector<16x32xf32>
    %14 = tpu.matmul %1, %7, %cst {dimension_numbers = #tpu.dot_dimension_numbers<[1], [0], [0], [1], [0, 0, 1, 1], [], []>} : vector<16x32xf32>, vector<32x32xf32>, vector<16x32xf32> -> vector<16x32xf32>
    %cst_23 = arith.constant dense<0.000000e+00> : vector<16x32xf32>
    %15 = tpu.matmul %1, %9, %cst_23 {dimension_numbers = #tpu.dot_dimension_numbers<[1], [0], [0], [1], [0, 0, 1, 1], [], []>} : vector<16x32xf32>, vector<32x32xf32>, vector<16x32xf32> -> vector<16x32xf32>
    %cst_24 = arith.constant dense<0.000000e+00> : vector<16x32xf32>
    %16 = tpu.matmul %1, %11, %cst_24 {dimension_numbers = #tpu.dot_dimension_numbers<[1], [0], [0], [1], [0, 0, 1, 1], [], []>} : vector<16x32xf32>, vector<32x32xf32>, vector<16x32xf32> -> vector<16x32xf32>
    %17 = vector.shape_cast %14 : vector<16x32xf32> to vector<2x8x32xf32>
    %18 = vector.shape_cast %15 : vector<16x32xf32> to vector<2x8x32xf32>
    %19 = vector.shape_cast %16 : vector<16x32xf32> to vector<2x8x32xf32>
    %20 = vector.extract_strided_slice %17 {offsets = [0, 0, 0], sizes = [2, 8, 8], strides = [1, 1, 1]} : vector<2x8x32xf32> to vector<2x8x8xf32>
    %21 = vector.extract_strided_slice %18 {offsets = [0, 0, 0], sizes = [2, 8, 8], strides = [1, 1, 1]} : vector<2x8x32xf32> to vector<2x8x8xf32>
    %22 = vector.extract_strided_slice %19 {offsets = [0, 0, 0], sizes = [2, 8, 8], strides = [1, 1, 1]} : vector<2x8x32xf32> to vector<2x8x8xf32>
    "tpu.trace_start"() <{level = 10 : i32, message = "bqd,bkd->bqk"}> : () -> ()
    %cst_25 = arith.constant dense<0.000000e+00> : vector<2x8x8xf32>
    %23 = tpu.matmul %20, %21, %cst_25 {dimension_numbers = #tpu.dot_dimension_numbers<[2], [2], [1], [1], [0, 0, 0, 1, 1, 1], [0], [0]>} : vector<2x8x8xf32>, vector<2x8x8xf32>, vector<2x8x8xf32> -> vector<2x8x8xf32>
    "tpu.trace_stop"() : () -> ()
    %24 = arith.addf %23, %4 : vector<2x8x8xf32>
    %cst_26 = arith.constant dense<0xFF800000> : vector<2x8xf32>
    %25 = vector.multi_reduction <maximumf>, %24, %cst_26 [2] : vector<2x8x8xf32> to vector<2x8xf32>
    %26 = vector.shape_cast %25 : vector<2x8xf32> to vector<2x8x1xf32>
    %27 = vector.broadcast %26 : vector<2x8x1xf32> to vector<2x8x8xf32>
    %28 = arith.subf %24, %27 : vector<2x8x8xf32>
    %29 = math.exp %28 : vector<2x8x8xf32>
    %cst_27 = arith.constant dense<0.000000e+00> : vector<2x8xf32>
    %30 = vector.multi_reduction <add>, %29, %cst_27 [2] : vector<2x8x8xf32> to vector<2x8xf32>
    %31 = vector.shape_cast %30 : vector<2x8xf32> to vector<2x8x1xf32>
    %32 = tpu.reciprocal %31 {approx = true} : vector<2x8x1xf32> -> vector<2x8x1xf32>
    %33 = vector.broadcast %32 : vector<2x8x1xf32> to vector<2x8x8xf32>
    %34 = arith.mulf %29, %33 : vector<2x8x8xf32>
    "tpu.trace_start"() <{level = 10 : i32, message = "bqk,bkd->bqd"}> : () -> ()
    %cst_28 = arith.constant dense<0.000000e+00> : vector<2x8x8xf32>
    %35 = tpu.matmul %34, %22, %cst_28 {dimension_numbers = #tpu.dot_dimension_numbers<[2], [1], [1], [2], [0, 0, 0, 1, 1, 2], [0], [0]>} : vector<2x8x8xf32>, vector<2x8x8xf32>, vector<2x8x8xf32> -> vector<2x8x8xf32>
    "tpu.trace_stop"() : () -> ()
    %36 = vector.shape_cast %35 : vector<2x8x8xf32> to vector<16x8xf32>
    %c0_29 = arith.constant 0 : index
    %c0_30 = arith.constant 0 : index
    %37 = vector.load %arg17[%c0_29, %c0_30] : memref<16x32xf32, #tpu.memory_space<vmem>>, vector<16x8xf32>
    tpu.vector_store %arg17[%c0_29, %c0_30], %36 {strides = array<i32>} : memref<16x32xf32, #tpu.memory_space<vmem>>, vector<16x8xf32>,
    %38 = vector.extract_strided_slice %17 {offsets = [0, 0, 8], sizes = [2, 8, 8], strides = [1, 1, 1]} : vector<2x8x32xf32> to vector<2x8x8xf32>
    %39 = vector.extract_strided_slice %18 {offsets = [0, 0, 8], sizes = [2, 8, 8], strides = [1, 1, 1]} : vector<2x8x32xf32> to vector<2x8x8xf32>
    %40 = vector.extract_strided_slice %19 {offsets = [0, 0, 8], sizes = [2, 8, 8], strides = [1, 1, 1]} : vector<2x8x32xf32> to vector<2x8x8xf32>
    "tpu.trace_start"() <{level = 10 : i32, message = "bqd,bkd->bqk"}> : () -> ()
    %cst_31 = arith.constant dense<0.000000e+00> : vector<2x8x8xf32>
    %41 = tpu.matmul %38, %39, %cst_31 {dimension_numbers = #tpu.dot_dimension_numbers<[2], [2], [1], [1], [0, 0, 0, 1, 1, 1], [0], [0]>} : vector<2x8x8xf32>, vector<2x8x8xf32>, vector<2x8x8xf32> -> vector<2x8x8xf32>
    "tpu.trace_stop"() : () -> ()
    %42 = arith.addf %41, %4 : vector<2x8x8xf32>
    %cst_32 = arith.constant dense<0xFF800000> : vector<2x8xf32>
    %43 = vector.multi_reduction <maximumf>, %42, %cst_32 [2] : vector<2x8x8xf32> to vector<2x8xf32>
    %44 = vector.shape_cast %43 : vector<2x8xf32> to vector<2x8x1xf32>
    %45 = vector.broadcast %44 : vector<2x8x1xf32> to vector<2x8x8xf32>
    %46 = arith.subf %42, %45 : vector<2x8x8xf32>
    %47 = math.exp %46 : vector<2x8x8xf32>
    %cst_33 = arith.constant dense<0.000000e+00> : vector<2x8xf32>
    %48 = vector.multi_reduction <add>, %47, %cst_33 [2] : vector<2x8x8xf32> to vector<2x8xf32>
    %49 = vector.shape_cast %48 : vector<2x8xf32> to vector<2x8x1xf32>
    %50 = tpu.reciprocal %49 {approx = true} : vector<2x8x1xf32> -> vector<2x8x1xf32>
    %51 = vector.broadcast %50 : vector<2x8x1xf32> to vector<2x8x8xf32>
    %52 = arith.mulf %47, %51 : vector<2x8x8xf32>
    "tpu.trace_start"() <{level = 10 : i32, message = "bqk,bkd->bqd"}> : () -> ()
    %cst_34 = arith.constant dense<0.000000e+00> : vector<2x8x8xf32>
    %53 = tpu.matmul %52, %40, %cst_34 {dimension_numbers = #tpu.dot_dimension_numbers<[2], [1], [1], [2], [0, 0, 0, 1, 1, 2], [0], [0]>} : vector<2x8x8xf32>, vector<2x8x8xf32>, vector<2x8x8xf32> -> vector<2x8x8xf32>
    "tpu.trace_stop"() : () -> ()
    %54 = vector.shape_cast %53 : vector<2x8x8xf32> to vector<16x8xf32>
    %c0_35 = arith.constant 0 : index
    %c8 = arith.constant 8 : index
    %55 = vector.load %arg17[%c0_35, %c8] : memref<16x32xf32, #tpu.memory_space<vmem>>, vector<16x8xf32>
    tpu.vector_store %arg17[%c0_35, %c8], %54 {strides = array<i32>} : memref<16x32xf32, #tpu.memory_space<vmem>>, vector<16x8xf32>,
    %56 = vector.extract_strided_slice %17 {offsets = [0, 0, 16], sizes = [2, 8, 8], strides = [1, 1, 1]} : vector<2x8x32xf32> to vector<2x8x8xf32>
    %57 = vector.extract_strided_slice %18 {offsets = [0, 0, 16], sizes = [2, 8, 8], strides = [1, 1, 1]} : vector<2x8x32xf32> to vector<2x8x8xf32>
    %58 = vector.extract_strided_slice %19 {offsets = [0, 0, 16], sizes = [2, 8, 8], strides = [1, 1, 1]} : vector<2x8x32xf32> to vector<2x8x8xf32>
    "tpu.trace_start"() <{level = 10 : i32, message = "bqd,bkd->bqk"}> : () -> ()
    %cst_36 = arith.constant dense<0.000000e+00> : vector<2x8x8xf32>
    %59 = tpu.matmul %56, %57, %cst_36 {dimension_numbers = #tpu.dot_dimension_numbers<[2], [2], [1], [1], [0, 0, 0, 1, 1, 1], [0], [0]>} : vector<2x8x8xf32>, vector<2x8x8xf32>, vector<2x8x8xf32> -> vector<2x8x8xf32>
    "tpu.trace_stop"() : () -> ()
    %60 = arith.addf %59, %4 : vector<2x8x8xf32>
    %cst_37 = arith.constant dense<0xFF800000> : vector<2x8xf32>
    %61 = vector.multi_reduction <maximumf>, %60, %cst_37 [2] : vector<2x8x8xf32> to vector<2x8xf32>
    %62 = vector.shape_cast %61 : vector<2x8xf32> to vector<2x8x1xf32>
    %63 = vector.broadcast %62 : vector<2x8x1xf32> to vector<2x8x8xf32>
    %64 = arith.subf %60, %63 : vector<2x8x8xf32>
    %65 = math.exp %64 : vector<2x8x8xf32>
    %cst_38 = arith.constant dense<0.000000e+00> : vector<2x8xf32>
    %66 = vector.multi_reduction <add>, %65, %cst_38 [2] : vector<2x8x8xf32> to vector<2x8xf32>
    %67 = vector.shape_cast %66 : vector<2x8xf32> to vector<2x8x1xf32>
    %68 = tpu.reciprocal %67 {approx = true} : vector<2x8x1xf32> -> vector<2x8x1xf32>
    %69 = vector.broadcast %68 : vector<2x8x1xf32> to vector<2x8x8xf32>
    %70 = arith.mulf %65, %69 : vector<2x8x8xf32>
    "tpu.trace_start"() <{level = 10 : i32, message = "bqk,bkd->bqd"}> : () -> ()
    %cst_39 = arith.constant dense<0.000000e+00> : vector<2x8x8xf32>
    %71 = tpu.matmul %70, %58, %cst_39 {dimension_numbers = #tpu.dot_dimension_numbers<[2], [1], [1], [2], [0, 0, 0, 1, 1, 2], [0], [0]>} : vector<2x8x8xf32>, vector<2x8x8xf32>, vector<2x8x8xf32> -> vector<2x8x8xf32>
    "tpu.trace_stop"() : () -> ()
    %72 = vector.shape_cast %71 : vector<2x8x8xf32> to vector<16x8xf32>
    %c0_40 = arith.constant 0 : index
    %c16 = arith.constant 16 : index
    %73 = vector.load %arg17[%c0_40, %c16] : memref<16x32xf32, #tpu.memory_space<vmem>>, vector<16x8xf32>
    tpu.vector_store %arg17[%c0_40, %c16], %72 {strides = array<i32>} : memref<16x32xf32, #tpu.memory_space<vmem>>, vector<16x8xf32>,
    %74 = vector.extract_strided_slice %17 {offsets = [0, 0, 24], sizes = [2, 8, 8], strides = [1, 1, 1]} : vector<2x8x32xf32> to vector<2x8x8xf32>
    %75 = vector.extract_strided_slice %18 {offsets = [0, 0, 24], sizes = [2, 8, 8], strides = [1, 1, 1]} : vector<2x8x32xf32> to vector<2x8x8xf32>
    %76 = vector.extract_strided_slice %19 {offsets = [0, 0, 24], sizes = [2, 8, 8], strides = [1, 1, 1]} : vector<2x8x32xf32> to vector<2x8x8xf32>
    "tpu.trace_start"() <{level = 10 : i32, message = "bqd,bkd->bqk"}> : () -> ()
    %cst_41 = arith.constant dense<0.000000e+00> : vector<2x8x8xf32>
    %77 = tpu.matmul %74, %75, %cst_41 {dimension_numbers = #tpu.dot_dimension_numbers<[2], [2], [1], [1], [0, 0, 0, 1, 1, 1], [0], [0]>} : vector<2x8x8xf32>, vector<2x8x8xf32>, vector<2x8x8xf32> -> vector<2x8x8xf32>
    "tpu.trace_stop"() : () -> ()
    %78 = arith.addf %77, %4 : vector<2x8x8xf32>
    %cst_42 = arith.constant dense<0xFF800000> : vector<2x8xf32>
    %79 = vector.multi_reduction <maximumf>, %78, %cst_42 [2] : vector<2x8x8xf32> to vector<2x8xf32>
    %80 = vector.shape_cast %79 : vector<2x8xf32> to vector<2x8x1xf32>
    %81 = vector.broadcast %80 : vector<2x8x1xf32> to vector<2x8x8xf32>
    %82 = arith.subf %78, %81 : vector<2x8x8xf32>
    %83 = math.exp %82 : vector<2x8x8xf32>
    %cst_43 = arith.constant dense<0.000000e+00> : vector<2x8xf32>
    %84 = vector.multi_reduction <add>, %83, %cst_43 [2] : vector<2x8x8xf32> to vector<2x8xf32>
    %85 = vector.shape_cast %84 : vector<2x8xf32> to vector<2x8x1xf32>
    %86 = tpu.reciprocal %85 {approx = true} : vector<2x8x1xf32> -> vector<2x8x1xf32>
    %87 = vector.broadcast %86 : vector<2x8x1xf32> to vector<2x8x8xf32>
    %88 = arith.mulf %83, %87 : vector<2x8x8xf32>
    "tpu.trace_start"() <{level = 10 : i32, message = "bqk,bkd->bqd"}> : () -> ()
    %cst_44 = arith.constant dense<0.000000e+00> : vector<2x8x8xf32>
    %89 = tpu.matmul %88, %76, %cst_44 {dimension_numbers = #tpu.dot_dimension_numbers<[2], [1], [1], [2], [0, 0, 0, 1, 1, 2], [0], [0]>} : vector<2x8x8xf32>, vector<2x8x8xf32>, vector<2x8x8xf32> -> vector<2x8x8xf32>
    "tpu.trace_stop"() : () -> ()
    %90 = vector.shape_cast %89 : vector<2x8x8xf32> to vector<16x8xf32>
    %c0_45 = arith.constant 0 : index
    %c24 = arith.constant 24 : index
    %91 = vector.load %arg17[%c0_45, %c24] : memref<16x32xf32, #tpu.memory_space<vmem>>, vector<16x8xf32>
    tpu.vector_store %arg17[%c0_45, %c24], %90 {strides = array<i32>} : memref<16x32xf32, #tpu.memory_space<vmem>>, vector<16x8xf32>,
    %c0_46 = arith.constant 0 : index
    %c0_47 = arith.constant 0 : index
    %92 = vector.load %arg17[%c0_46, %c0_47] : memref<16x32xf32, #tpu.memory_space<vmem>>, vector<16x32xf32>
    %cst_48 = arith.constant dense<0.000000e+00> : vector<16x32xf32>
    %93 = tpu.matmul %92, %13, %cst_48 {dimension_numbers = #tpu.dot_dimension_numbers<[1], [0], [0], [1], [0, 0, 1, 1], [], []>} : vector<16x32xf32>, vector<32x32xf32>, vector<16x32xf32> -> vector<16x32xf32>
    %94 = arith.addf %93, %1 : vector<16x32xf32>
    %cst_49 = arith.constant dense<0.000000e+00> : vector<16xf32>
    %95 = vector.multi_reduction <add>, %94, %cst_49 [1] : vector<16x32xf32> to vector<16xf32>
    %96 = vector.shape_cast %95 : vector<16xf32> to vector<16x1xf32>
    %cst_50 = arith.constant 3.200000e+01 : f32
    %97 = vector.broadcast %cst_50 : f32 to vector<16x1xf32>
    %98 = arith.divf %96, %97 : vector<16x1xf32>
    %99 = vector.broadcast %98 : vector<16x1xf32> to vector<16x32xf32>
    %100 = arith.subf %94, %99 : vector<16x32xf32>
    %101 = arith.mulf %100, %100 : vector<16x32xf32>
    %cst_51 = arith.constant dense<0.000000e+00> : vector<16xf32>
    %102 = vector.multi_reduction <add>, %101, %cst_51 [1] : vector<16x32xf32> to vector<16xf32>
    %103 = vector.shape_cast %102 : vector<16xf32> to vector<16x1xf32>
    %cst_52 = arith.constant 3.200000e+01 : f32
    %104 = vector.broadcast %cst_52 : f32 to vector<16x1xf32>
    %105 = arith.divf %103, %104 : vector<16x1xf32>
    %106 = vector.broadcast %98 : vector<16x1xf32> to vector<16x32xf32>
    %107 = arith.subf %94, %106 : vector<16x32xf32>
    %cst_53 = arith.constant 9.99999974E-6 : f32
    %108 = vector.broadcast %cst_53 : f32 to vector<16x1xf32>
    %109 = arith.addf %105, %108 : vector<16x1xf32>
    %110 = math.rsqrt %109 : vector<16x1xf32>
    %111 = vector.broadcast %110 : vector<16x1xf32> to vector<16x32xf32>
    %112 = arith.mulf %107, %111 : vector<16x32xf32>
    %c0_54 = arith.constant 0 : index
    %c0_55 = arith.constant 0 : index
    %c0_56 = arith.constant 0 : index
    %c0_57 = arith.constant 0 : index
    %113 = vector.load %arg15[%c0_54, %c0_55, %c0_56, %c0_57] : memref<2x2x8x32xf32, #tpu.memory_space<vmem>>, vector<1x2x8x8xf32>
    %114 = vector.shape_cast %113 : vector<1x2x8x8xf32> to vector<2x8x8xf32>
    %115 = vector.shape_cast %34 : vector<2x8x8xf32> to vector<1x2x8x8xf32>
    tpu.vector_store %arg15[%c0_54, %c0_55, %c0_56, %c0_57], %115 {strides = array<i32>} : memref<2x2x8x32xf32, #tpu.memory_space<vmem>>, vector<1x2x8x8xf32>,
    %c0_58 = arith.constant 0 : index
    %c0_59 = arith.constant 0 : index
    %c0_60 = arith.constant 0 : index
    %c8_61 = arith.constant 8 : index
    %116 = vector.load %arg15[%c0_58, %c0_59, %c0_60, %c8_61] : memref<2x2x8x32xf32, #tpu.memory_space<vmem>>, vector<1x2x8x8xf32>
    %117 = vector.shape_cast %116 : vector<1x2x8x8xf32> to vector<2x8x8xf32>
    %118 = vector.shape_cast %52 : vector<2x8x8xf32> to vector<1x2x8x8xf32>
    tpu.vector_store %arg15[%c0_58, %c0_59, %c0_60, %c8_61], %118 {strides = array<i32>} : memref<2x2x8x32xf32, #tpu.memory_space<vmem>>, vector<1x2x8x8xf32>,
    %c0_62 = arith.constant 0 : index
    %c0_63 = arith.constant 0 : index
    %c0_64 = arith.constant 0 : index
    %c16_65 = arith.constant 16 : index
    %119 = vector.load %arg15[%c0_62, %c0_63, %c0_64, %c16_65] : memref<2x2x8x32xf32, #tpu.memory_space<vmem>>, vector<1x2x8x8xf32>
    %120 = vector.shape_cast %119 : vector<1x2x8x8xf32> to vector<2x8x8xf32>
    %121 = vector.shape_cast %70 : vector<2x8x8xf32> to vector<1x2x8x8xf32>
    tpu.vector_store %arg15[%c0_62, %c0_63, %c0_64, %c16_65], %121 {strides = array<i32>} : memref<2x2x8x32xf32, #tpu.memory_space<vmem>>, vector<1x2x8x8xf32>,
    %c0_66 = arith.constant 0 : index
    %c0_67 = arith.constant 0 : index
    %c0_68 = arith.constant 0 : index
    %c24_69 = arith.constant 24 : index
    %122 = vector.load %arg15[%c0_66, %c0_67, %c0_68, %c24_69] : memref<2x2x8x32xf32, #tpu.memory_space<vmem>>, vector<1x2x8x8xf32>
    %123 = vector.shape_cast %122 : vector<1x2x8x8xf32> to vector<2x8x8xf32>
    %124 = vector.shape_cast %88 : vector<2x8x8xf32> to vector<1x2x8x8xf32>
    tpu.vector_store %arg15[%c0_66, %c0_67, %c0_68, %c24_69], %124 {strides = array<i32>} : memref<2x2x8x32xf32, #tpu.memory_space<vmem>>, vector<1x2x8x8xf32>,
    %c0_70 = arith.constant 0 : index
    %c0_71 = arith.constant 0 : index
    %c0_72 = arith.constant 0 : index
    %125 = vector.load %arg8[%c0_70, %c0_71, %c0_72] : memref<2x32x32xf32, #tpu.memory_space<vmem>>, vector<1x32x32xf32>
    %126 = vector.shape_cast %125 : vector<1x32x32xf32> to vector<32x32xf32>
    %c0_73 = arith.constant 0 : index
    %c0_74 = arith.constant 0 : index
    %c0_75 = arith.constant 0 : index
    %127 = vector.load %arg9[%c0_73, %c0_74, %c0_75] : memref<2x32x32xf32, #tpu.memory_space<vmem>>, vector<1x32x32xf32>
    %128 = vector.shape_cast %127 : vector<1x32x32xf32> to vector<32x32xf32>
    %c0_76 = arith.constant 0 : index
    %c0_77 = arith.constant 0 : index
    %c0_78 = arith.constant 0 : index
    %129 = vector.load %arg10[%c0_76, %c0_77, %c0_78] : memref<2x32x32xf32, #tpu.memory_space<vmem>>, vector<1x32x32xf32>
    %130 = vector.shape_cast %129 : vector<1x32x32xf32> to vector<32x32xf32>
    %c0_79 = arith.constant 0 : index
    %c0_80 = arith.constant 0 : index
    %c0_81 = arith.constant 0 : index
    %131 = vector.load %arg11[%c0_79, %c0_80, %c0_81] : memref<2x32x32xf32, #tpu.memory_space<vmem>>, vector<1x32x32xf32>
    %132 = vector.shape_cast %131 : vector<1x32x32xf32> to vector<32x32xf32>
    %cst_82 = arith.constant dense<0.000000e+00> : vector<16x32xf32>
    %133 = tpu.matmul %112, %126, %cst_82 {dimension_numbers = #tpu.dot_dimension_numbers<[1], [0], [0], [1], [0, 0, 1, 1], [], []>} : vector<16x32xf32>, vector<32x32xf32>, vector<16x32xf32> -> vector<16x32xf32>
    %cst_83 = arith.constant dense<0.000000e+00> : vector<16x32xf32>
    %134 = tpu.matmul %3, %128, %cst_83 {dimension_numbers = #tpu.dot_dimension_numbers<[1], [0], [0], [1], [0, 0, 1, 1], [], []>} : vector<16x32xf32>, vector<32x32xf32>, vector<16x32xf32> -> vector<16x32xf32>
    %cst_84 = arith.constant dense<0.000000e+00> : vector<16x32xf32>
    %135 = tpu.matmul %3, %130, %cst_84 {dimension_numbers = #tpu.dot_dimension_numbers<[1], [0], [0], [1], [0, 0, 1, 1], [], []>} : vector<16x32xf32>, vector<32x32xf32>, vector<16x32xf32> -> vector<16x32xf32>
    %136 = vector.shape_cast %133 : vector<16x32xf32> to vector<2x8x32xf32>
    %137 = vector.shape_cast %134 : vector<16x32xf32> to vector<2x8x32xf32>
    %138 = vector.shape_cast %135 : vector<16x32xf32> to vector<2x8x32xf32>
    %139 = vector.extract_strided_slice %136 {offsets = [0, 0, 0], sizes = [2, 8, 8], strides = [1, 1, 1]} : vector<2x8x32xf32> to vector<2x8x8xf32>
    %140 = vector.extract_strided_slice %137 {offsets = [0, 0, 0], sizes = [2, 8, 8], strides = [1, 1, 1]} : vector<2x8x32xf32> to vector<2x8x8xf32>
    %141 = vector.extract_strided_slice %138 {offsets = [0, 0, 0], sizes = [2, 8, 8], strides = [1, 1, 1]} : vector<2x8x32xf32> to vector<2x8x8xf32>
    "tpu.trace_start"() <{level = 10 : i32, message = "bqd,bkd->bqk"}> : () -> ()
    %cst_85 = arith.constant dense<0.000000e+00> : vector<2x8x8xf32>
    %142 = tpu.matmul %139, %140, %cst_85 {dimension_numbers = #tpu.dot_dimension_numbers<[2], [2], [1], [1], [0, 0, 0, 1, 1, 1], [0], [0]>} : vector<2x8x8xf32>, vector<2x8x8xf32>, vector<2x8x8xf32> -> vector<2x8x8xf32>
    "tpu.trace_stop"() : () -> ()
    %143 = arith.addf %142, %5 : vector<2x8x8xf32>
    %cst_86 = arith.constant dense<0xFF800000> : vector<2x8xf32>
    %144 = vector.multi_reduction <maximumf>, %143, %cst_86 [2] : vector<2x8x8xf32> to vector<2x8xf32>
    %145 = vector.shape_cast %144 : vector<2x8xf32> to vector<2x8x1xf32>
    %146 = vector.broadcast %145 : vector<2x8x1xf32> to vector<2x8x8xf32>
    %147 = arith.subf %143, %146 : vector<2x8x8xf32>
    %148 = math.exp %147 : vector<2x8x8xf32>
    %cst_87 = arith.constant dense<0.000000e+00> : vector<2x8xf32>
    %149 = vector.multi_reduction <add>, %148, %cst_87 [2] : vector<2x8x8xf32> to vector<2x8xf32>
    %150 = vector.shape_cast %149 : vector<2x8xf32> to vector<2x8x1xf32>
    %151 = tpu.reciprocal %150 {approx = true} : vector<2x8x1xf32> -> vector<2x8x1xf32>
    %152 = vector.broadcast %151 : vector<2x8x1xf32> to vector<2x8x8xf32>
    %153 = arith.mulf %148, %152 : vector<2x8x8xf32>
    "tpu.trace_start"() <{level = 10 : i32, message = "bqk,bkd->bqd"}> : () -> ()
    %cst_88 = arith.constant dense<0.000000e+00> : vector<2x8x8xf32>
    %154 = tpu.matmul %153, %141, %cst_88 {dimension_numbers = #tpu.dot_dimension_numbers<[2], [1], [1], [2], [0, 0, 0, 1, 1, 2], [0], [0]>} : vector<2x8x8xf32>, vector<2x8x8xf32>, vector<2x8x8xf32> -> vector<2x8x8xf32>
    "tpu.trace_stop"() : () -> ()
    %155 = vector.shape_cast %154 : vector<2x8x8xf32> to vector<16x8xf32>
    %c0_89 = arith.constant 0 : index
    %c0_90 = arith.constant 0 : index
    %156 = vector.load %arg17[%c0_89, %c0_90] : memref<16x32xf32, #tpu.memory_space<vmem>>, vector<16x8xf32>
    tpu.vector_store %arg17[%c0_89, %c0_90], %155 {strides = array<i32>} : memref<16x32xf32, #tpu.memory_space<vmem>>, vector<16x8xf32>,
    %157 = vector.extract_strided_slice %136 {offsets = [0, 0, 8], sizes = [2, 8, 8], strides = [1, 1, 1]} : vector<2x8x32xf32> to vector<2x8x8xf32>
    %158 = vector.extract_strided_slice %137 {offsets = [0, 0, 8], sizes = [2, 8, 8], strides = [1, 1, 1]} : vector<2x8x32xf32> to vector<2x8x8xf32>
    %159 = vector.extract_strided_slice %138 {offsets = [0, 0, 8], sizes = [2, 8, 8], strides = [1, 1, 1]} : vector<2x8x32xf32> to vector<2x8x8xf32>
    "tpu.trace_start"() <{level = 10 : i32, message = "bqd,bkd->bqk"}> : () -> ()
    %cst_91 = arith.constant dense<0.000000e+00> : vector<2x8x8xf32>
    %160 = tpu.matmul %157, %158, %cst_91 {dimension_numbers = #tpu.dot_dimension_numbers<[2], [2], [1], [1], [0, 0, 0, 1, 1, 1], [0], [0]>} : vector<2x8x8xf32>, vector<2x8x8xf32>, vector<2x8x8xf32> -> vector<2x8x8xf32>
    "tpu.trace_stop"() : () -> ()
    %161 = arith.addf %160, %5 : vector<2x8x8xf32>
    %cst_92 = arith.constant dense<0xFF800000> : vector<2x8xf32>
    %162 = vector.multi_reduction <maximumf>, %161, %cst_92 [2] : vector<2x8x8xf32> to vector<2x8xf32>
    %163 = vector.shape_cast %162 : vector<2x8xf32> to vector<2x8x1xf32>
    %164 = vector.broadcast %163 : vector<2x8x1xf32> to vector<2x8x8xf32>
    %165 = arith.subf %161, %164 : vector<2x8x8xf32>
    %166 = math.exp %165 : vector<2x8x8xf32>
    %cst_93 = arith.constant dense<0.000000e+00> : vector<2x8xf32>
    %167 = vector.multi_reduction <add>, %166, %cst_93 [2] : vector<2x8x8xf32> to vector<2x8xf32>
    %168 = vector.shape_cast %167 : vector<2x8xf32> to vector<2x8x1xf32>
    %169 = tpu.reciprocal %168 {approx = true} : vector<2x8x1xf32> -> vector<2x8x1xf32>
    %170 = vector.broadcast %169 : vector<2x8x1xf32> to vector<2x8x8xf32>
    %171 = arith.mulf %166, %170 : vector<2x8x8xf32>
    "tpu.trace_start"() <{level = 10 : i32, message = "bqk,bkd->bqd"}> : () -> ()
    %cst_94 = arith.constant dense<0.000000e+00> : vector<2x8x8xf32>
    %172 = tpu.matmul %171, %159, %cst_94 {dimension_numbers = #tpu.dot_dimension_numbers<[2], [1], [1], [2], [0, 0, 0, 1, 1, 2], [0], [0]>} : vector<2x8x8xf32>, vector<2x8x8xf32>, vector<2x8x8xf32> -> vector<2x8x8xf32>
    "tpu.trace_stop"() : () -> ()
    %173 = vector.shape_cast %172 : vector<2x8x8xf32> to vector<16x8xf32>
    %c0_95 = arith.constant 0 : index
    %c8_96 = arith.constant 8 : index
    %174 = vector.load %arg17[%c0_95, %c8_96] : memref<16x32xf32, #tpu.memory_space<vmem>>, vector<16x8xf32>
    tpu.vector_store %arg17[%c0_95, %c8_96], %173 {strides = array<i32>} : memref<16x32xf32, #tpu.memory_space<vmem>>, vector<16x8xf32>,
    %175 = vector.extract_strided_slice %136 {offsets = [0, 0, 16], sizes = [2, 8, 8], strides = [1, 1, 1]} : vector<2x8x32xf32> to vector<2x8x8xf32>
    %176 = vector.extract_strided_slice %137 {offsets = [0, 0, 16], sizes = [2, 8, 8], strides = [1, 1, 1]} : vector<2x8x32xf32> to vector<2x8x8xf32>
    %177 = vector.extract_strided_slice %138 {offsets = [0, 0, 16], sizes = [2, 8, 8], strides = [1, 1, 1]} : vector<2x8x32xf32> to vector<2x8x8xf32>
    "tpu.trace_start"() <{level = 10 : i32, message = "bqd,bkd->bqk"}> : () -> ()
    %cst_97 = arith.constant dense<0.000000e+00> : vector<2x8x8xf32>
    %178 = tpu.matmul %175, %176, %cst_97 {dimension_numbers = #tpu.dot_dimension_numbers<[2], [2], [1], [1], [0, 0, 0, 1, 1, 1], [0], [0]>} : vector<2x8x8xf32>, vector<2x8x8xf32>, vector<2x8x8xf32> -> vector<2x8x8xf32>
    "tpu.trace_stop"() : () -> ()
    %179 = arith.addf %178, %5 : vector<2x8x8xf32>
    %cst_98 = arith.constant dense<0xFF800000> : vector<2x8xf32>
    %180 = vector.multi_reduction <maximumf>, %179, %cst_98 [2] : vector<2x8x8xf32> to vector<2x8xf32>
    %181 = vector.shape_cast %180 : vector<2x8xf32> to vector<2x8x1xf32>
    %182 = vector.broadcast %181 : vector<2x8x1xf32> to vector<2x8x8xf32>
    %183 = arith.subf %179, %182 : vector<2x8x8xf32>
    %184 = math.exp %183 : vector<2x8x8xf32>
    %cst_99 = arith.constant dense<0.000000e+00> : vector<2x8xf32>
    %185 = vector.multi_reduction <add>, %184, %cst_99 [2] : vector<2x8x8xf32> to vector<2x8xf32>
    %186 = vector.shape_cast %185 : vector<2x8xf32> to vector<2x8x1xf32>
    %187 = tpu.reciprocal %186 {approx = true} : vector<2x8x1xf32> -> vector<2x8x1xf32>
    %188 = vector.broadcast %187 : vector<2x8x1xf32> to vector<2x8x8xf32>
    %189 = arith.mulf %184, %188 : vector<2x8x8xf32>
    "tpu.trace_start"() <{level = 10 : i32, message = "bqk,bkd->bqd"}> : () -> ()
    %cst_100 = arith.constant dense<0.000000e+00> : vector<2x8x8xf32>
    %190 = tpu.matmul %189, %177, %cst_100 {dimension_numbers = #tpu.dot_dimension_numbers<[2], [1], [1], [2], [0, 0, 0, 1, 1, 2], [0], [0]>} : vector<2x8x8xf32>, vector<2x8x8xf32>, vector<2x8x8xf32> -> vector<2x8x8xf32>
    "tpu.trace_stop"() : () -> ()
    %191 = vector.shape_cast %190 : vector<2x8x8xf32> to vector<16x8xf32>
    %c0_101 = arith.constant 0 : index
    %c16_102 = arith.constant 16 : index
    %192 = vector.load %arg17[%c0_101, %c16_102] : memref<16x32xf32, #tpu.memory_space<vmem>>, vector<16x8xf32>
    tpu.vector_store %arg17[%c0_101, %c16_102], %191 {strides = array<i32>} : memref<16x32xf32, #tpu.memory_space<vmem>>, vector<16x8xf32>,
    %193 = vector.extract_strided_slice %136 {offsets = [0, 0, 24], sizes = [2, 8, 8], strides = [1, 1, 1]} : vector<2x8x32xf32> to vector<2x8x8xf32>
    %194 = vector.extract_strided_slice %137 {offsets = [0, 0, 24], sizes = [2, 8, 8], strides = [1, 1, 1]} : vector<2x8x32xf32> to vector<2x8x8xf32>
    %195 = vector.extract_strided_slice %138 {offsets = [0, 0, 24], sizes = [2, 8, 8], strides = [1, 1, 1]} : vector<2x8x32xf32> to vector<2x8x8xf32>
    "tpu.trace_start"() <{level = 10 : i32, message = "bqd,bkd->bqk"}> : () -> ()
    %cst_103 = arith.constant dense<0.000000e+00> : vector<2x8x8xf32>
    %196 = tpu.matmul %193, %194, %cst_103 {dimension_numbers = #tpu.dot_dimension_numbers<[2], [2], [1], [1], [0, 0, 0, 1, 1, 1], [0], [0]>} : vector<2x8x8xf32>, vector<2x8x8xf32>, vector<2x8x8xf32> -> vector<2x8x8xf32>
    "tpu.trace_stop"() : () -> ()
    %197 = arith.addf %196, %5 : vector<2x8x8xf32>
    %cst_104 = arith.constant dense<0xFF800000> : vector<2x8xf32>
    %198 = vector.multi_reduction <maximumf>, %197, %cst_104 [2] : vector<2x8x8xf32> to vector<2x8xf32>
    %199 = vector.shape_cast %198 : vector<2x8xf32> to vector<2x8x1xf32>
    %200 = vector.broadcast %199 : vector<2x8x1xf32> to vector<2x8x8xf32>
    %201 = arith.subf %197, %200 : vector<2x8x8xf32>
    %202 = math.exp %201 : vector<2x8x8xf32>
    %cst_105 = arith.constant dense<0.000000e+00> : vector<2x8xf32>
    %203 = vector.multi_reduction <add>, %202, %cst_105 [2] : vector<2x8x8xf32> to vector<2x8xf32>
    %204 = vector.shape_cast %203 : vector<2x8xf32> to vector<2x8x1xf32>
    %205 = tpu.reciprocal %204 {approx = true} : vector<2x8x1xf32> -> vector<2x8x1xf32>
    %206 = vector.broadcast %205 : vector<2x8x1xf32> to vector<2x8x8xf32>
    %207 = arith.mulf %202, %206 : vector<2x8x8xf32>
    "tpu.trace_start"() <{level = 10 : i32, message = "bqk,bkd->bqd"}> : () -> ()
    %cst_106 = arith.constant dense<0.000000e+00> : vector<2x8x8xf32>
    %208 = tpu.matmul %207, %195, %cst_106 {dimension_numbers = #tpu.dot_dimension_numbers<[2], [1], [1], [2], [0, 0, 0, 1, 1, 2], [0], [0]>} : vector<2x8x8xf32>, vector<2x8x8xf32>, vector<2x8x8xf32> -> vector<2x8x8xf32>
    "tpu.trace_stop"() : () -> ()
    %209 = vector.shape_cast %208 : vector<2x8x8xf32> to vector<16x8xf32>
    %c0_107 = arith.constant 0 : index
    %c24_108 = arith.constant 24 : index
    %210 = vector.load %arg17[%c0_107, %c24_108] : memref<16x32xf32, #tpu.memory_space<vmem>>, vector<16x8xf32>
    tpu.vector_store %arg17[%c0_107, %c24_108], %209 {strides = array<i32>} : memref<16x32xf32, #tpu.memory_space<vmem>>, vector<16x8xf32>,
    %c0_109 = arith.constant 0 : index
    %c0_110 = arith.constant 0 : index
    %211 = vector.load %arg17[%c0_109, %c0_110] : memref<16x32xf32, #tpu.memory_space<vmem>>, vector<16x32xf32>
    %cst_111 = arith.constant dense<0.000000e+00> : vector<16x32xf32>
    %212 = tpu.matmul %211, %132, %cst_111 {dimension_numbers = #tpu.dot_dimension_numbers<[1], [0], [0], [1], [0, 0, 1, 1], [], []>} : vector<16x32xf32>, vector<32x32xf32>, vector<16x32xf32> -> vector<16x32xf32>
    %213 = arith.addf %212, %112 : vector<16x32xf32>
    %cst_112 = arith.constant dense<0.000000e+00> : vector<16xf32>
    %214 = vector.multi_reduction <add>, %213, %cst_112 [1] : vector<16x32xf32> to vector<16xf32>
    %215 = vector.shape_cast %214 : vector<16xf32> to vector<16x1xf32>
    %cst_113 = arith.constant 3.200000e+01 : f32
    %216 = vector.broadcast %cst_113 : f32 to vector<16x1xf32>
    %217 = arith.divf %215, %216 : vector<16x1xf32>
    %218 = vector.broadcast %217 : vector<16x1xf32> to vector<16x32xf32>
    %219 = arith.subf %213, %218 : vector<16x32xf32>
    %220 = arith.mulf %219, %219 : vector<16x32xf32>
    %cst_114 = arith.constant dense<0.000000e+00> : vector<16xf32>
    %221 = vector.multi_reduction <add>, %220, %cst_114 [1] : vector<16x32xf32> to vector<16xf32>
    %222 = vector.shape_cast %221 : vector<16xf32> to vector<16x1xf32>
    %cst_115 = arith.constant 3.200000e+01 : f32
    %223 = vector.broadcast %cst_115 : f32 to vector<16x1xf32>
    %224 = arith.divf %222, %223 : vector<16x1xf32>
    %225 = vector.broadcast %217 : vector<16x1xf32> to vector<16x32xf32>
    %226 = arith.subf %213, %225 : vector<16x32xf32>
    %cst_116 = arith.constant 9.99999974E-6 : f32
    %227 = vector.broadcast %cst_116 : f32 to vector<16x1xf32>
    %228 = arith.addf %224, %227 : vector<16x1xf32>
    %229 = math.rsqrt %228 : vector<16x1xf32>
    %230 = vector.broadcast %229 : vector<16x1xf32> to vector<16x32xf32>
    %231 = arith.mulf %226, %230 : vector<16x32xf32>
    %c0_117 = arith.constant 0 : index
    %c0_118 = arith.constant 0 : index
    %c0_119 = arith.constant 0 : index
    %c0_120 = arith.constant 0 : index
    %232 = vector.load %arg16[%c0_117, %c0_118, %c0_119, %c0_120] : memref<2x2x8x32xf32, #tpu.memory_space<vmem>>, vector<1x2x8x8xf32>
    %233 = vector.shape_cast %232 : vector<1x2x8x8xf32> to vector<2x8x8xf32>
    %234 = vector.shape_cast %153 : vector<2x8x8xf32> to vector<1x2x8x8xf32>
    tpu.vector_store %arg16[%c0_117, %c0_118, %c0_119, %c0_120], %234 {strides = array<i32>} : memref<2x2x8x32xf32, #tpu.memory_space<vmem>>, vector<1x2x8x8xf32>,
    %c0_121 = arith.constant 0 : index
    %c0_122 = arith.constant 0 : index
    %c0_123 = arith.constant 0 : index
    %c8_124 = arith.constant 8 : index
    %235 = vector.load %arg16[%c0_121, %c0_122, %c0_123, %c8_124] : memref<2x2x8x32xf32, #tpu.memory_space<vmem>>, vector<1x2x8x8xf32>
    %236 = vector.shape_cast %235 : vector<1x2x8x8xf32> to vector<2x8x8xf32>
    %237 = vector.shape_cast %171 : vector<2x8x8xf32> to vector<1x2x8x8xf32>
    tpu.vector_store %arg16[%c0_121, %c0_122, %c0_123, %c8_124], %237 {strides = array<i32>} : memref<2x2x8x32xf32, #tpu.memory_space<vmem>>, vector<1x2x8x8xf32>,
    %c0_125 = arith.constant 0 : index
    %c0_126 = arith.constant 0 : index
    %c0_127 = arith.constant 0 : index
    %c16_128 = arith.constant 16 : index
    %238 = vector.load %arg16[%c0_125, %c0_126, %c0_127, %c16_128] : memref<2x2x8x32xf32, #tpu.memory_space<vmem>>, vector<1x2x8x8xf32>
    %239 = vector.shape_cast %238 : vector<1x2x8x8xf32> to vector<2x8x8xf32>
    %240 = vector.shape_cast %189 : vector<2x8x8xf32> to vector<1x2x8x8xf32>
    tpu.vector_store %arg16[%c0_125, %c0_126, %c0_127, %c16_128], %240 {strides = array<i32>} : memref<2x2x8x32xf32, #tpu.memory_space<vmem>>, vector<1x2x8x8xf32>,
    %c0_129 = arith.constant 0 : index
    %c0_130 = arith.constant 0 : index
    %c0_131 = arith.constant 0 : index
    %c24_132 = arith.constant 24 : index
    %241 = vector.load %arg16[%c0_129, %c0_130, %c0_131, %c24_132] : memref<2x2x8x32xf32, #tpu.memory_space<vmem>>, vector<1x2x8x8xf32>
    %242 = vector.shape_cast %241 : vector<1x2x8x8xf32> to vector<2x8x8xf32>
    %243 = vector.shape_cast %207 : vector<2x8x8xf32> to vector<1x2x8x8xf32>
    tpu.vector_store %arg16[%c0_129, %c0_130, %c0_131, %c24_132], %243 {strides = array<i32>} : memref<2x2x8x32xf32, #tpu.memory_space<vmem>>, vector<1x2x8x8xf32>,
    %c0_133 = arith.constant 0 : index
    %c0_134 = arith.constant 0 : index
    %c0_135 = arith.constant 0 : index
    %244 = vector.load %arg12[%c0_133, %c0_134, %c0_135] : memref<2x32x64xf32, #tpu.memory_space<vmem>>, vector<1x32x64xf32>
    %245 = vector.shape_cast %244 : vector<1x32x64xf32> to vector<32x64xf32>
    %c0_136 = arith.constant 0 : index
    %c0_137 = arith.constant 0 : index
    %c0_138 = arith.constant 0 : index
    %246 = vector.load %arg13[%c0_136, %c0_137, %c0_138] : memref<2x64x32xf32, #tpu.memory_space<vmem>>, vector<1x64x32xf32>
    %247 = vector.shape_cast %246 : vector<1x64x32xf32> to vector<64x32xf32>
    %cst_139 = arith.constant dense<0.000000e+00> : vector<16x64xf32>
    %248 = tpu.matmul %231, %245, %cst_139 {dimension_numbers = #tpu.dot_dimension_numbers<[1], [0], [0], [1], [0, 0, 1, 1], [], []>} : vector<16x32xf32>, vector<32x64xf32>, vector<16x64xf32> -> vector<16x64xf32>
    %cst_140 = arith.constant 0.000000e+00 : f32
    %249 = vector.broadcast %cst_140 : f32 to vector<16x64xf32>
    %250 = arith.maximumf %248, %249 : vector<16x64xf32>
    %cst_141 = arith.constant dense<0.000000e+00> : vector<16x32xf32>
    %251 = tpu.matmul %250, %247, %cst_141 {dimension_numbers = #tpu.dot_dimension_numbers<[1], [0], [0], [1], [0, 0, 1, 1], [], []>} : vector<16x64xf32>, vector<64x32xf32>, vector<16x32xf32> -> vector<16x32xf32>
    %252 = arith.addf %251, %231 : vector<16x32xf32>
    %cst_142 = arith.constant dense<0.000000e+00> : vector<16xf32>
    %253 = vector.multi_reduction <add>, %252, %cst_142 [1] : vector<16x32xf32> to vector<16xf32>
    %254 = vector.shape_cast %253 : vector<16xf32> to vector<16x1xf32>
    %cst_143 = arith.constant 3.200000e+01 : f32
    %255 = vector.broadcast %cst_143 : f32 to vector<16x1xf32>
    %256 = arith.divf %254, %255 : vector<16x1xf32>
    %257 = vector.broadcast %256 : vector<16x1xf32> to vector<16x32xf32>
    %258 = arith.subf %252, %257 : vector<16x32xf32>
    %259 = arith.mulf %258, %258 : vector<16x32xf32>
    %cst_144 = arith.constant dense<0.000000e+00> : vector<16xf32>
    %260 = vector.multi_reduction <add>, %259, %cst_144 [1] : vector<16x32xf32> to vector<16xf32>
    %261 = vector.shape_cast %260 : vector<16xf32> to vector<16x1xf32>
    %cst_145 = arith.constant 3.200000e+01 : f32
    %262 = vector.broadcast %cst_145 : f32 to vector<16x1xf32>
    %263 = arith.divf %261, %262 : vector<16x1xf32>
    %264 = vector.broadcast %256 : vector<16x1xf32> to vector<16x32xf32>
    %265 = arith.subf %252, %264 : vector<16x32xf32>
    %cst_146 = arith.constant 9.99999974E-6 : f32
    %266 = vector.broadcast %cst_146 : f32 to vector<16x1xf32>
    %267 = arith.addf %263, %266 : vector<16x1xf32>
    %268 = math.rsqrt %267 : vector<16x1xf32>
    %269 = vector.broadcast %268 : vector<16x1xf32> to vector<16x32xf32>
    %270 = arith.mulf %265, %269 : vector<16x32xf32>
    %c1 = arith.constant 1 : index
    %c0_147 = arith.constant 0 : index
    %c0_148 = arith.constant 0 : index
    %271 = vector.load %arg4[%c1, %c0_147, %c0_148] : memref<2x32x32xf32, #tpu.memory_space<vmem>>, vector<1x32x32xf32>
    %272 = vector.shape_cast %271 : vector<1x32x32xf32> to vector<32x32xf32>
    %c1_149 = arith.constant 1 : index
    %c0_150 = arith.constant 0 : index
    %c0_151 = arith.constant 0 : index
    %273 = vector.load %arg5[%c1_149, %c0_150, %c0_151] : memref<2x32x32xf32, #tpu.memory_space<vmem>>, vector<1x32x32xf32>
    %274 = vector.shape_cast %273 : vector<1x32x32xf32> to vector<32x32xf32>
    %c1_152 = arith.constant 1 : index
    %c0_153 = arith.constant 0 : index
    %c0_154 = arith.constant 0 : index
    %275 = vector.load %arg6[%c1_152, %c0_153, %c0_154] : memref<2x32x32xf32, #tpu.memory_space<vmem>>, vector<1x32x32xf32>
    %276 = vector.shape_cast %275 : vector<1x32x32xf32> to vector<32x32xf32>
    %c1_155 = arith.constant 1 : index
    %c0_156 = arith.constant 0 : index
    %c0_157 = arith.constant 0 : index
    %277 = vector.load %arg7[%c1_155, %c0_156, %c0_157] : memref<2x32x32xf32, #tpu.memory_space<vmem>>, vector<1x32x32xf32>
    %278 = vector.shape_cast %277 : vector<1x32x32xf32> to vector<32x32xf32>
    %cst_158 = arith.constant dense<0.000000e+00> : vector<16x32xf32>
    %279 = tpu.matmul %270, %272, %cst_158 {dimension_numbers = #tpu.dot_dimension_numbers<[1], [0], [0], [1], [0, 0, 1, 1], [], []>} : vector<16x32xf32>, vector<32x32xf32>, vector<16x32xf32> -> vector<16x32xf32>
    %cst_159 = arith.constant dense<0.000000e+00> : vector<16x32xf32>
    %280 = tpu.matmul %270, %274, %cst_159 {dimension_numbers = #tpu.dot_dimension_numbers<[1], [0], [0], [1], [0, 0, 1, 1], [], []>} : vector<16x32xf32>, vector<32x32xf32>, vector<16x32xf32> -> vector<16x32xf32>
    %cst_160 = arith.constant dense<0.000000e+00> : vector<16x32xf32>
    %281 = tpu.matmul %270, %276, %cst_160 {dimension_numbers = #tpu.dot_dimension_numbers<[1], [0], [0], [1], [0, 0, 1, 1], [], []>} : vector<16x32xf32>, vector<32x32xf32>, vector<16x32xf32> -> vector<16x32xf32>
    %282 = vector.shape_cast %279 : vector<16x32xf32> to vector<2x8x32xf32>
    %283 = vector.shape_cast %280 : vector<16x32xf32> to vector<2x8x32xf32>
    %284 = vector.shape_cast %281 : vector<16x32xf32> to vector<2x8x32xf32>
    %285 = vector.extract_strided_slice %282 {offsets = [0, 0, 0], sizes = [2, 8, 8], strides = [1, 1, 1]} : vector<2x8x32xf32> to vector<2x8x8xf32>
    %286 = vector.extract_strided_slice %283 {offsets = [0, 0, 0], sizes = [2, 8, 8], strides = [1, 1, 1]} : vector<2x8x32xf32> to vector<2x8x8xf32>
    %287 = vector.extract_strided_slice %284 {offsets = [0, 0, 0], sizes = [2, 8, 8], strides = [1, 1, 1]} : vector<2x8x32xf32> to vector<2x8x8xf32>
    "tpu.trace_start"() <{level = 10 : i32, message = "bqd,bkd->bqk"}> : () -> ()
    %cst_161 = arith.constant dense<0.000000e+00> : vector<2x8x8xf32>
    %288 = tpu.matmul %285, %286, %cst_161 {dimension_numbers = #tpu.dot_dimension_numbers<[2], [2], [1], [1], [0, 0, 0, 1, 1, 1], [0], [0]>} : vector<2x8x8xf32>, vector<2x8x8xf32>, vector<2x8x8xf32> -> vector<2x8x8xf32>
    "tpu.trace_stop"() : () -> ()
    %289 = arith.addf %288, %4 : vector<2x8x8xf32>
    %cst_162 = arith.constant dense<0xFF800000> : vector<2x8xf32>
    %290 = vector.multi_reduction <maximumf>, %289, %cst_162 [2] : vector<2x8x8xf32> to vector<2x8xf32>
    %291 = vector.shape_cast %290 : vector<2x8xf32> to vector<2x8x1xf32>
    %292 = vector.broadcast %291 : vector<2x8x1xf32> to vector<2x8x8xf32>
    %293 = arith.subf %289, %292 : vector<2x8x8xf32>
    %294 = math.exp %293 : vector<2x8x8xf32>
    %cst_163 = arith.constant dense<0.000000e+00> : vector<2x8xf32>
    %295 = vector.multi_reduction <add>, %294, %cst_163 [2] : vector<2x8x8xf32> to vector<2x8xf32>
    %296 = vector.shape_cast %295 : vector<2x8xf32> to vector<2x8x1xf32>
    %297 = tpu.reciprocal %296 {approx = true} : vector<2x8x1xf32> -> vector<2x8x1xf32>
    %298 = vector.broadcast %297 : vector<2x8x1xf32> to vector<2x8x8xf32>
    %299 = arith.mulf %294, %298 : vector<2x8x8xf32>
    "tpu.trace_start"() <{level = 10 : i32, message = "bqk,bkd->bqd"}> : () -> ()
    %cst_164 = arith.constant dense<0.000000e+00> : vector<2x8x8xf32>
    %300 = tpu.matmul %299, %287, %cst_164 {dimension_numbers = #tpu.dot_dimension_numbers<[2], [1], [1], [2], [0, 0, 0, 1, 1, 2], [0], [0]>} : vector<2x8x8xf32>, vector<2x8x8xf32>, vector<2x8x8xf32> -> vector<2x8x8xf32>
    "tpu.trace_stop"() : () -> ()
    %301 = vector.shape_cast %300 : vector<2x8x8xf32> to vector<16x8xf32>
    %c0_165 = arith.constant 0 : index
    %c0_166 = arith.constant 0 : index
    %302 = vector.load %arg17[%c0_165, %c0_166] : memref<16x32xf32, #tpu.memory_space<vmem>>, vector<16x8xf32>
    tpu.vector_store %arg17[%c0_165, %c0_166], %301 {strides = array<i32>} : memref<16x32xf32, #tpu.memory_space<vmem>>, vector<16x8xf32>,
    %303 = vector.extract_strided_slice %282 {offsets = [0, 0, 8], sizes = [2, 8, 8], strides = [1, 1, 1]} : vector<2x8x32xf32> to vector<2x8x8xf32>
    %304 = vector.extract_strided_slice %283 {offsets = [0, 0, 8], sizes = [2, 8, 8], strides = [1, 1, 1]} : vector<2x8x32xf32> to vector<2x8x8xf32>
    %305 = vector.extract_strided_slice %284 {offsets = [0, 0, 8], sizes = [2, 8, 8], strides = [1, 1, 1]} : vector<2x8x32xf32> to vector<2x8x8xf32>
    "tpu.trace_start"() <{level = 10 : i32, message = "bqd,bkd->bqk"}> : () -> ()
    %cst_167 = arith.constant dense<0.000000e+00> : vector<2x8x8xf32>
    %306 = tpu.matmul %303, %304, %cst_167 {dimension_numbers = #tpu.dot_dimension_numbers<[2], [2], [1], [1], [0, 0, 0, 1, 1, 1], [0], [0]>} : vector<2x8x8xf32>, vector<2x8x8xf32>, vector<2x8x8xf32> -> vector<2x8x8xf32>
    "tpu.trace_stop"() : () -> ()
    %307 = arith.addf %306, %4 : vector<2x8x8xf32>
    %cst_168 = arith.constant dense<0xFF800000> : vector<2x8xf32>
    %308 = vector.multi_reduction <maximumf>, %307, %cst_168 [2] : vector<2x8x8xf32> to vector<2x8xf32>
    %309 = vector.shape_cast %308 : vector<2x8xf32> to vector<2x8x1xf32>
    %310 = vector.broadcast %309 : vector<2x8x1xf32> to vector<2x8x8xf32>
    %311 = arith.subf %307, %310 : vector<2x8x8xf32>
    %312 = math.exp %311 : vector<2x8x8xf32>
    %cst_169 = arith.constant dense<0.000000e+00> : vector<2x8xf32>
    %313 = vector.multi_reduction <add>, %312, %cst_169 [2] : vector<2x8x8xf32> to vector<2x8xf32>
    %314 = vector.shape_cast %313 : vector<2x8xf32> to vector<2x8x1xf32>
    %315 = tpu.reciprocal %314 {approx = true} : vector<2x8x1xf32> -> vector<2x8x1xf32>
    %316 = vector.broadcast %315 : vector<2x8x1xf32> to vector<2x8x8xf32>
    %317 = arith.mulf %312, %316 : vector<2x8x8xf32>
    "tpu.trace_start"() <{level = 10 : i32, message = "bqk,bkd->bqd"}> : () -> ()
    %cst_170 = arith.constant dense<0.000000e+00> : vector<2x8x8xf32>
    %318 = tpu.matmul %317, %305, %cst_170 {dimension_numbers = #tpu.dot_dimension_numbers<[2], [1], [1], [2], [0, 0, 0, 1, 1, 2], [0], [0]>} : vector<2x8x8xf32>, vector<2x8x8xf32>, vector<2x8x8xf32> -> vector<2x8x8xf32>
    "tpu.trace_stop"() : () -> ()
    %319 = vector.shape_cast %318 : vector<2x8x8xf32> to vector<16x8xf32>
    %c0_171 = arith.constant 0 : index
    %c8_172 = arith.constant 8 : index
    %320 = vector.load %arg17[%c0_171, %c8_172] : memref<16x32xf32, #tpu.memory_space<vmem>>, vector<16x8xf32>
    tpu.vector_store %arg17[%c0_171, %c8_172], %319 {strides = array<i32>} : memref<16x32xf32, #tpu.memory_space<vmem>>, vector<16x8xf32>,
    %321 = vector.extract_strided_slice %282 {offsets = [0, 0, 16], sizes = [2, 8, 8], strides = [1, 1, 1]} : vector<2x8x32xf32> to vector<2x8x8xf32>
    %322 = vector.extract_strided_slice %283 {offsets = [0, 0, 16], sizes = [2, 8, 8], strides = [1, 1, 1]} : vector<2x8x32xf32> to vector<2x8x8xf32>
    %323 = vector.extract_strided_slice %284 {offsets = [0, 0, 16], sizes = [2, 8, 8], strides = [1, 1, 1]} : vector<2x8x32xf32> to vector<2x8x8xf32>
    "tpu.trace_start"() <{level = 10 : i32, message = "bqd,bkd->bqk"}> : () -> ()
    %cst_173 = arith.constant dense<0.000000e+00> : vector<2x8x8xf32>
    %324 = tpu.matmul %321, %322, %cst_173 {dimension_numbers = #tpu.dot_dimension_numbers<[2], [2], [1], [1], [0, 0, 0, 1, 1, 1], [0], [0]>} : vector<2x8x8xf32>, vector<2x8x8xf32>, vector<2x8x8xf32> -> vector<2x8x8xf32>
    "tpu.trace_stop"() : () -> ()
    %325 = arith.addf %324, %4 : vector<2x8x8xf32>
    %cst_174 = arith.constant dense<0xFF800000> : vector<2x8xf32>
    %326 = vector.multi_reduction <maximumf>, %325, %cst_174 [2] : vector<2x8x8xf32> to vector<2x8xf32>
    %327 = vector.shape_cast %326 : vector<2x8xf32> to vector<2x8x1xf32>
    %328 = vector.broadcast %327 : vector<2x8x1xf32> to vector<2x8x8xf32>
    %329 = arith.subf %325, %328 : vector<2x8x8xf32>
    %330 = math.exp %329 : vector<2x8x8xf32>
    %cst_175 = arith.constant dense<0.000000e+00> : vector<2x8xf32>
    %331 = vector.multi_reduction <add>, %330, %cst_175 [2] : vector<2x8x8xf32> to vector<2x8xf32>
    %332 = vector.shape_cast %331 : vector<2x8xf32> to vector<2x8x1xf32>
    %333 = tpu.reciprocal %332 {approx = true} : vector<2x8x1xf32> -> vector<2x8x1xf32>
    %334 = vector.broadcast %333 : vector<2x8x1xf32> to vector<2x8x8xf32>
    %335 = arith.mulf %330, %334 : vector<2x8x8xf32>
    "tpu.trace_start"() <{level = 10 : i32, message = "bqk,bkd->bqd"}> : () -> ()
    %cst_176 = arith.constant dense<0.000000e+00> : vector<2x8x8xf32>
    %336 = tpu.matmul %335, %323, %cst_176 {dimension_numbers = #tpu.dot_dimension_numbers<[2], [1], [1], [2], [0, 0, 0, 1, 1, 2], [0], [0]>} : vector<2x8x8xf32>, vector<2x8x8xf32>, vector<2x8x8xf32> -> vector<2x8x8xf32>
    "tpu.trace_stop"() : () -> ()
    %337 = vector.shape_cast %336 : vector<2x8x8xf32> to vector<16x8xf32>
    %c0_177 = arith.constant 0 : index
    %c16_178 = arith.constant 16 : index
    %338 = vector.load %arg17[%c0_177, %c16_178] : memref<16x32xf32, #tpu.memory_space<vmem>>, vector<16x8xf32>
    tpu.vector_store %arg17[%c0_177, %c16_178], %337 {strides = array<i32>} : memref<16x32xf32, #tpu.memory_space<vmem>>, vector<16x8xf32>,
    %339 = vector.extract_strided_slice %282 {offsets = [0, 0, 24], sizes = [2, 8, 8], strides = [1, 1, 1]} : vector<2x8x32xf32> to vector<2x8x8xf32>
    %340 = vector.extract_strided_slice %283 {offsets = [0, 0, 24], sizes = [2, 8, 8], strides = [1, 1, 1]} : vector<2x8x32xf32> to vector<2x8x8xf32>
    %341 = vector.extract_strided_slice %284 {offsets = [0, 0, 24], sizes = [2, 8, 8], strides = [1, 1, 1]} : vector<2x8x32xf32> to vector<2x8x8xf32>
    "tpu.trace_start"() <{level = 10 : i32, message = "bqd,bkd->bqk"}> : () -> ()
    %cst_179 = arith.constant dense<0.000000e+00> : vector<2x8x8xf32>
    %342 = tpu.matmul %339, %340, %cst_179 {dimension_numbers = #tpu.dot_dimension_numbers<[2], [2], [1], [1], [0, 0, 0, 1, 1, 1], [0], [0]>} : vector<2x8x8xf32>, vector<2x8x8xf32>, vector<2x8x8xf32> -> vector<2x8x8xf32>
    "tpu.trace_stop"() : () -> ()
    %343 = arith.addf %342, %4 : vector<2x8x8xf32>
    %cst_180 = arith.constant dense<0xFF800000> : vector<2x8xf32>
    %344 = vector.multi_reduction <maximumf>, %343, %cst_180 [2] : vector<2x8x8xf32> to vector<2x8xf32>
    %345 = vector.shape_cast %344 : vector<2x8xf32> to vector<2x8x1xf32>
    %346 = vector.broadcast %345 : vector<2x8x1xf32> to vector<2x8x8xf32>
    %347 = arith.subf %343, %346 : vector<2x8x8xf32>
    %348 = math.exp %347 : vector<2x8x8xf32>
    %cst_181 = arith.constant dense<0.000000e+00> : vector<2x8xf32>
    %349 = vector.multi_reduction <add>, %348, %cst_181 [2] : vector<2x8x8xf32> to vector<2x8xf32>
    %350 = vector.shape_cast %349 : vector<2x8xf32> to vector<2x8x1xf32>
    %351 = tpu.reciprocal %350 {approx = true} : vector<2x8x1xf32> -> vector<2x8x1xf32>
    %352 = vector.broadcast %351 : vector<2x8x1xf32> to vector<2x8x8xf32>
    %353 = arith.mulf %348, %352 : vector<2x8x8xf32>
    "tpu.trace_start"() <{level = 10 : i32, message = "bqk,bkd->bqd"}> : () -> ()
    %cst_182 = arith.constant dense<0.000000e+00> : vector<2x8x8xf32>
    %354 = tpu.matmul %353, %341, %cst_182 {dimension_numbers = #tpu.dot_dimension_numbers<[2], [1], [1], [2], [0, 0, 0, 1, 1, 2], [0], [0]>} : vector<2x8x8xf32>, vector<2x8x8xf32>, vector<2x8x8xf32> -> vector<2x8x8xf32>
    "tpu.trace_stop"() : () -> ()
    %355 = vector.shape_cast %354 : vector<2x8x8xf32> to vector<16x8xf32>
    %c0_183 = arith.constant 0 : index
    %c24_184 = arith.constant 24 : index
    %356 = vector.load %arg17[%c0_183, %c24_184] : memref<16x32xf32, #tpu.memory_space<vmem>>, vector<16x8xf32>
    tpu.vector_store %arg17[%c0_183, %c24_184], %355 {strides = array<i32>} : memref<16x32xf32, #tpu.memory_space<vmem>>, vector<16x8xf32>,
    %c0_185 = arith.constant 0 : index
    %c0_186 = arith.constant 0 : index
    %357 = vector.load %arg17[%c0_185, %c0_186] : memref<16x32xf32, #tpu.memory_space<vmem>>, vector<16x32xf32>
    %cst_187 = arith.constant dense<0.000000e+00> : vector<16x32xf32>
    %358 = tpu.matmul %357, %278, %cst_187 {dimension_numbers = #tpu.dot_dimension_numbers<[1], [0], [0], [1], [0, 0, 1, 1], [], []>} : vector<16x32xf32>, vector<32x32xf32>, vector<16x32xf32> -> vector<16x32xf32>
    %359 = arith.addf %358, %270 : vector<16x32xf32>
    %cst_188 = arith.constant dense<0.000000e+00> : vector<16xf32>
    %360 = vector.multi_reduction <add>, %359, %cst_188 [1] : vector<16x32xf32> to vector<16xf32>
    %361 = vector.shape_cast %360 : vector<16xf32> to vector<16x1xf32>
    %cst_189 = arith.constant 3.200000e+01 : f32
    %362 = vector.broadcast %cst_189 : f32 to vector<16x1xf32>
    %363 = arith.divf %361, %362 : vector<16x1xf32>
    %364 = vector.broadcast %363 : vector<16x1xf32> to vector<16x32xf32>
    %365 = arith.subf %359, %364 : vector<16x32xf32>
    %366 = arith.mulf %365, %365 : vector<16x32xf32>
    %cst_190 = arith.constant dense<0.000000e+00> : vector<16xf32>
    %367 = vector.multi_reduction <add>, %366, %cst_190 [1] : vector<16x32xf32> to vector<16xf32>
    %368 = vector.shape_cast %367 : vector<16xf32> to vector<16x1xf32>
    %cst_191 = arith.constant 3.200000e+01 : f32
    %369 = vector.broadcast %cst_191 : f32 to vector<16x1xf32>
    %370 = arith.divf %368, %369 : vector<16x1xf32>
    %371 = vector.broadcast %363 : vector<16x1xf32> to vector<16x32xf32>
    %372 = arith.subf %359, %371 : vector<16x32xf32>
    %cst_192 = arith.constant 9.99999974E-6 : f32
    %373 = vector.broadcast %cst_192 : f32 to vector<16x1xf32>
    %374 = arith.addf %370, %373 : vector<16x1xf32>
    %375 = math.rsqrt %374 : vector<16x1xf32>
    %376 = vector.broadcast %375 : vector<16x1xf32> to vector<16x32xf32>
    %377 = arith.mulf %372, %376 : vector<16x32xf32>
    %c1_193 = arith.constant 1 : index
    %c0_194 = arith.constant 0 : index
    %c0_195 = arith.constant 0 : index
    %c0_196 = arith.constant 0 : index
    %378 = vector.load %arg15[%c1_193, %c0_194, %c0_195, %c0_196] : memref<2x2x8x32xf32, #tpu.memory_space<vmem>>, vector<1x2x8x8xf32>
    %379 = vector.shape_cast %378 : vector<1x2x8x8xf32> to vector<2x8x8xf32>
    %380 = vector.shape_cast %299 : vector<2x8x8xf32> to vector<1x2x8x8xf32>
    tpu.vector_store %arg15[%c1_193, %c0_194, %c0_195, %c0_196], %380 {strides = array<i32>} : memref<2x2x8x32xf32, #tpu.memory_space<vmem>>, vector<1x2x8x8xf32>,
    %c1_197 = arith.constant 1 : index
    %c0_198 = arith.constant 0 : index
    %c0_199 = arith.constant 0 : index
    %c8_200 = arith.constant 8 : index
    %381 = vector.load %arg15[%c1_197, %c0_198, %c0_199, %c8_200] : memref<2x2x8x32xf32, #tpu.memory_space<vmem>>, vector<1x2x8x8xf32>
    %382 = vector.shape_cast %381 : vector<1x2x8x8xf32> to vector<2x8x8xf32>
    %383 = vector.shape_cast %317 : vector<2x8x8xf32> to vector<1x2x8x8xf32>
    tpu.vector_store %arg15[%c1_197, %c0_198, %c0_199, %c8_200], %383 {strides = array<i32>} : memref<2x2x8x32xf32, #tpu.memory_space<vmem>>, vector<1x2x8x8xf32>,
    %c1_201 = arith.constant 1 : index
    %c0_202 = arith.constant 0 : index
    %c0_203 = arith.constant 0 : index
    %c16_204 = arith.constant 16 : index
    %384 = vector.load %arg15[%c1_201, %c0_202, %c0_203, %c16_204] : memref<2x2x8x32xf32, #tpu.memory_space<vmem>>, vector<1x2x8x8xf32>
    %385 = vector.shape_cast %384 : vector<1x2x8x8xf32> to vector<2x8x8xf32>
    %386 = vector.shape_cast %335 : vector<2x8x8xf32> to vector<1x2x8x8xf32>
    tpu.vector_store %arg15[%c1_201, %c0_202, %c0_203, %c16_204], %386 {strides = array<i32>} : memref<2x2x8x32xf32, #tpu.memory_space<vmem>>, vector<1x2x8x8xf32>,
    %c1_205 = arith.constant 1 : index
    %c0_206 = arith.constant 0 : index
    %c0_207 = arith.constant 0 : index
    %c24_208 = arith.constant 24 : index
    %387 = vector.load %arg15[%c1_205, %c0_206, %c0_207, %c24_208] : memref<2x2x8x32xf32, #tpu.memory_space<vmem>>, vector<1x2x8x8xf32>
    %388 = vector.shape_cast %387 : vector<1x2x8x8xf32> to vector<2x8x8xf32>
    %389 = vector.shape_cast %353 : vector<2x8x8xf32> to vector<1x2x8x8xf32>
    tpu.vector_store %arg15[%c1_205, %c0_206, %c0_207, %c24_208], %389 {strides = array<i32>} : memref<2x2x8x32xf32, #tpu.memory_space<vmem>>, vector<1x2x8x8xf32>,
    %c1_209 = arith.constant 1 : index
    %c0_210 = arith.constant 0 : index
    %c0_211 = arith.constant 0 : index
    %390 = vector.load %arg8[%c1_209, %c0_210, %c0_211] : memref<2x32x32xf32, #tpu.memory_space<vmem>>, vector<1x32x32xf32>
    %391 = vector.shape_cast %390 : vector<1x32x32xf32> to vector<32x32xf32>
    %c1_212 = arith.constant 1 : index
    %c0_213 = arith.constant 0 : index
    %c0_214 = arith.constant 0 : index
    %392 = vector.load %arg9[%c1_212, %c0_213, %c0_214] : memref<2x32x32xf32, #tpu.memory_space<vmem>>, vector<1x32x32xf32>
    %393 = vector.shape_cast %392 : vector<1x32x32xf32> to vector<32x32xf32>
    %c1_215 = arith.constant 1 : index
    %c0_216 = arith.constant 0 : index
    %c0_217 = arith.constant 0 : index
    %394 = vector.load %arg10[%c1_215, %c0_216, %c0_217] : memref<2x32x32xf32, #tpu.memory_space<vmem>>, vector<1x32x32xf32>
    %395 = vector.shape_cast %394 : vector<1x32x32xf32> to vector<32x32xf32>
    %c1_218 = arith.constant 1 : index
    %c0_219 = arith.constant 0 : index
    %c0_220 = arith.constant 0 : index
    %396 = vector.load %arg11[%c1_218, %c0_219, %c0_220] : memref<2x32x32xf32, #tpu.memory_space<vmem>>, vector<1x32x32xf32>
    %397 = vector.shape_cast %396 : vector<1x32x32xf32> to vector<32x32xf32>
    %cst_221 = arith.constant dense<0.000000e+00> : vector<16x32xf32>
    %398 = tpu.matmul %377, %391, %cst_221 {dimension_numbers = #tpu.dot_dimension_numbers<[1], [0], [0], [1], [0, 0, 1, 1], [], []>} : vector<16x32xf32>, vector<32x32xf32>, vector<16x32xf32> -> vector<16x32xf32>
    %cst_222 = arith.constant dense<0.000000e+00> : vector<16x32xf32>
    %399 = tpu.matmul %3, %393, %cst_222 {dimension_numbers = #tpu.dot_dimension_numbers<[1], [0], [0], [1], [0, 0, 1, 1], [], []>} : vector<16x32xf32>, vector<32x32xf32>, vector<16x32xf32> -> vector<16x32xf32>
    %cst_223 = arith.constant dense<0.000000e+00> : vector<16x32xf32>
    %400 = tpu.matmul %3, %395, %cst_223 {dimension_numbers = #tpu.dot_dimension_numbers<[1], [0], [0], [1], [0, 0, 1, 1], [], []>} : vector<16x32xf32>, vector<32x32xf32>, vector<16x32xf32> -> vector<16x32xf32>
    %401 = vector.shape_cast %398 : vector<16x32xf32> to vector<2x8x32xf32>
    %402 = vector.shape_cast %399 : vector<16x32xf32> to vector<2x8x32xf32>
    %403 = vector.shape_cast %400 : vector<16x32xf32> to vector<2x8x32xf32>
    %404 = vector.extract_strided_slice %401 {offsets = [0, 0, 0], sizes = [2, 8, 8], strides = [1, 1, 1]} : vector<2x8x32xf32> to vector<2x8x8xf32>
    %405 = vector.extract_strided_slice %402 {offsets = [0, 0, 0], sizes = [2, 8, 8], strides = [1, 1, 1]} : vector<2x8x32xf32> to vector<2x8x8xf32>
    %406 = vector.extract_strided_slice %403 {offsets = [0, 0, 0], sizes = [2, 8, 8], strides = [1, 1, 1]} : vector<2x8x32xf32> to vector<2x8x8xf32>
    "tpu.trace_start"() <{level = 10 : i32, message = "bqd,bkd->bqk"}> : () -> ()
    %cst_224 = arith.constant dense<0.000000e+00> : vector<2x8x8xf32>
    %407 = tpu.matmul %404, %405, %cst_224 {dimension_numbers = #tpu.dot_dimension_numbers<[2], [2], [1], [1], [0, 0, 0, 1, 1, 1], [0], [0]>} : vector<2x8x8xf32>, vector<2x8x8xf32>, vector<2x8x8xf32> -> vector<2x8x8xf32>
    "tpu.trace_stop"() : () -> ()
    %408 = arith.addf %407, %5 : vector<2x8x8xf32>
    %cst_225 = arith.constant dense<0xFF800000> : vector<2x8xf32>
    %409 = vector.multi_reduction <maximumf>, %408, %cst_225 [2] : vector<2x8x8xf32> to vector<2x8xf32>
    %410 = vector.shape_cast %409 : vector<2x8xf32> to vector<2x8x1xf32>
    %411 = vector.broadcast %410 : vector<2x8x1xf32> to vector<2x8x8xf32>
    %412 = arith.subf %408, %411 : vector<2x8x8xf32>
    %413 = math.exp %412 : vector<2x8x8xf32>
    %cst_226 = arith.constant dense<0.000000e+00> : vector<2x8xf32>
    %414 = vector.multi_reduction <add>, %413, %cst_226 [2] : vector<2x8x8xf32> to vector<2x8xf32>
    %415 = vector.shape_cast %414 : vector<2x8xf32> to vector<2x8x1xf32>
    %416 = tpu.reciprocal %415 {approx = true} : vector<2x8x1xf32> -> vector<2x8x1xf32>
    %417 = vector.broadcast %416 : vector<2x8x1xf32> to vector<2x8x8xf32>
    %418 = arith.mulf %413, %417 : vector<2x8x8xf32>
    "tpu.trace_start"() <{level = 10 : i32, message = "bqk,bkd->bqd"}> : () -> ()
    %cst_227 = arith.constant dense<0.000000e+00> : vector<2x8x8xf32>
    %419 = tpu.matmul %418, %406, %cst_227 {dimension_numbers = #tpu.dot_dimension_numbers<[2], [1], [1], [2], [0, 0, 0, 1, 1, 2], [0], [0]>} : vector<2x8x8xf32>, vector<2x8x8xf32>, vector<2x8x8xf32> -> vector<2x8x8xf32>
    "tpu.trace_stop"() : () -> ()
    %420 = vector.shape_cast %419 : vector<2x8x8xf32> to vector<16x8xf32>
    %c0_228 = arith.constant 0 : index
    %c0_229 = arith.constant 0 : index
    %421 = vector.load %arg17[%c0_228, %c0_229] : memref<16x32xf32, #tpu.memory_space<vmem>>, vector<16x8xf32>
    tpu.vector_store %arg17[%c0_228, %c0_229], %420 {strides = array<i32>} : memref<16x32xf32, #tpu.memory_space<vmem>>, vector<16x8xf32>,
    %422 = vector.extract_strided_slice %401 {offsets = [0, 0, 8], sizes = [2, 8, 8], strides = [1, 1, 1]} : vector<2x8x32xf32> to vector<2x8x8xf32>
    %423 = vector.extract_strided_slice %402 {offsets = [0, 0, 8], sizes = [2, 8, 8], strides = [1, 1, 1]} : vector<2x8x32xf32> to vector<2x8x8xf32>
    %424 = vector.extract_strided_slice %403 {offsets = [0, 0, 8], sizes = [2, 8, 8], strides = [1, 1, 1]} : vector<2x8x32xf32> to vector<2x8x8xf32>
    "tpu.trace_start"() <{level = 10 : i32, message = "bqd,bkd->bqk"}> : () -> ()
    %cst_230 = arith.constant dense<0.000000e+00> : vector<2x8x8xf32>
    %425 = tpu.matmul %422, %423, %cst_230 {dimension_numbers = #tpu.dot_dimension_numbers<[2], [2], [1], [1], [0, 0, 0, 1, 1, 1], [0], [0]>} : vector<2x8x8xf32>, vector<2x8x8xf32>, vector<2x8x8xf32> -> vector<2x8x8xf32>
    "tpu.trace_stop"() : () -> ()
    %426 = arith.addf %425, %5 : vector<2x8x8xf32>
    %cst_231 = arith.constant dense<0xFF800000> : vector<2x8xf32>
    %427 = vector.multi_reduction <maximumf>, %426, %cst_231 [2] : vector<2x8x8xf32> to vector<2x8xf32>
    %428 = vector.shape_cast %427 : vector<2x8xf32> to vector<2x8x1xf32>
    %429 = vector.broadcast %428 : vector<2x8x1xf32> to vector<2x8x8xf32>
    %430 = arith.subf %426, %429 : vector<2x8x8xf32>
    %431 = math.exp %430 : vector<2x8x8xf32>
    %cst_232 = arith.constant dense<0.000000e+00> : vector<2x8xf32>
    %432 = vector.multi_reduction <add>, %431, %cst_232 [2] : vector<2x8x8xf32> to vector<2x8xf32>
    %433 = vector.shape_cast %432 : vector<2x8xf32> to vector<2x8x1xf32>
    %434 = tpu.reciprocal %433 {approx = true} : vector<2x8x1xf32> -> vector<2x8x1xf32>
    %435 = vector.broadcast %434 : vector<2x8x1xf32> to vector<2x8x8xf32>
    %436 = arith.mulf %431, %435 : vector<2x8x8xf32>
    "tpu.trace_start"() <{level = 10 : i32, message = "bqk,bkd->bqd"}> : () -> ()
    %cst_233 = arith.constant dense<0.000000e+00> : vector<2x8x8xf32>
    %437 = tpu.matmul %436, %424, %cst_233 {dimension_numbers = #tpu.dot_dimension_numbers<[2], [1], [1], [2], [0, 0, 0, 1, 1, 2], [0], [0]>} : vector<2x8x8xf32>, vector<2x8x8xf32>, vector<2x8x8xf32> -> vector<2x8x8xf32>
    "tpu.trace_stop"() : () -> ()
    %438 = vector.shape_cast %437 : vector<2x8x8xf32> to vector<16x8xf32>
    %c0_234 = arith.constant 0 : index
    %c8_235 = arith.constant 8 : index
    %439 = vector.load %arg17[%c0_234, %c8_235] : memref<16x32xf32, #tpu.memory_space<vmem>>, vector<16x8xf32>
    tpu.vector_store %arg17[%c0_234, %c8_235], %438 {strides = array<i32>} : memref<16x32xf32, #tpu.memory_space<vmem>>, vector<16x8xf32>,
    %440 = vector.extract_strided_slice %401 {offsets = [0, 0, 16], sizes = [2, 8, 8], strides = [1, 1, 1]} : vector<2x8x32xf32> to vector<2x8x8xf32>
    %441 = vector.extract_strided_slice %402 {offsets = [0, 0, 16], sizes = [2, 8, 8], strides = [1, 1, 1]} : vector<2x8x32xf32> to vector<2x8x8xf32>
    %442 = vector.extract_strided_slice %403 {offsets = [0, 0, 16], sizes = [2, 8, 8], strides = [1, 1, 1]} : vector<2x8x32xf32> to vector<2x8x8xf32>
    "tpu.trace_start"() <{level = 10 : i32, message = "bqd,bkd->bqk"}> : () -> ()
    %cst_236 = arith.constant dense<0.000000e+00> : vector<2x8x8xf32>
    %443 = tpu.matmul %440, %441, %cst_236 {dimension_numbers = #tpu.dot_dimension_numbers<[2], [2], [1], [1], [0, 0, 0, 1, 1, 1], [0], [0]>} : vector<2x8x8xf32>, vector<2x8x8xf32>, vector<2x8x8xf32> -> vector<2x8x8xf32>
    "tpu.trace_stop"() : () -> ()
    %444 = arith.addf %443, %5 : vector<2x8x8xf32>
    %cst_237 = arith.constant dense<0xFF800000> : vector<2x8xf32>
    %445 = vector.multi_reduction <maximumf>, %444, %cst_237 [2] : vector<2x8x8xf32> to vector<2x8xf32>
    %446 = vector.shape_cast %445 : vector<2x8xf32> to vector<2x8x1xf32>
    %447 = vector.broadcast %446 : vector<2x8x1xf32> to vector<2x8x8xf32>
    %448 = arith.subf %444, %447 : vector<2x8x8xf32>
    %449 = math.exp %448 : vector<2x8x8xf32>
    %cst_238 = arith.constant dense<0.000000e+00> : vector<2x8xf32>
    %450 = vector.multi_reduction <add>, %449, %cst_238 [2] : vector<2x8x8xf32> to vector<2x8xf32>
    %451 = vector.shape_cast %450 : vector<2x8xf32> to vector<2x8x1xf32>
    %452 = tpu.reciprocal %451 {approx = true} : vector<2x8x1xf32> -> vector<2x8x1xf32>
    %453 = vector.broadcast %452 : vector<2x8x1xf32> to vector<2x8x8xf32>
    %454 = arith.mulf %449, %453 : vector<2x8x8xf32>
    "tpu.trace_start"() <{level = 10 : i32, message = "bqk,bkd->bqd"}> : () -> ()
    %cst_239 = arith.constant dense<0.000000e+00> : vector<2x8x8xf32>
    %455 = tpu.matmul %454, %442, %cst_239 {dimension_numbers = #tpu.dot_dimension_numbers<[2], [1], [1], [2], [0, 0, 0, 1, 1, 2], [0], [0]>} : vector<2x8x8xf32>, vector<2x8x8xf32>, vector<2x8x8xf32> -> vector<2x8x8xf32>
    "tpu.trace_stop"() : () -> ()
    %456 = vector.shape_cast %455 : vector<2x8x8xf32> to vector<16x8xf32>
    %c0_240 = arith.constant 0 : index
    %c16_241 = arith.constant 16 : index
    %457 = vector.load %arg17[%c0_240, %c16_241] : memref<16x32xf32, #tpu.memory_space<vmem>>, vector<16x8xf32>
    tpu.vector_store %arg17[%c0_240, %c16_241], %456 {strides = array<i32>} : memref<16x32xf32, #tpu.memory_space<vmem>>, vector<16x8xf32>,
    %458 = vector.extract_strided_slice %401 {offsets = [0, 0, 24], sizes = [2, 8, 8], strides = [1, 1, 1]} : vector<2x8x32xf32> to vector<2x8x8xf32>
    %459 = vector.extract_strided_slice %402 {offsets = [0, 0, 24], sizes = [2, 8, 8], strides = [1, 1, 1]} : vector<2x8x32xf32> to vector<2x8x8xf32>
    %460 = vector.extract_strided_slice %403 {offsets = [0, 0, 24], sizes = [2, 8, 8], strides = [1, 1, 1]} : vector<2x8x32xf32> to vector<2x8x8xf32>
    "tpu.trace_start"() <{level = 10 : i32, message = "bqd,bkd->bqk"}> : () -> ()
    %cst_242 = arith.constant dense<0.000000e+00> : vector<2x8x8xf32>
    %461 = tpu.matmul %458, %459, %cst_242 {dimension_numbers = #tpu.dot_dimension_numbers<[2], [2], [1], [1], [0, 0, 0, 1, 1, 1], [0], [0]>} : vector<2x8x8xf32>, vector<2x8x8xf32>, vector<2x8x8xf32> -> vector<2x8x8xf32>
    "tpu.trace_stop"() : () -> ()
    %462 = arith.addf %461, %5 : vector<2x8x8xf32>
    %cst_243 = arith.constant dense<0xFF800000> : vector<2x8xf32>
    %463 = vector.multi_reduction <maximumf>, %462, %cst_243 [2] : vector<2x8x8xf32> to vector<2x8xf32>
    %464 = vector.shape_cast %463 : vector<2x8xf32> to vector<2x8x1xf32>
    %465 = vector.broadcast %464 : vector<2x8x1xf32> to vector<2x8x8xf32>
    %466 = arith.subf %462, %465 : vector<2x8x8xf32>
    %467 = math.exp %466 : vector<2x8x8xf32>
    %cst_244 = arith.constant dense<0.000000e+00> : vector<2x8xf32>
    %468 = vector.multi_reduction <add>, %467, %cst_244 [2] : vector<2x8x8xf32> to vector<2x8xf32>
    %469 = vector.shape_cast %468 : vector<2x8xf32> to vector<2x8x1xf32>
    %470 = tpu.reciprocal %469 {approx = true} : vector<2x8x1xf32> -> vector<2x8x1xf32>
    %471 = vector.broadcast %470 : vector<2x8x1xf32> to vector<2x8x8xf32>
    %472 = arith.mulf %467, %471 : vector<2x8x8xf32>
    "tpu.trace_start"() <{level = 10 : i32, message = "bqk,bkd->bqd"}> : () -> ()
    %cst_245 = arith.constant dense<0.000000e+00> : vector<2x8x8xf32>
    %473 = tpu.matmul %472, %460, %cst_245 {dimension_numbers = #tpu.dot_dimension_numbers<[2], [1], [1], [2], [0, 0, 0, 1, 1, 2], [0], [0]>} : vector<2x8x8xf32>, vector<2x8x8xf32>, vector<2x8x8xf32> -> vector<2x8x8xf32>
    "tpu.trace_stop"() : () -> ()
    %474 = vector.shape_cast %473 : vector<2x8x8xf32> to vector<16x8xf32>
    %c0_246 = arith.constant 0 : index
    %c24_247 = arith.constant 24 : index
    %475 = vector.load %arg17[%c0_246, %c24_247] : memref<16x32xf32, #tpu.memory_space<vmem>>, vector<16x8xf32>
    tpu.vector_store %arg17[%c0_246, %c24_247], %474 {strides = array<i32>} : memref<16x32xf32, #tpu.memory_space<vmem>>, vector<16x8xf32>,
    %c0_248 = arith.constant 0 : index
    %c0_249 = arith.constant 0 : index
    %476 = vector.load %arg17[%c0_248, %c0_249] : memref<16x32xf32, #tpu.memory_space<vmem>>, vector<16x32xf32>
    %cst_250 = arith.constant dense<0.000000e+00> : vector<16x32xf32>
    %477 = tpu.matmul %476, %397, %cst_250 {dimension_numbers = #tpu.dot_dimension_numbers<[1], [0], [0], [1], [0, 0, 1, 1], [], []>} : vector<16x32xf32>, vector<32x32xf32>, vector<16x32xf32> -> vector<16x32xf32>
    %478 = arith.addf %477, %377 : vector<16x32xf32>
    %cst_251 = arith.constant dense<0.000000e+00> : vector<16xf32>
    %479 = vector.multi_reduction <add>, %478, %cst_251 [1] : vector<16x32xf32> to vector<16xf32>
    %480 = vector.shape_cast %479 : vector<16xf32> to vector<16x1xf32>
    %cst_252 = arith.constant 3.200000e+01 : f32
    %481 = vector.broadcast %cst_252 : f32 to vector<16x1xf32>
    %482 = arith.divf %480, %481 : vector<16x1xf32>
    %483 = vector.broadcast %482 : vector<16x1xf32> to vector<16x32xf32>
    %484 = arith.subf %478, %483 : vector<16x32xf32>
    %485 = arith.mulf %484, %484 : vector<16x32xf32>
    %cst_253 = arith.constant dense<0.000000e+00> : vector<16xf32>
    %486 = vector.multi_reduction <add>, %485, %cst_253 [1] : vector<16x32xf32> to vector<16xf32>
    %487 = vector.shape_cast %486 : vector<16xf32> to vector<16x1xf32>
    %cst_254 = arith.constant 3.200000e+01 : f32
    %488 = vector.broadcast %cst_254 : f32 to vector<16x1xf32>
    %489 = arith.divf %487, %488 : vector<16x1xf32>
    %490 = vector.broadcast %482 : vector<16x1xf32> to vector<16x32xf32>
    %491 = arith.subf %478, %490 : vector<16x32xf32>
    %cst_255 = arith.constant 9.99999974E-6 : f32
    %492 = vector.broadcast %cst_255 : f32 to vector<16x1xf32>
    %493 = arith.addf %489, %492 : vector<16x1xf32>
    %494 = math.rsqrt %493 : vector<16x1xf32>
    %495 = vector.broadcast %494 : vector<16x1xf32> to vector<16x32xf32>
    %496 = arith.mulf %491, %495 : vector<16x32xf32>
    %c1_256 = arith.constant 1 : index
    %c0_257 = arith.constant 0 : index
    %c0_258 = arith.constant 0 : index
    %c0_259 = arith.constant 0 : index
    %497 = vector.load %arg16[%c1_256, %c0_257, %c0_258, %c0_259] : memref<2x2x8x32xf32, #tpu.memory_space<vmem>>, vector<1x2x8x8xf32>
    %498 = vector.shape_cast %497 : vector<1x2x8x8xf32> to vector<2x8x8xf32>
    %499 = vector.shape_cast %418 : vector<2x8x8xf32> to vector<1x2x8x8xf32>
    tpu.vector_store %arg16[%c1_256, %c0_257, %c0_258, %c0_259], %499 {strides = array<i32>} : memref<2x2x8x32xf32, #tpu.memory_space<vmem>>, vector<1x2x8x8xf32>,
    %c1_260 = arith.constant 1 : index
    %c0_261 = arith.constant 0 : index
    %c0_262 = arith.constant 0 : index
    %c8_263 = arith.constant 8 : index
    %500 = vector.load %arg16[%c1_260, %c0_261, %c0_262, %c8_263] : memref<2x2x8x32xf32, #tpu.memory_space<vmem>>, vector<1x2x8x8xf32>
    %501 = vector.shape_cast %500 : vector<1x2x8x8xf32> to vector<2x8x8xf32>
    %502 = vector.shape_cast %436 : vector<2x8x8xf32> to vector<1x2x8x8xf32>
    tpu.vector_store %arg16[%c1_260, %c0_261, %c0_262, %c8_263], %502 {strides = array<i32>} : memref<2x2x8x32xf32, #tpu.memory_space<vmem>>, vector<1x2x8x8xf32>,
    %c1_264 = arith.constant 1 : index
    %c0_265 = arith.constant 0 : index
    %c0_266 = arith.constant 0 : index
    %c16_267 = arith.constant 16 : index
    %503 = vector.load %arg16[%c1_264, %c0_265, %c0_266, %c16_267] : memref<2x2x8x32xf32, #tpu.memory_space<vmem>>, vector<1x2x8x8xf32>
    %504 = vector.shape_cast %503 : vector<1x2x8x8xf32> to vector<2x8x8xf32>
    %505 = vector.shape_cast %454 : vector<2x8x8xf32> to vector<1x2x8x8xf32>
    tpu.vector_store %arg16[%c1_264, %c0_265, %c0_266, %c16_267], %505 {strides = array<i32>} : memref<2x2x8x32xf32, #tpu.memory_space<vmem>>, vector<1x2x8x8xf32>,
    %c1_268 = arith.constant 1 : index
    %c0_269 = arith.constant 0 : index
    %c0_270 = arith.constant 0 : index
    %c24_271 = arith.constant 24 : index
    %506 = vector.load %arg16[%c1_268, %c0_269, %c0_270, %c24_271] : memref<2x2x8x32xf32, #tpu.memory_space<vmem>>, vector<1x2x8x8xf32>
    %507 = vector.shape_cast %506 : vector<1x2x8x8xf32> to vector<2x8x8xf32>
    %508 = vector.shape_cast %472 : vector<2x8x8xf32> to vector<1x2x8x8xf32>
    tpu.vector_store %arg16[%c1_268, %c0_269, %c0_270, %c24_271], %508 {strides = array<i32>} : memref<2x2x8x32xf32, #tpu.memory_space<vmem>>, vector<1x2x8x8xf32>,
    %c1_272 = arith.constant 1 : index
    %c0_273 = arith.constant 0 : index
    %c0_274 = arith.constant 0 : index
    %509 = vector.load %arg12[%c1_272, %c0_273, %c0_274] : memref<2x32x64xf32, #tpu.memory_space<vmem>>, vector<1x32x64xf32>
    %510 = vector.shape_cast %509 : vector<1x32x64xf32> to vector<32x64xf32>
    %c1_275 = arith.constant 1 : index
    %c0_276 = arith.constant 0 : index
    %c0_277 = arith.constant 0 : index
    %511 = vector.load %arg13[%c1_275, %c0_276, %c0_277] : memref<2x64x32xf32, #tpu.memory_space<vmem>>, vector<1x64x32xf32>
    %512 = vector.shape_cast %511 : vector<1x64x32xf32> to vector<64x32xf32>
    %cst_278 = arith.constant dense<0.000000e+00> : vector<16x64xf32>
    %513 = tpu.matmul %496, %510, %cst_278 {dimension_numbers = #tpu.dot_dimension_numbers<[1], [0], [0], [1], [0, 0, 1, 1], [], []>} : vector<16x32xf32>, vector<32x64xf32>, vector<16x64xf32> -> vector<16x64xf32>
    %cst_279 = arith.constant 0.000000e+00 : f32
    %514 = vector.broadcast %cst_279 : f32 to vector<16x64xf32>
    %515 = arith.maximumf %513, %514 : vector<16x64xf32>
    %cst_280 = arith.constant dense<0.000000e+00> : vector<16x32xf32>
    %516 = tpu.matmul %515, %512, %cst_280 {dimension_numbers = #tpu.dot_dimension_numbers<[1], [0], [0], [1], [0, 0, 1, 1], [], []>} : vector<16x64xf32>, vector<64x32xf32>, vector<16x32xf32> -> vector<16x32xf32>
    %517 = arith.addf %516, %496 : vector<16x32xf32>
    %cst_281 = arith.constant dense<0.000000e+00> : vector<16xf32>
    %518 = vector.multi_reduction <add>, %517, %cst_281 [1] : vector<16x32xf32> to vector<16xf32>
    %519 = vector.shape_cast %518 : vector<16xf32> to vector<16x1xf32>
    %cst_282 = arith.constant 3.200000e+01 : f32
    %520 = vector.broadcast %cst_282 : f32 to vector<16x1xf32>
    %521 = arith.divf %519, %520 : vector<16x1xf32>
    %522 = vector.broadcast %521 : vector<16x1xf32> to vector<16x32xf32>
    %523 = arith.subf %517, %522 : vector<16x32xf32>
    %524 = arith.mulf %523, %523 : vector<16x32xf32>
    %cst_283 = arith.constant dense<0.000000e+00> : vector<16xf32>
    %525 = vector.multi_reduction <add>, %524, %cst_283 [1] : vector<16x32xf32> to vector<16xf32>
    %526 = vector.shape_cast %525 : vector<16xf32> to vector<16x1xf32>
    %cst_284 = arith.constant 3.200000e+01 : f32
    %527 = vector.broadcast %cst_284 : f32 to vector<16x1xf32>
    %528 = arith.divf %526, %527 : vector<16x1xf32>
    %529 = vector.broadcast %521 : vector<16x1xf32> to vector<16x32xf32>
    %530 = arith.subf %517, %529 : vector<16x32xf32>
    %cst_285 = arith.constant 9.99999974E-6 : f32
    %531 = vector.broadcast %cst_285 : f32 to vector<16x1xf32>
    %532 = arith.addf %528, %531 : vector<16x1xf32>
    %533 = math.rsqrt %532 : vector<16x1xf32>
    %534 = vector.broadcast %533 : vector<16x1xf32> to vector<16x32xf32>
    %535 = arith.mulf %530, %534 : vector<16x32xf32>
    %536 = vector.shape_cast %535 : vector<16x32xf32> to vector<2x8x32xf32>
    %c0_286 = arith.constant 0 : index
    %c0_287 = arith.constant 0 : index
    %c0_288 = arith.constant 0 : index
    %537 = vector.load %arg14[%c0_286, %c0_287, %c0_288] : memref<2x8x32xf32, #tpu.memory_space<vmem>>, vector<2x8x32xf32>
    tpu.vector_store %arg14[%c0_286, %c0_287, %c0_288], %536 {strides = array<i32>} : memref<2x8x32xf32, #tpu.memory_space<vmem>>, vector<2x8x32xf32>,
    return
  }
}

</mosaic_0001>

<llo_original>
// kernel: decoder_forward.1
$region0: #{decoder_forward.1}
  #allocation0 [shape = 'u32[]', space=smem, size = 0x4, offset = 0x4, fixed_abs, tag = 'smem constant byte address 0x4 - core index']
  #allocation1 [shape = 'u32[72,128]{1,0:T(1,128)}', space=vmem, size = 0x9000, scoped, tag = 'internal scratch']
  #allocation2 [shape = 'f32[16,32]{1,0:T(8,128)}', space=vmem, size = 0x2000, scoped, tag = 'scratch operand']
  %s0 = inlined_call_operand.vmem [shape: f32[2,8,32], index: 0, kind: input, shape index: {}]
  %s1 = inlined_call_operand.vmem [shape: f32[2,8,32], index: 1, kind: input, shape index: {}]
  %s2 = inlined_call_operand.vmem [shape: f32[2,8,8], index: 2, kind: input, shape index: {}]
  %s3 = inlined_call_operand.vmem [shape: f32[2,8,8], index: 3, kind: input, shape index: {}]
  %s4 = inlined_call_operand.vmem [shape: f32[2,32,32], index: 4, kind: input, shape index: {}]
  %s5 = inlined_call_operand.vmem [shape: f32[2,32,32], index: 5, kind: input, shape index: {}]
  %s6 = inlined_call_operand.vmem [shape: f32[2,32,32], index: 6, kind: input, shape index: {}]
  %s7 = inlined_call_operand.vmem [shape: f32[2,32,32], index: 7, kind: input, shape index: {}]
  %s8 = inlined_call_operand.vmem [shape: f32[2,32,32], index: 8, kind: input, shape index: {}]
  %s9 = inlined_call_operand.vmem [shape: f32[2,32,32], index: 9, kind: input, shape index: {}]
  %s10 = inlined_call_operand.vmem [shape: f32[2,32,32], index: 10, kind: input, shape index: {}]
  %s11 = inlined_call_operand.vmem [shape: f32[2,32,32], index: 11, kind: input, shape index: {}]
  %s12 = inlined_call_operand.vmem [shape: f32[2,32,64], index: 12, kind: input, shape index: {}]
  %s13 = inlined_call_operand.vmem [shape: f32[2,64,32], index: 13, kind: input, shape index: {}]
  %s14 = inlined_call_operand.hbm [shape: f32[2,8,32], index: 14, kind: output, shape index: {0}]
  %s15 = inlined_call_operand.vmem [shape: f32[2,2,8,32], index: 15, kind: output, shape index: {1}]
  %s16 = inlined_call_operand.vmem [shape: f32[2,2,8,32], index: 16, kind: output, shape index: {2}]
  %17 = xla_tuple %s14, %s15, %s16
  %s18 = sld [smem:[#allocation0]]
  $region82: #{decoder_forward.1} parent=0
    _
  %s20 = ssub.s32 1, %s18
  %s21 = scalar_select 0, %s20, %s18
  $region1: #{decoder_forward.1} parent=0
    #allocation3 [shape = 'u8[8192]{0}', space=vmem, size = 0x2000, scoped, tag = 'output window, operand 0, single buffered']
    #allocation4 [shape = 's32[1]{0}', space=sflag, size = 0x4, scoped, tag = 'scoped memory for decoder_forward.1']
    %22 = vsyncpa [#allocation4], 0
    // Predicated region
    $region2: #{decoder_forward.1} parent=1 // pred_check
      _
    $region3: #{decoder_forward.1} parent=1 // pred_check_branch
      %24 = sbr.rel (0) target = $region5
    $region4: #{decoder_forward.1} parent=1 // pred_region
      _
    $region5: #{decoder_forward.1} parent=1 // pred_fallthru
      _
    // Predicated region
    $region6: #{decoder_forward.1} parent=1 // pred_check
      _
    $region7: #{decoder_forward.1} parent=1 // pred_check_branch
      %26 = sbr.rel (0) target = $region9
    $region8: #{decoder_forward.1} parent=1 // pred_region
      _
    $region9: #{decoder_forward.1} parent=1 // pred_fallthru
      _
    // Predicated region
    $region10: #{decoder_forward.1} parent=1 // pred_check
      _
    $region11: #{decoder_forward.1} parent=1 // pred_check_branch
      %28 = sbr.rel (0) target = $region13
    $region12: #{decoder_forward.1} parent=1 // pred_region
      _
    $region13: #{decoder_forward.1} parent=1 // pred_fallthru
      _
    // Predicated region
    $region14: #{decoder_forward.1} parent=1 // pred_check
      _
    $region15: #{decoder_forward.1} parent=1 // pred_check_branch
      %30 = sbr.rel (0) target = $region17
    $region16: #{decoder_forward.1} parent=1 // pred_region
      _
    $region17: #{decoder_forward.1} parent=1 // pred_fallthru
      _
    // Predicated region
    $region18: #{decoder_forward.1} parent=1 // pred_check
      _
    $region19: #{decoder_forward.1} parent=1 // pred_check_branch
      %32 = sbr.rel (0) target = $region21
    $region20: #{decoder_forward.1} parent=1 // pred_region
      _
    $region21: #{decoder_forward.1} parent=1 // pred_fallthru
      _
    // Predicated region
    $region22: #{decoder_forward.1} parent=1 // pred_check
      _
    $region23: #{decoder_forward.1} parent=1 // pred_check_branch
      %34 = sbr.rel (0) target = $region25
    $region24: #{decoder_forward.1} parent=1 // pred_region
      _
    $region25: #{decoder_forward.1} parent=1 // pred_fallthru
      _
    // Predicated region
    $region26: #{decoder_forward.1} parent=1 // pred_check
      _
    $region27: #{decoder_forward.1} parent=1 // pred_check_branch
      %36 = sbr.rel (0) target = $region29
    $region28: #{decoder_forward.1} parent=1 // pred_region
      _
    $region29: #{decoder_forward.1} parent=1 // pred_fallthru
      _
    // Predicated region
    $region30: #{decoder_forward.1} parent=1 // pred_check
      _
    $region31: #{decoder_forward.1} parent=1 // pred_check_branch
      %38 = sbr.rel (0) target = $region33
    $region32: #{decoder_forward.1} parent=1 // pred_region
      _
    $region33: #{decoder_forward.1} parent=1 // pred_fallthru
      _
    // Predicated region
    $region34: #{decoder_forward.1} parent=1 // pred_check
      _
    $region35: #{decoder_forward.1} parent=1 // pred_check_branch
      %40 = sbr.rel (0) target = $region37
    $region36: #{decoder_forward.1} parent=1 // pred_region
      _
    $region37: #{decoder_forward.1} parent=1 // pred_fallthru
      _
    // Predicated region
    $region38: #{decoder_forward.1} parent=1 // pred_check
      _
    $region39: #{decoder_forward.1} parent=1 // pred_check_branch
      %42 = sbr.rel (0) target = $region41
    $region40: #{decoder_forward.1} parent=1 // pred_region
      _
    $region41: #{decoder_forward.1} parent=1 // pred_fallthru
      _
    // Predicated region
    $region42: #{decoder_forward.1} parent=1 // pred_check
      _
    $region43: #{decoder_forward.1} parent=1 // pred_check_branch
      %44 = sbr.rel (0) target = $region45
    $region44: #{decoder_forward.1} parent=1 // pred_region
      _
    $region45: #{decoder_forward.1} parent=1 // pred_fallthru
      _
    // Predicated region
    $region46: #{decoder_forward.1} parent=1 // pred_check
      _
    $region47: #{decoder_forward.1} parent=1 // pred_check_branch
      %46 = sbr.rel (0) target = $region49
    $region48: #{decoder_forward.1} parent=1 // pred_region
      _
    $region49: #{decoder_forward.1} parent=1 // pred_fallthru
      _
    // Predicated region
    $region50: #{decoder_forward.1} parent=1 // pred_check
      _
    $region51: #{decoder_forward.1} parent=1 // pred_check_branch
      %48 = sbr.rel (0) target = $region53
    $region52: #{decoder_forward.1} parent=1 // pred_region
      _
    $region53: #{decoder_forward.1} parent=1 // pred_fallthru
      _
    // Predicated region
    $region54: #{decoder_forward.1} parent=1 // pred_check
      _
    $region55: #{decoder_forward.1} parent=1 // pred_check_branch
      %50 = sbr.rel (0) target = $region57
    $region56: #{decoder_forward.1} parent=1 // pred_region
      _
    $region57: #{decoder_forward.1} parent=1 // pred_fallthru
      _
    %v51 = vld [vmem:[%s0] sm:$0xff]
    %v52 = vld [vmem:[%s0 + $0x8] sm:$0xff]
    %v53 = vld [vmem:[%s1] sm:$0xff]
    %v54 = vld [vmem:[%s1 + $0x8] sm:$0xff]
    %v55 = vld [vmem:[%s2] sm:$0xff]
    %v56 = vld [vmem:[%s2 + $0x8] sm:$0xff]
    %v57 = vld [vmem:[%s3] sm:$0xff]
    %v58 = vld [vmem:[%s3 + $0x8] sm:$0xff]
    %v59 = vld [vmem:[%s4] sm:$0xff]
    %v60 = vld [vmem:[%s4 + $0x8] sm:$0xff]
    %v61 = vld [vmem:[%s4 + $0x10] sm:$0xff]
    %v62 = vld [vmem:[%s4 + $0x18] sm:$0xff]
    %v63 = vld [vmem:[%s5] sm:$0xff]
    %v64 = vld [vmem:[%s5 + $0x8] sm:$0xff]
    %v65 = vld [vmem:[%s5 + $0x10] sm:$0xff]
    %v66 = vld [vmem:[%s5 + $0x18] sm:$0xff]
    %v67 = vld [vmem:[%s6] sm:$0xff]
    %v68 = vld [vmem:[%s6 + $0x8] sm:$0xff]
    %v69 = vld [vmem:[%s6 + $0x10] sm:$0xff]
    %v70 = vld [vmem:[%s6 + $0x18] sm:$0xff]
    %v71 = vld [vmem:[%s7] sm:$0xff]
    %v72 = vld [vmem:[%s7 + $0x8] sm:$0xff]
    %v73 = vld [vmem:[%s7 + $0x10] sm:$0xff]
    %v74 = vld [vmem:[%s7 + $0x18] sm:$0xff]
    %vm75 = vcmask 261120
    %v77 = vsel %vm75, %v51, 0
    %v80 = vsel %vm75, %v52, 0
    %82 = vmatpush.msra.mxu0 0.0
    %83 = vmatpush.msra.mxu0 0.0
    %84 = vmatpush.msra.mxu0 0.0
    %85 = vmatpush.msra.mxu0 0.0
    %86 = vmatpush.msra.mxu0 0.0
    %87 = vmatpush.msra.mxu0 0.0
    %88 = vmatpush.msra.mxu0 0.0
    %89 = vmatpush.msra.mxu0 0.0
    %90 = vmatpush.msra.mxu0 0.0
    %91 = vmatpush.msra.mxu0 0.0
    %92 = vmatpush.msra.mxu0 0.0
    %93 = vmatpush.msra.mxu0 0.0
    %94 = vmatpush.msra.mxu0 %v62
    %95 = vmatpush.msra.mxu0 %v61
    %96 = vmatpush.msra.mxu0 %v60
    %97 = vmatpush.msra.mxu0 %v59
    %98 = vmatmul.f32.gmra.mxu0 %v77
    %v99 = vpop.f32.mrf.mxu0
    %v100 = vadd.f32 0.0, %v99
    %101 = vmatmul.f32.gmra.mxu0 %v80
    %v102 = vpop.f32.mrf.mxu0
    %v103 = vadd.f32 0.0, %v102
    %104 = vdwg.mxu0
    %105 = vmatpush.msra.mxu0 0.0
    %106 = vmatpush.msra.mxu0 0.0
    %107 = vmatpush.msra.mxu0 0.0
    %108 = vmatpush.msra.mxu0 0.0
    %109 = vmatpush.msra.mxu0 0.0
    %110 = vmatpush.msra.mxu0 0.0
    %111 = vmatpush.msra.mxu0 0.0
    %112 = vmatpush.msra.mxu0 0.0
    %113 = vmatpush.msra.mxu0 0.0
    %114 = vmatpush.msra.mxu0 0.0
    %115 = vmatpush.msra.mxu0 0.0
    %116 = vmatpush.msra.mxu0 0.0
    %117 = vmatpush.msra.mxu0 %v66
    %118 = vmatpush.msra.mxu0 %v65
    %119 = vmatpush.msra.mxu0 %v64
    %120 = vmatpush.msra.mxu0 %v63
    %121 = vmatmul.f32.gmra.mxu0 %v77
    %v122 = vpop.f32.mrf.mxu0
    %v123 = vadd.f32 0.0, %v122
    %124 = vmatmul.f32.gmra.mxu0 %v80
    %v125 = vpop.f32.mrf.mxu0
    %v126 = vadd.f32 0.0, %v125
    %127 = vdwg.mxu0
    %128 = vmatpush.msra.mxu0 0.0
    %129 = vmatpush.msra.mxu0 0.0
    %130 = vmatpush.msra.mxu0 0.0
    %131 = vmatpush.msra.mxu0 0.0
    %132 = vmatpush.msra.mxu0 0.0
    %133 = vmatpush.msra.mxu0 0.0
    %134 = vmatpush.msra.mxu0 0.0
    %135 = vmatpush.msra.mxu0 0.0
    %136 = vmatpush.msra.mxu0 0.0
    %137 = vmatpush.msra.mxu0 0.0
    %138 = vmatpush.msra.mxu0 0.0
    %139 = vmatpush.msra.mxu0 0.0
    %140 = vmatpush.msra.mxu0 %v70
    %141 = vmatpush.msra.mxu0 %v69
    %142 = vmatpush.msra.mxu0 %v68
    %143 = vmatpush.msra.mxu0 %v67
    %144 = vmatmul.f32.gmra.mxu0 %v77
    %v145 = vpop.f32.mrf.mxu0
    %v146 = vadd.f32 0.0, %v145
    %147 = vmatmul.f32.gmra.mxu0 %v80
    %v148 = vpop.f32.mrf.mxu0
    %v149 = vadd.f32 0.0, %v148
    %150 = vdwg.mxu0
    %vm151 = vcmask 64512
    %v153 = vsel %vm151, %v100, 0
    %v156 = vsel %vm151, %v123, 0
    %158 = vmatpush.xpose.msra.mxu0 0.0
    %159 = vmatpush.xpose.msra.mxu0 0.0
    %160 = vmatpush.xpose.msra.mxu0 0.0
    %161 = vmatpush.xpose.msra.mxu0 0.0
    %162 = vmatpush.xpose.msra.mxu0 0.0
    %163 = vmatpush.xpose.msra.mxu0 0.0
    %164 = vmatpush.xpose.msra.mxu0 0.0
    %165 = vmatpush.xpose.msra.mxu0 0.0
    %166 = vmatpush.xpose.msra.mxu0 0.0
    %167 = vmatpush.xpose.msra.mxu0 0.0
    %168 = vmatpush.xpose.msra.mxu0 0.0
    %169 = vmatpush.xpose.msra.mxu0 0.0
    %170 = vmatpush.xpose.msra.mxu0 0.0
    %171 = vmatpush.xpose.msra.mxu0 0.0
    %172 = vmatpush.xpose.msra.mxu0 0.0
    %173 = vmatpush.xpose.msra.mxu0 %v156
    %174 = vmatmul.f32.gmra.mxu0 %v153
    %v175 = vpop.f32.mrf.mxu0
    %v176 = vadd.f32 %v55, %v175
    %177 = vdwg.mxu0
    %v179 = vsel %vm151, %v103, 0
    %v182 = vsel %vm151, %v126, 0
    %184 = vmatpush.xpose.msra.mxu0 0.0
    %185 = vmatpush.xpose.msra.mxu0 0.0
    %186 = vmatpush.xpose.msra.mxu0 0.0
    %187 = vmatpush.xpose.msra.mxu0 0.0
    %188 = vmatpush.xpose.msra.mxu0 0.0
    %189 = vmatpush.xpose.msra.mxu0 0.0
    %190 = vmatpush.xpose.msra.mxu0 0.0
    %191 = vmatpush.xpose.msra.mxu0 0.0
    %192 = vmatpush.xpose.msra.mxu0 0.0
    %193 = vmatpush.xpose.msra.mxu0 0.0
    %194 = vmatpush.xpose.msra.mxu0 0.0
    %195 = vmatpush.xpose.msra.mxu0 0.0
    %196 = vmatpush.xpose.msra.mxu0 0.0
    %197 = vmatpush.xpose.msra.mxu0 0.0
    %198 = vmatpush.xpose.msra.mxu0 0.0
    %199 = vmatpush.xpose.msra.mxu0 %v182
    %200 = vmatmul.f32.gmra.mxu0 %v179
    %v201 = vpop.f32.mrf.mxu0
    %v202 = vadd.f32 %v56, %v201
    %203 = vdwg.mxu0
    %v204 = vsel %vm151, %v176, -inf
    %205 = vmax.xlane.f32.xlu0 %v204
    %v206 = vpop.xlane.xlu0 %205
    %v207 = vsel %vm151, %v202, -inf
    %208 = vmax.xlane.f32.xlu0 %v207
    %v209 = vpop.xlane.xlu0 %208
    %v210 = vsub.f32 %v176, %v206
    %v211 = vsub.f32 %v202, %v209
    %v212 = vmul.f32 %v210, 1.442695
    %v213 = vpow.pop %v212
    %v214 = vmul.f32 %v211, 1.442695
    %v215 = vpow.pop %v214
    %v216 = vsel %vm151, %v213, 0.0
    %217 = vadd.xlane.f32.xlu0 %v216
    %v218 = vpop.xlane.xlu0 %217
    %v219 = vsel %vm151, %v215, 0.0
    %220 = vadd.xlane.f32.xlu0 %v219
    %v221 = vpop.xlane.xlu0 %220
    %v222 = vrcp.pop %v218
    %v223 = vrcp.pop %v221
    %v224 = vmul.f32 %v213, %v222
    %v225 = vmul.f32 %v215, %v223
    %v227 = vsel %vm151, %v224, 0
    %229 = vmatpush.msra.mxu0 0.0
    %230 = vmatpush.msra.mxu0 0.0
    %231 = vmatpush.msra.mxu0 0.0
    %232 = vmatpush.msra.mxu0 0.0
    %233 = vmatpush.msra.mxu0 0.0
    %234 = vmatpush.msra.mxu0 0.0
    %235 = vmatpush.msra.mxu0 0.0
    %236 = vmatpush.msra.mxu0 0.0
    %237 = vmatpush.msra.mxu0 0.0
    %238 = vmatpush.msra.mxu0 0.0
    %239 = vmatpush.msra.mxu0 0.0
    %240 = vmatpush.msra.mxu0 0.0
    %241 = vmatpush.msra.mxu0 0.0
    %242 = vmatpush.msra.mxu0 0.0
    %243 = vmatpush.msra.mxu0 0.0
    %244 = vmatpush.msra.mxu0 %v146
    %245 = vmatmul.f32.gmra.mxu0 %v227
    %v246 = vpop.f32.mrf.mxu0
    %v247 = vadd.f32 0.0, %v246
    %248 = vdwg.mxu0
    %v250 = vsel %vm151, %v225, 0
    %252 = vmatpush.msra.mxu0 0.0
    %253 = vmatpush.msra.mxu0 0.0
    %254 = vmatpush.msra.mxu0 0.0
    %255 = vmatpush.msra.mxu0 0.0
    %256 = vmatpush.msra.mxu0 0.0
    %257 = vmatpush.msra.mxu0 0.0
    %258 = vmatpush.msra.mxu0 0.0
    %259 = vmatpush.msra.mxu0 0.0
    %260 = vmatpush.msra.mxu0 0.0
    %261 = vmatpush.msra.mxu0 0.0
    %262 = vmatpush.msra.mxu0 0.0
    %263 = vmatpush.msra.mxu0 0.0
    %264 = vmatpush.msra.mxu0 0.0
    %265 = vmatpush.msra.mxu0 0.0
    %266 = vmatpush.msra.mxu0 0.0
    %267 = vmatpush.msra.mxu0 %v149
    %268 = vmatmul.f32.gmra.mxu0 %v250
    %v269 = vpop.f32.mrf.mxu0
    %v270 = vadd.f32 0.0, %v269
    %271 = vdwg.mxu0
    %272 = vst.msk [vmem:[#allocation2] sm:$0xff] %vm151, %v247
    %273 = vst.msk [vmem:[#allocation2 + $0x8] sm:$0xff] %vm151, %v270
    %274 = vrot.lane.b32.xlu0 %v100, 120
    %v275 = vpop.permute.xlu0 %274
    %276 = vrot.lane.b32.xlu0 %v123, 120
    %v277 = vpop.permute.xlu0 %276
    %v278 = vsel %vm151, %v275, 0
    %v280 = vsel %vm151, %v277, 0
    %282 = vmatpush.xpose.msra.mxu0 0.0
    %283 = vmatpush.xpose.msra.mxu0 0.0
    %284 = vmatpush.xpose.msra.mxu0 0.0
    %285 = vmatpush.xpose.msra.mxu0 0.0
    %286 = vmatpush.xpose.msra.mxu0 0.0
    %287 = vmatpush.xpose.msra.mxu0 0.0
    %288 = vmatpush.xpose.msra.mxu0 0.0
    %289 = vmatpush.xpose.msra.mxu0 0.0
    %290 = vmatpush.xpose.msra.mxu0 0.0
    %291 = vmatpush.xpose.msra.mxu0 0.0
    %292 = vmatpush.xpose.msra.mxu0 0.0
    %293 = vmatpush.xpose.msra.mxu0 0.0
    %294 = vmatpush.xpose.msra.mxu0 0.0
    %295 = vmatpush.xpose.msra.mxu0 0.0
    %296 = vmatpush.xpose.msra.mxu0 0.0
    %297 = vmatpush.xpose.msra.mxu0 %v280
    %298 = vmatmul.f32.gmra.mxu0 %v278
    %v299 = vpop.f32.mrf.mxu0
    %v300 = vadd.f32 %v55, %v299
    %301 = vdwg.mxu0
    %302 = vrot.lane.b32.xlu0 %v103, 120
    %v303 = vpop.permute.xlu0 %302
    %304 = vrot.lane.b32.xlu0 %v126, 120
    %v305 = vpop.permute.xlu0 %304
    %v306 = vsel %vm151, %v303, 0
    %v308 = vsel %vm151, %v305, 0
    %310 = vmatpush.xpose.msra.mxu0 0.0
    %311 = vmatpush.xpose.msra.mxu0 0.0
    %312 = vmatpush.xpose.msra.mxu0 0.0
    %313 = vmatpush.xpose.msra.mxu0 0.0
    %314 = vmatpush.xpose.msra.mxu0 0.0
    %315 = vmatpush.xpose.msra.mxu0 0.0
    %316 = vmatpush.xpose.msra.mxu0 0.0
    %317 = vmatpush.xpose.msra.mxu0 0.0
    %318 = vmatpush.xpose.msra.mxu0 0.0
    %319 = vmatpush.xpose.msra.mxu0 0.0
    %320 = vmatpush.xpose.msra.mxu0 0.0
    %321 = vmatpush.xpose.msra.mxu0 0.0
    %322 = vmatpush.xpose.msra.mxu0 0.0
    %323 = vmatpush.xpose.msra.mxu0 0.0
    %324 = vmatpush.xpose.msra.mxu0 0.0
    %325 = vmatpush.xpose.msra.mxu0 %v308
    %326 = vmatmul.f32.gmra.mxu0 %v306
    %v327 = vpop.f32.mrf.mxu0
    %v328 = vadd.f32 %v56, %v327
    %329 = vdwg.mxu0
    %v330 = vsel %vm151, %v300, -inf
    %331 = vmax.xlane.f32.xlu0 %v330
    %v332 = vpop.xlane.xlu0 %331
    %v333 = vsel %vm151, %v328, -inf
    %334 = vmax.xlane.f32.xlu0 %v333
    %v335 = vpop.xlane.xlu0 %334
    %v336 = vsub.f32 %v300, %v332
    %v337 = vsub.f32 %v328, %v335
    %v338 = vmul.f32 %v336, 1.442695
    %v339 = vpow.pop %v338
    %v340 = vmul.f32 %v337, 1.442695
    %v341 = vpow.pop %v340
    %v342 = vsel %vm151, %v339, 0.0
    %343 = vadd.xlane.f32.xlu0 %v342
    %v344 = vpop.xlane.xlu0 %343
    %v345 = vsel %vm151, %v341, 0.0
    %346 = vadd.xlane.f32.xlu0 %v345
    %v347 = vpop.xlane.xlu0 %346
    %v348 = vrcp.pop %v344
    %v349 = vrcp.pop %v347
    %v350 = vmul.f32 %v339, %v348
    %v351 = vmul.f32 %v341, %v349
    %353 = vrot.lane.b32.xlu0 %v146, 120
    %v354 = vpop.permute.xlu0 %353
    %v357 = vsel %vm151, %v350, 0
    %359 = vmatpush.msra.mxu0 0.0
    %360 = vmatpush.msra.mxu0 0.0
    %361 = vmatpush.msra.mxu0 0.0
    %362 = vmatpush.msra.mxu0 0.0
    %363 = vmatpush.msra.mxu0 0.0
    %364 = vmatpush.msra.mxu0 0.0
    %365 = vmatpush.msra.mxu0 0.0
    %366 = vmatpush.msra.mxu0 0.0
    %367 = vmatpush.msra.mxu0 0.0
    %368 = vmatpush.msra.mxu0 0.0
    %369 = vmatpush.msra.mxu0 0.0
    %370 = vmatpush.msra.mxu0 0.0
    %371 = vmatpush.msra.mxu0 0.0
    %372 = vmatpush.msra.mxu0 0.0
    %373 = vmatpush.msra.mxu0 0.0
    %374 = vmatpush.msra.mxu0 %v354
    %375 = vmatmul.f32.gmra.mxu0 %v357
    %v376 = vpop.f32.mrf.mxu0
    %v377 = vadd.f32 0.0, %v376
    %378 = vdwg.mxu0
    %380 = vrot.lane.b32.xlu0 %v149, 120
    %v381 = vpop.permute.xlu0 %380
    %v384 = vsel %vm151, %v351, 0
    %386 = vmatpush.msra.mxu0 0.0
    %387 = vmatpush.msra.mxu0 0.0
    %388 = vmatpush.msra.mxu0 0.0
    %389 = vmatpush.msra.mxu0 0.0
    %390 = vmatpush.msra.mxu0 0.0
    %391 = vmatpush.msra.mxu0 0.0
    %392 = vmatpush.msra.mxu0 0.0
    %393 = vmatpush.msra.mxu0 0.0
    %394 = vmatpush.msra.mxu0 0.0
    %395 = vmatpush.msra.mxu0 0.0
    %396 = vmatpush.msra.mxu0 0.0
    %397 = vmatpush.msra.mxu0 0.0
    %398 = vmatpush.msra.mxu0 0.0
    %399 = vmatpush.msra.mxu0 0.0
    %400 = vmatpush.msra.mxu0 0.0
    %401 = vmatpush.msra.mxu0 %v381
    %402 = vmatmul.f32.gmra.mxu0 %v384
    %v403 = vpop.f32.mrf.mxu0
    %v404 = vadd.f32 0.0, %v403
    %405 = vdwg.mxu0
    %408 = vrot.lane.b32.xlu0 %v377, 8
    %v409 = vpop.permute.xlu0 %408
    %410 = vrot.lane.b32.xlu0 %v404, 8
    %v411 = vpop.permute.xlu0 %410
    %vm414 = vcmask 130112
    %415 = vst.msk [vmem:[#allocation2] sm:$0xff] %vm414, %v409
    %416 = vst.msk [vmem:[#allocation2 + $0x8] sm:$0xff] %vm414, %v411
    %417 = vrot.lane.b32.xlu0 %v100, 112
    %v418 = vpop.permute.xlu0 %417
    %419 = vrot.lane.b32.xlu0 %v123, 112
    %v420 = vpop.permute.xlu0 %419
    %v421 = vsel %vm151, %v418, 0
    %v423 = vsel %vm151, %v420, 0
    %425 = vmatpush.xpose.msra.mxu0 0.0
    %426 = vmatpush.xpose.msra.mxu0 0.0
    %427 = vmatpush.xpose.msra.mxu0 0.0
    %428 = vmatpush.xpose.msra.mxu0 0.0
    %429 = vmatpush.xpose.msra.mxu0 0.0
    %430 = vmatpush.xpose.msra.mxu0 0.0
    %431 = vmatpush.xpose.msra.mxu0 0.0
    %432 = vmatpush.xpose.msra.mxu0 0.0
    %433 = vmatpush.xpose.msra.mxu0 0.0
    %434 = vmatpush.xpose.msra.mxu0 0.0
    %435 = vmatpush.xpose.msra.mxu0 0.0
    %436 = vmatpush.xpose.msra.mxu0 0.0
    %437 = vmatpush.xpose.msra.mxu0 0.0
    %438 = vmatpush.xpose.msra.mxu0 0.0
    %439 = vmatpush.xpose.msra.mxu0 0.0
    %440 = vmatpush.xpose.msra.mxu0 %v423
    %441 = vmatmul.f32.gmra.mxu0 %v421
    %v442 = vpop.f32.mrf.mxu0
    %v443 = vadd.f32 %v55, %v442
    %444 = vdwg.mxu0
    %445 = vrot.lane.b32.xlu0 %v103, 112
    %v446 = vpop.permute.xlu0 %445
    %447 = vrot.lane.b32.xlu0 %v126, 112
    %v448 = vpop.permute.xlu0 %447
    %v449 = vsel %vm151, %v446, 0
    %v451 = vsel %vm151, %v448, 0
    %453 = vmatpush.xpose.msra.mxu0 0.0
    %454 = vmatpush.xpose.msra.mxu0 0.0
    %455 = vmatpush.xpose.msra.mxu0 0.0
    %456 = vmatpush.xpose.msra.mxu0 0.0
    %457 = vmatpush.xpose.msra.mxu0 0.0
    %458 = vmatpush.xpose.msra.mxu0 0.0
    %459 = vmatpush.xpose.msra.mxu0 0.0
    %460 = vmatpush.xpose.msra.mxu0 0.0
    %461 = vmatpush.xpose.msra.mxu0 0.0
    %462 = vmatpush.xpose.msra.mxu0 0.0
    %463 = vmatpush.xpose.msra.mxu0 0.0
    %464 = vmatpush.xpose.msra.mxu0 0.0
    %465 = vmatpush.xpose.msra.mxu0 0.0
    %466 = vmatpush.xpose.msra.mxu0 0.0
    %467 = vmatpush.xpose.msra.mxu0 0.0
    %468 = vmatpush.xpose.msra.mxu0 %v451
    %469 = vmatmul.f32.gmra.mxu0 %v449
    %v470 = vpop.f32.mrf.mxu0
    %v471 = vadd.f32 %v56, %v470
    %472 = vdwg.mxu0
    %v473 = vsel %vm151, %v443, -inf
    %474 = vmax.xlane.f32.xlu0 %v473
    %v475 = vpop.xlane.xlu0 %474
    %v476 = vsel %vm151, %v471, -inf
    %477 = vmax.xlane.f32.xlu0 %v476
    %v478 = vpop.xlane.xlu0 %477
    %v479 = vsub.f32 %v443, %v475
    %v480 = vsub.f32 %v471, %v478
    %v481 = vmul.f32 %v479, 1.442695
    %v482 = vpow.pop %v481
    %v483 = vmul.f32 %v480, 1.442695
    %v484 = vpow.pop %v483
    %v485 = vsel %vm151, %v482, 0.0
    %486 = vadd.xlane.f32.xlu0 %v485
    %v487 = vpop.xlane.xlu0 %486
    %v488 = vsel %vm151, %v484, 0.0
    %489 = vadd.xlane.f32.xlu0 %v488
    %v490 = vpop.xlane.xlu0 %489
    %v491 = vrcp.pop %v487
    %v492 = vrcp.pop %v490
    %v493 = vmul.f32 %v482, %v491
    %v494 = vmul.f32 %v484, %v492
    %495 = vrot.lane.b32.xlu0 %v146, 112
    %v496 = vpop.permute.xlu0 %495
    %v499 = vsel %vm151, %v493, 0
    %501 = vmatpush.msra.mxu0 0.0
    %502 = vmatpush.msra.mxu0 0.0
    %503 = vmatpush.msra.mxu0 0.0
    %504 = vmatpush.msra.mxu0 0.0
    %505 = vmatpush.msra.mxu0 0.0
    %506 = vmatpush.msra.mxu0 0.0
    %507 = vmatpush.msra.mxu0 0.0
    %508 = vmatpush.msra.mxu0 0.0
    %509 = vmatpush.msra.mxu0 0.0
    %510 = vmatpush.msra.mxu0 0.0
    %511 = vmatpush.msra.mxu0 0.0
    %512 = vmatpush.msra.mxu0 0.0
    %513 = vmatpush.msra.mxu0 0.0
    %514 = vmatpush.msra.mxu0 0.0
    %515 = vmatpush.msra.mxu0 0.0
    %516 = vmatpush.msra.mxu0 %v496
    %517 = vmatmul.f32.gmra.mxu0 %v499
    %v518 = vpop.f32.mrf.mxu0
    %v519 = vadd.f32 0.0, %v518
    %520 = vdwg.mxu0
    %521 = vrot.lane.b32.xlu0 %v149, 112
    %v522 = vpop.permute.xlu0 %521
    %v525 = vsel %vm151, %v494, 0
    %527 = vmatpush.msra.mxu0 0.0
    %528 = vmatpush.msra.mxu0 0.0
    %529 = vmatpush.msra.mxu0 0.0
    %530 = vmatpush.msra.mxu0 0.0
    %531 = vmatpush.msra.mxu0 0.0
    %532 = vmatpush.msra.mxu0 0.0
    %533 = vmatpush.msra.mxu0 0.0
    %534 = vmatpush.msra.mxu0 0.0
    %535 = vmatpush.msra.mxu0 0.0
    %536 = vmatpush.msra.mxu0 0.0
    %537 = vmatpush.msra.mxu0 0.0
    %538 = vmatpush.msra.mxu0 0.0
    %539 = vmatpush.msra.mxu0 0.0
    %540 = vmatpush.msra.mxu0 0.0
    %541 = vmatpush.msra.mxu0 0.0
    %542 = vmatpush.msra.mxu0 %v522
    %543 = vmatmul.f32.gmra.mxu0 %v525
    %v544 = vpop.f32.mrf.mxu0
    %v545 = vadd.f32 0.0, %v544
    %546 = vdwg.mxu0
    %549 = vrot.lane.b32.xlu0 %v519, 16
    %v550 = vpop.permute.xlu0 %549
    %551 = vrot.lane.b32.xlu0 %v545, 16
    %v552 = vpop.permute.xlu0 %551
    %vm555 = vcmask 195712
    %556 = vst.msk [vmem:[#allocation2] sm:$0xff] %vm555, %v550
    %557 = vst.msk [vmem:[#allocation2 + $0x8] sm:$0xff] %vm555, %v552
    %558 = vrot.lane.b32.xlu0 %v100, 104
    %v559 = vpop.permute.xlu0 %558
    %560 = vrot.lane.b32.xlu0 %v123, 104
    %v561 = vpop.permute.xlu0 %560
    %v562 = vsel %vm151, %v559, 0
    %v564 = vsel %vm151, %v561, 0
    %566 = vmatpush.xpose.msra.mxu0 0.0
    %567 = vmatpush.xpose.msra.mxu0 0.0
    %568 = vmatpush.xpose.msra.mxu0 0.0
    %569 = vmatpush.xpose.msra.mxu0 0.0
    %570 = vmatpush.xpose.msra.mxu0 0.0
    %571 = vmatpush.xpose.msra.mxu0 0.0
    %572 = vmatpush.xpose.msra.mxu0 0.0
    %573 = vmatpush.xpose.msra.mxu0 0.0
    %574 = vmatpush.xpose.msra.mxu0 0.0
    %575 = vmatpush.xpose.msra.mxu0 0.0
    %576 = vmatpush.xpose.msra.mxu0 0.0
    %577 = vmatpush.xpose.msra.mxu0 0.0
    %578 = vmatpush.xpose.msra.mxu0 0.0
    %579 = vmatpush.xpose.msra.mxu0 0.0
    %580 = vmatpush.xpose.msra.mxu0 0.0
    %581 = vmatpush.xpose.msra.mxu0 %v564
    %582 = vmatmul.f32.gmra.mxu0 %v562
    %v583 = vpop.f32.mrf.mxu0
    %v584 = vadd.f32 %v55, %v583
    %585 = vdwg.mxu0
    %586 = vrot.lane.b32.xlu0 %v103, 104
    %v587 = vpop.permute.xlu0 %586
    %588 = vrot.lane.b32.xlu0 %v126, 104
    %v589 = vpop.permute.xlu0 %588
    %v590 = vsel %vm151, %v587, 0
    %v592 = vsel %vm151, %v589, 0
    %594 = vmatpush.xpose.msra.mxu0 0.0
    %595 = vmatpush.xpose.msra.mxu0 0.0
    %596 = vmatpush.xpose.msra.mxu0 0.0
    %597 = vmatpush.xpose.msra.mxu0 0.0
    %598 = vmatpush.xpose.msra.mxu0 0.0
    %599 = vmatpush.xpose.msra.mxu0 0.0
    %600 = vmatpush.xpose.msra.mxu0 0.0
    %601 = vmatpush.xpose.msra.mxu0 0.0
    %602 = vmatpush.xpose.msra.mxu0 0.0
    %603 = vmatpush.xpose.msra.mxu0 0.0
    %604 = vmatpush.xpose.msra.mxu0 0.0
    %605 = vmatpush.xpose.msra.mxu0 0.0
    %606 = vmatpush.xpose.msra.mxu0 0.0
    %607 = vmatpush.xpose.msra.mxu0 0.0
    %608 = vmatpush.xpose.msra.mxu0 0.0
    %609 = vmatpush.xpose.msra.mxu0 %v592
    %610 = vmatmul.f32.gmra.mxu0 %v590
    %v611 = vpop.f32.mrf.mxu0
    %v612 = vadd.f32 %v56, %v611
    %613 = vdwg.mxu0
    %v614 = vsel %vm151, %v584, -inf
    %615 = vmax.xlane.f32.xlu0 %v614
    %v616 = vpop.xlane.xlu0 %615
    %v617 = vsel %vm151, %v612, -inf
    %618 = vmax.xlane.f32.xlu0 %v617
    %v619 = vpop.xlane.xlu0 %618
    %v620 = vsub.f32 %v584, %v616
    %v621 = vsub.f32 %v612, %v619
    %v622 = vmul.f32 %v620, 1.442695
    %v623 = vpow.pop %v622
    %v624 = vmul.f32 %v621, 1.442695
    %v625 = vpow.pop %v624
    %v626 = vsel %vm151, %v623, 0.0
    %627 = vadd.xlane.f32.xlu0 %v626
    %v628 = vpop.xlane.xlu0 %627
    %v629 = vsel %vm151, %v625, 0.0
    %630 = vadd.xlane.f32.xlu0 %v629
    %v631 = vpop.xlane.xlu0 %630
    %v632 = vrcp.pop %v628
    %v633 = vrcp.pop %v631
    %v634 = vmul.f32 %v623, %v632
    %v635 = vmul.f32 %v625, %v633
    %636 = vrot.lane.b32.xlu0 %v146, 104
    %v637 = vpop.permute.xlu0 %636
    %v640 = vsel %vm151, %v634, 0
    %642 = vmatpush.msra.mxu0 0.0
    %643 = vmatpush.msra.mxu0 0.0
    %644 = vmatpush.msra.mxu0 0.0
    %645 = vmatpush.msra.mxu0 0.0
    %646 = vmatpush.msra.mxu0 0.0
    %647 = vmatpush.msra.mxu0 0.0
    %648 = vmatpush.msra.mxu0 0.0
    %649 = vmatpush.msra.mxu0 0.0
    %650 = vmatpush.msra.mxu0 0.0
    %651 = vmatpush.msra.mxu0 0.0
    %652 = vmatpush.msra.mxu0 0.0
    %653 = vmatpush.msra.mxu0 0.0
    %654 = vmatpush.msra.mxu0 0.0
    %655 = vmatpush.msra.mxu0 0.0
    %656 = vmatpush.msra.mxu0 0.0
    %657 = vmatpush.msra.mxu0 %v637
    %658 = vmatmul.f32.gmra.mxu0 %v640
    %v659 = vpop.f32.mrf.mxu0
    %v660 = vadd.f32 0.0, %v659
    %661 = vdwg.mxu0
    %662 = vrot.lane.b32.xlu0 %v149, 104
    %v663 = vpop.permute.xlu0 %662
    %v666 = vsel %vm151, %v635, 0
    %668 = vmatpush.msra.mxu0 0.0
    %669 = vmatpush.msra.mxu0 0.0
    %670 = vmatpush.msra.mxu0 0.0
    %671 = vmatpush.msra.mxu0 0.0
    %672 = vmatpush.msra.mxu0 0.0
    %673 = vmatpush.msra.mxu0 0.0
    %674 = vmatpush.msra.mxu0 0.0
    %675 = vmatpush.msra.mxu0 0.0
    %676 = vmatpush.msra.mxu0 0.0
    %677 = vmatpush.msra.mxu0 0.0
    %678 = vmatpush.msra.mxu0 0.0
    %679 = vmatpush.msra.mxu0 0.0
    %680 = vmatpush.msra.mxu0 0.0
    %681 = vmatpush.msra.mxu0 0.0
    %682 = vmatpush.msra.mxu0 0.0
    %683 = vmatpush.msra.mxu0 %v663
    %684 = vmatmul.f32.gmra.mxu0 %v666
    %v685 = vpop.f32.mrf.mxu0
    %v686 = vadd.f32 0.0, %v685
    %687 = vdwg.mxu0
    %690 = vrot.lane.b32.xlu0 %v660, 24
    %v691 = vpop.permute.xlu0 %690
    %692 = vrot.lane.b32.xlu0 %v686, 24
    %v693 = vpop.permute.xlu0 %692
    %vm696 = vcmask 261312
    %697 = vst.msk [vmem:[#allocation2] sm:$0xff] %vm696, %v691
    %698 = vst.msk [vmem:[#allocation2 + $0x8] sm:$0xff] %vm696, %v693
    %v699 = vld [vmem:[#allocation2] sm:$0xff]
    %v700 = vld [vmem:[#allocation2 + $0x8] sm:$0xff]
    %v702 = vsel %vm75, %v699, 0
    %v705 = vsel %vm75, %v700, 0
    %707 = vmatpush.msra.mxu0 0.0
    %708 = vmatpush.msra.mxu0 0.0
    %709 = vmatpush.msra.mxu0 0.0
    %710 = vmatpush.msra.mxu0 0.0
    %711 = vmatpush.msra.mxu0 0.0
    %712 = vmatpush.msra.mxu0 0.0
    %713 = vmatpush.msra.mxu0 0.0
    %714 = vmatpush.msra.mxu0 0.0
    %715 = vmatpush.msra.mxu0 0.0
    %716 = vmatpush.msra.mxu0 0.0
    %717 = vmatpush.msra.mxu0 0.0
    %718 = vmatpush.msra.mxu0 0.0
    %719 = vmatpush.msra.mxu0 %v74
    %720 = vmatpush.msra.mxu0 %v73
    %721 = vmatpush.msra.mxu0 %v72
    %722 = vmatpush.msra.mxu0 %v71
    %723 = vmatmul.f32.gmra.mxu0 %v702
    %v724 = vpop.f32.mrf.mxu0
    %v725 = vadd.f32 %v51, %v724
    %726 = vmatmul.f32.gmra.mxu0 %v705
    %v727 = vpop.f32.mrf.mxu0
    %v728 = vadd.f32 %v52, %v727
    %729 = vdwg.mxu0
    %v730 = vsel %vm75, %v725, 0.0
    %731 = vadd.xlane.f32.xlu0 %v730
    %v732 = vpop.xlane.xlu0 %731
    %v733 = vsel %vm75, %v728, 0.0
    %734 = vadd.xlane.f32.xlu0 %v733
    %v735 = vpop.xlane.xlu0 %734
    %v736 = vrcp.pop 32.0
    %v737 = vmul.f32 32.0, %v736
    %v738 = vsub.f32 1.0, %v737
    %v739 = vmul.f32 %v736, %v738
    %v740 = vadd.f32 %v736, %v739
    %vm741 = vweird.f32 %v736
    %v742 = vsel %vm741, %v736, %v740
    %v743 = vmul.f32 %v732, %v742
    %v744 = vmul.f32 %v735, %v742
    %v745 = vsub.f32 %v725, %v743
    %v746 = vsub.f32 %v728, %v744
    %v747 = vmul.f32 %v745, %v745
    %v748 = vmul.f32 %v746, %v746
    %v749 = vsel %vm75, %v747, 0.0
    %750 = vadd.xlane.f32.xlu0 %v749
    %v751 = vpop.xlane.xlu0 %750
    %v752 = vsel %vm75, %v748, 0.0
    %753 = vadd.xlane.f32.xlu0 %v752
    %v754 = vpop.xlane.xlu0 %753
    %v755 = vmul.f32 %v751, %v742
    %v756 = vmul.f32 %v754, %v742
    %v757 = vadd.f32 %v755, 1e-05
    %v758 = vadd.f32 %v756, 1e-05
    %v759 = vrsqrt.pop %v757
    %v760 = vmul.f32 %v759, %v757
    %v761 = vmul.f32 %v760, %v759
    %v762 = vmul.f32 0.5, %v761
    %v763 = vsub.f32 1.5, %v762
    %v764 = vmul.f32 %v759, %v763
    %vm765 = vweird.f32 %v757
    %vm766 = vweird.f32 %v759
    %vm767 = vmor %vm765, %vm766
    %v768 = vsel %vm767, %v759, %v764
    %v769 = vrsqrt.pop %v758
    %v770 = vmul.f32 %v769, %v758
    %v771 = vmul.f32 %v770, %v769
    %v772 = vmul.f32 0.5, %v771
    %v773 = vsub.f32 1.5, %v772
    %v774 = vmul.f32 %v769, %v773
    %vm775 = vweird.f32 %v758
    %vm776 = vweird.f32 %v769
    %vm777 = vmor %vm775, %vm776
    %v778 = vsel %vm777, %v769, %v774
    %v779 = vmul.f32 %v745, %v768
    %v780 = vmul.f32 %v746, %v778
    %781 = vst.msk [vmem:[%s15] sm:$0xff] %vm151, %v224
    %782 = vst.msk [vmem:[%s15 + $0x8] sm:$0xff] %vm151, %v225
    %783 = vrot.lane.b32.xlu0 %v350, 8
    %v784 = vpop.permute.xlu0 %783
    %785 = vrot.lane.b32.xlu0 %v351, 8
    %v786 = vpop.permute.xlu0 %785
    %789 = vst.msk [vmem:[%s15] sm:$0xff] %vm414, %v784
    %790 = vst.msk [vmem:[%s15 + $0x8] sm:$0xff] %vm414, %v786
    %791 = vrot.lane.b32.xlu0 %v493, 16
    %v792 = vpop.permute.xlu0 %791
    %793 = vrot.lane.b32.xlu0 %v494, 16
    %v794 = vpop.permute.xlu0 %793
    %797 = vst.msk [vmem:[%s15] sm:$0xff] %vm555, %v792
    %798 = vst.msk [vmem:[%s15 + $0x8] sm:$0xff] %vm555, %v794
    %799 = vrot.lane.b32.xlu0 %v634, 24
    %v800 = vpop.permute.xlu0 %799
    %801 = vrot.lane.b32.xlu0 %v635, 24
    %v802 = vpop.permute.xlu0 %801
    %805 = vst.msk [vmem:[%s15] sm:$0xff] %vm696, %v800
    %806 = vst.msk [vmem:[%s15 + $0x8] sm:$0xff] %vm696, %v802
    %v807 = vld [vmem:[%s8] sm:$0xff]
    %v808 = vld [vmem:[%s8 + $0x8] sm:$0xff]
    %v809 = vld [vmem:[%s8 + $0x10] sm:$0xff]
    %v810 = vld [vmem:[%s8 + $0x18] sm:$0xff]
    %v811 = vld [vmem:[%s9] sm:$0xff]
    %v812 = vld [vmem:[%s9 + $0x8] sm:$0xff]
    %v813 = vld [vmem:[%s9 + $0x10] sm:$0xff]
    %v814 = vld [vmem:[%s9 + $0x18] sm:$0xff]
    %v815 = vld [vmem:[%s10] sm:$0xff]
    %v816 = vld [vmem:[%s10 + $0x8] sm:$0xff]
    %v817 = vld [vmem:[%s10 + $0x10] sm:$0xff]
    %v818 = vld [vmem:[%s10 + $0x18] sm:$0xff]
    %v819 = vld [vmem:[%s11] sm:$0xff]
    %v820 = vld [vmem:[%s11 + $0x8] sm:$0xff]
    %v821 = vld [vmem:[%s11 + $0x10] sm:$0xff]
    %v822 = vld [vmem:[%s11 + $0x18] sm:$0xff]
    %v824 = vsel %vm75, %v779, 0
    %v827 = vsel %vm75, %v780, 0
    %829 = vmatpush.msra.mxu0 0.0
    %830 = vmatpush.msra.mxu0 0.0
    %831 = vmatpush.msra.mxu0 0.0
    %832 = vmatpush.msra.mxu0 0.0
    %833 = vmatpush.msra.mxu0 0.0
    %834 = vmatpush.msra.mxu0 0.0
    %835 = vmatpush.msra.mxu0 0.0
    %836 = vmatpush.msra.mxu0 0.0
    %837 = vmatpush.msra.mxu0 0.0
    %838 = vmatpush.msra.mxu0 0.0
    %839 = vmatpush.msra.mxu0 0.0
    %840 = vmatpush.msra.mxu0 0.0
    %841 = vmatpush.msra.mxu0 %v810
    %842 = vmatpush.msra.mxu0 %v809
    %843 = vmatpush.msra.mxu0 %v808
    %844 = vmatpush.msra.mxu0 %v807
    %845 = vmatmul.f32.gmra.mxu0 %v824
    %v846 = vpop.f32.mrf.mxu0
    %v847 = vadd.f32 0.0, %v846
    %848 = vmatmul.f32.gmra.mxu0 %v827
    %v849 = vpop.f32.mrf.mxu0
    %v850 = vadd.f32 0.0, %v849
    %851 = vdwg.mxu0
    %v853 = vsel %vm75, %v53, 0
    %v856 = vsel %vm75, %v54, 0
    %858 = vmatpush.msra.mxu0 0.0
    %859 = vmatpush.msra.mxu0 0.0
    %860 = vmatpush.msra.mxu0 0.0
    %861 = vmatpush.msra.mxu0 0.0
    %862 = vmatpush.msra.mxu0 0.0
    %863 = vmatpush.msra.mxu0 0.0
    %864 = vmatpush.msra.mxu0 0.0
    %865 = vmatpush.msra.mxu0 0.0
    %866 = vmatpush.msra.mxu0 0.0
    %867 = vmatpush.msra.mxu0 0.0
    %868 = vmatpush.msra.mxu0 0.0
    %869 = vmatpush.msra.mxu0 0.0
    %870 = vmatpush.msra.mxu0 %v814
    %871 = vmatpush.msra.mxu0 %v813
    %872 = vmatpush.msra.mxu0 %v812
    %873 = vmatpush.msra.mxu0 %v811
    %874 = vmatmul.f32.gmra.mxu0 %v853
    %v875 = vpop.f32.mrf.mxu0
    %v876 = vadd.f32 0.0, %v875
    %877 = vmatmul.f32.gmra.mxu0 %v856
    %v878 = vpop.f32.mrf.mxu0
    %v879 = vadd.f32 0.0, %v878
    %880 = vdwg.mxu0
    %881 = vmatpush.msra.mxu0 0.0
    %882 = vmatpush.msra.mxu0 0.0
    %883 = vmatpush.msra.mxu0 0.0
    %884 = vmatpush.msra.mxu0 0.0
    %885 = vmatpush.msra.mxu0 0.0
    %886 = vmatpush.msra.mxu0 0.0
    %887 = vmatpush.msra.mxu0 0.0
    %888 = vmatpush.msra.mxu0 0.0
    %889 = vmatpush.msra.mxu0 0.0
    %890 = vmatpush.msra.mxu0 0.0
    %891 = vmatpush.msra.mxu0 0.0
    %892 = vmatpush.msra.mxu0 0.0
    %893 = vmatpush.msra.mxu0 %v818
    %894 = vmatpush.msra.mxu0 %v817
    %895 = vmatpush.msra.mxu0 %v816
    %896 = vmatpush.msra.mxu0 %v815
    %897 = vmatmul.f32.gmra.mxu0 %v853
    %v898 = vpop.f32.mrf.mxu0
    %v899 = vadd.f32 0.0, %v898
    %900 = vmatmul.f32.gmra.mxu0 %v856
    %v901 = vpop.f32.mrf.mxu0
    %v902 = vadd.f32 0.0, %v901
    %903 = vdwg.mxu0
    %v905 = vsel %vm151, %v847, 0
    %v908 = vsel %vm151, %v876, 0
    %910 = vmatpush.xpose.msra.mxu0 0.0
    %911 = vmatpush.xpose.msra.mxu0 0.0
    %912 = vmatpush.xpose.msra.mxu0 0.0
    %913 = vmatpush.xpose.msra.mxu0 0.0
    %914 = vmatpush.xpose.msra.mxu0 0.0
    %915 = vmatpush.xpose.msra.mxu0 0.0
    %916 = vmatpush.xpose.msra.mxu0 0.0
    %917 = vmatpush.xpose.msra.mxu0 0.0
    %918 = vmatpush.xpose.msra.mxu0 0.0
    %919 = vmatpush.xpose.msra.mxu0 0.0
    %920 = vmatpush.xpose.msra.mxu0 0.0
    %921 = vmatpush.xpose.msra.mxu0 0.0
    %922 = vmatpush.xpose.msra.mxu0 0.0
    %923 = vmatpush.xpose.msra.mxu0 0.0
    %924 = vmatpush.xpose.msra.mxu0 0.0
    %925 = vmatpush.xpose.msra.mxu0 %v908
    %926 = vmatmul.f32.gmra.mxu0 %v905
    %v927 = vpop.f32.mrf.mxu0
    %v928 = vadd.f32 %v57, %v927
    %929 = vdwg.mxu0
    %v931 = vsel %vm151, %v850, 0
    %v934 = vsel %vm151, %v879, 0
    %936 = vmatpush.xpose.msra.mxu0 0.0
    %937 = vmatpush.xpose.msra.mxu0 0.0
    %938 = vmatpush.xpose.msra.mxu0 0.0
    %939 = vmatpush.xpose.msra.mxu0 0.0
    %940 = vmatpush.xpose.msra.mxu0 0.0
    %941 = vmatpush.xpose.msra.mxu0 0.0
    %942 = vmatpush.xpose.msra.mxu0 0.0
    %943 = vmatpush.xpose.msra.mxu0 0.0
    %944 = vmatpush.xpose.msra.mxu0 0.0
    %945 = vmatpush.xpose.msra.mxu0 0.0
    %946 = vmatpush.xpose.msra.mxu0 0.0
    %947 = vmatpush.xpose.msra.mxu0 0.0
    %948 = vmatpush.xpose.msra.mxu0 0.0
    %949 = vmatpush.xpose.msra.mxu0 0.0
    %950 = vmatpush.xpose.msra.mxu0 0.0
    %951 = vmatpush.xpose.msra.mxu0 %v934
    %952 = vmatmul.f32.gmra.mxu0 %v931
    %v953 = vpop.f32.mrf.mxu0
    %v954 = vadd.f32 %v58, %v953
    %955 = vdwg.mxu0
    %v956 = vsel %vm151, %v928, -inf
    %957 = vmax.xlane.f32.xlu0 %v956
    %v958 = vpop.xlane.xlu0 %957
    %v959 = vsel %vm151, %v954, -inf
    %960 = vmax.xlane.f32.xlu0 %v959
    %v961 = vpop.xlane.xlu0 %960
    %v962 = vsub.f32 %v928, %v958
    %v963 = vsub.f32 %v954, %v961
    %v964 = vmul.f32 %v962, 1.442695
    %v965 = vpow.pop %v964
    %v966 = vmul.f32 %v963, 1.442695
    %v967 = vpow.pop %v966
    %v968 = vsel %vm151, %v965, 0.0
    %969 = vadd.xlane.f32.xlu0 %v968
    %v970 = vpop.xlane.xlu0 %969
    %v971 = vsel %vm151, %v967, 0.0
    %972 = vadd.xlane.f32.xlu0 %v971
    %v973 = vpop.xlane.xlu0 %972
    %v974 = vrcp.pop %v970
    %v975 = vrcp.pop %v973
    %v976 = vmul.f32 %v965, %v974
    %v977 = vmul.f32 %v967, %v975
    %v979 = vsel %vm151, %v976, 0
    %981 = vmatpush.msra.mxu0 0.0
    %982 = vmatpush.msra.mxu0 0.0
    %983 = vmatpush.msra.mxu0 0.0
    %984 = vmatpush.msra.mxu0 0.0
    %985 = vmatpush.msra.mxu0 0.0
    %986 = vmatpush.msra.mxu0 0.0
    %987 = vmatpush.msra.mxu0 0.0
    %988 = vmatpush.msra.mxu0 0.0
    %989 = vmatpush.msra.mxu0 0.0
    %990 = vmatpush.msra.mxu0 0.0
    %991 = vmatpush.msra.mxu0 0.0
    %992 = vmatpush.msra.mxu0 0.0
    %993 = vmatpush.msra.mxu0 0.0
    %994 = vmatpush.msra.mxu0 0.0
    %995 = vmatpush.msra.mxu0 0.0
    %996 = vmatpush.msra.mxu0 %v899
    %997 = vmatmul.f32.gmra.mxu0 %v979
    %v998 = vpop.f32.mrf.mxu0
    %v999 = vadd.f32 0.0, %v998
    %1000 = vdwg.mxu0
    %v1002 = vsel %vm151, %v977, 0
    %1004 = vmatpush.msra.mxu0 0.0
    %1005 = vmatpush.msra.mxu0 0.0
    %1006 = vmatpush.msra.mxu0 0.0
    %1007 = vmatpush.msra.mxu0 0.0
    %1008 = vmatpush.msra.mxu0 0.0
    %1009 = vmatpush.msra.mxu0 0.0
    %1010 = vmatpush.msra.mxu0 0.0
    %1011 = vmatpush.msra.mxu0 0.0
    %1012 = vmatpush.msra.mxu0 0.0
    %1013 = vmatpush.msra.mxu0 0.0
    %1014 = vmatpush.msra.mxu0 0.0
    %1015 = vmatpush.msra.mxu0 0.0
    %1016 = vmatpush.msra.mxu0 0.0
    %1017 = vmatpush.msra.mxu0 0.0
    %1018 = vmatpush.msra.mxu0 0.0
    %1019 = vmatpush.msra.mxu0 %v902
    %1020 = vmatmul.f32.gmra.mxu0 %v1002
    %v1021 = vpop.f32.mrf.mxu0
    %v1022 = vadd.f32 0.0, %v1021
    %1023 = vdwg.mxu0
    %1024 = vst.msk [vmem:[#allocation2] sm:$0xff] %vm151, %v999
    %1025 = vst.msk [vmem:[#allocation2 + $0x8] sm:$0xff] %vm151, %v1022
    %1026 = vrot.lane.b32.xlu0 %v847, 120
    %v1027 = vpop.permute.xlu0 %1026
    %1028 = vrot.lane.b32.xlu0 %v876, 120
    %v1029 = vpop.permute.xlu0 %1028
    %v1030 = vsel %vm151, %v1027, 0
    %v1032 = vsel %vm151, %v1029, 0
    %1034 = vmatpush.xpose.msra.mxu0 0.0
    %1035 = vmatpush.xpose.msra.mxu0 0.0
    %1036 = vmatpush.xpose.msra.mxu0 0.0
    %1037 = vmatpush.xpose.msra.mxu0 0.0
    %1038 = vmatpush.xpose.msra.mxu0 0.0
    %1039 = vmatpush.xpose.msra.mxu0 0.0
    %1040 = vmatpush.xpose.msra.mxu0 0.0
    %1041 = vmatpush.xpose.msra.mxu0 0.0
    %1042 = vmatpush.xpose.msra.mxu0 0.0
    %1043 = vmatpush.xpose.msra.mxu0 0.0
    %1044 = vmatpush.xpose.msra.mxu0 0.0
    %1045 = vmatpush.xpose.msra.mxu0 0.0
    %1046 = vmatpush.xpose.msra.mxu0 0.0
    %1047 = vmatpush.xpose.msra.mxu0 0.0
    %1048 = vmatpush.xpose.msra.mxu0 0.0
    %1049 = vmatpush.xpose.msra.mxu0 %v1032
    %1050 = vmatmul.f32.gmra.mxu0 %v1030
    %v1051 = vpop.f32.mrf.mxu0
    %v1052 = vadd.f32 %v57, %v1051
    %1053 = vdwg.mxu0
    %1054 = vrot.lane.b32.xlu0 %v850, 120
    %v1055 = vpop.permute.xlu0 %1054
    %1056 = vrot.lane.b32.xlu0 %v879, 120
    %v1057 = vpop.permute.xlu0 %1056
    %v1058 = vsel %vm151, %v1055, 0
    %v1060 = vsel %vm151, %v1057, 0
    %1062 = vmatpush.xpose.msra.mxu0 0.0
    %1063 = vmatpush.xpose.msra.mxu0 0.0
    %1064 = vmatpush.xpose.msra.mxu0 0.0
    %1065 = vmatpush.xpose.msra.mxu0 0.0
    %1066 = vmatpush.xpose.msra.mxu0 0.0
    %1067 = vmatpush.xpose.msra.mxu0 0.0
    %1068 = vmatpush.xpose.msra.mxu0 0.0
    %1069 = vmatpush.xpose.msra.mxu0 0.0
    %1070 = vmatpush.xpose.msra.mxu0 0.0
    %1071 = vmatpush.xpose.msra.mxu0 0.0
    %1072 = vmatpush.xpose.msra.mxu0 0.0
    %1073 = vmatpush.xpose.msra.mxu0 0.0
    %1074 = vmatpush.xpose.msra.mxu0 0.0
    %1075 = vmatpush.xpose.msra.mxu0 0.0
    %1076 = vmatpush.xpose.msra.mxu0 0.0
    %1077 = vmatpush.xpose.msra.mxu0 %v1060
    %1078 = vmatmul.f32.gmra.mxu0 %v1058
    %v1079 = vpop.f32.mrf.mxu0
    %v1080 = vadd.f32 %v58, %v1079
    %1081 = vdwg.mxu0
    %v1082 = vsel %vm151, %v1052, -inf
    %1083 = vmax.xlane.f32.xlu0 %v1082
    %v1084 = vpop.xlane.xlu0 %1083
    %v1085 = vsel %vm151, %v1080, -inf
    %1086 = vmax.xlane.f32.xlu0 %v1085
    %v1087 = vpop.xlane.xlu0 %1086
    %v1088 = vsub.f32 %v1052, %v1084
    %v1089 = vsub.f32 %v1080, %v1087
    %v1090 = vmul.f32 %v1088, 1.442695
    %v1091 = vpow.pop %v1090
    %v1092 = vmul.f32 %v1089, 1.442695
    %v1093 = vpow.pop %v1092
    %v1094 = vsel %vm151, %v1091, 0.0
    %1095 = vadd.xlane.f32.xlu0 %v1094
    %v1096 = vpop.xlane.xlu0 %1095
    %v1097 = vsel %vm151, %v1093, 0.0
    %1098 = vadd.xlane.f32.xlu0 %v1097
    %v1099 = vpop.xlane.xlu0 %1098
    %v1100 = vrcp.pop %v1096
    %v1101 = vrcp.pop %v1099
    %v1102 = vmul.f32 %v1091, %v1100
    %v1103 = vmul.f32 %v1093, %v1101
    %1105 = vrot.lane.b32.xlu0 %v899, 120
    %v1106 = vpop.permute.xlu0 %1105
    %v1109 = vsel %vm151, %v1102, 0
    %1111 = vmatpush.msra.mxu0 0.0
    %1112 = vmatpush.msra.mxu0 0.0
    %1113 = vmatpush.msra.mxu0 0.0
    %1114 = vmatpush.msra.mxu0 0.0
    %1115 = vmatpush.msra.mxu0 0.0
    %1116 = vmatpush.msra.mxu0 0.0
    %1117 = vmatpush.msra.mxu0 0.0
    %1118 = vmatpush.msra.mxu0 0.0
    %1119 = vmatpush.msra.mxu0 0.0
    %1120 = vmatpush.msra.mxu0 0.0
    %1121 = vmatpush.msra.mxu0 0.0
    %1122 = vmatpush.msra.mxu0 0.0
    %1123 = vmatpush.msra.mxu0 0.0
    %1124 = vmatpush.msra.mxu0 0.0
    %1125 = vmatpush.msra.mxu0 0.0
    %1126 = vmatpush.msra.mxu0 %v1106
    %1127 = vmatmul.f32.gmra.mxu0 %v1109
    %v1128 = vpop.f32.mrf.mxu0
    %v1129 = vadd.f32 0.0, %v1128
    %1130 = vdwg.mxu0
    %1132 = vrot.lane.b32.xlu0 %v902, 120
    %v1133 = vpop.permute.xlu0 %1132
    %v1136 = vsel %vm151, %v1103, 0
    %1138 = vmatpush.msra.mxu0 0.0
    %1139 = vmatpush.msra.mxu0 0.0
    %1140 = vmatpush.msra.mxu0 0.0
    %1141 = vmatpush.msra.mxu0 0.0
    %1142 = vmatpush.msra.mxu0 0.0
    %1143 = vmatpush.msra.mxu0 0.0
    %1144 = vmatpush.msra.mxu0 0.0
    %1145 = vmatpush.msra.mxu0 0.0
    %1146 = vmatpush.msra.mxu0 0.0
    %1147 = vmatpush.msra.mxu0 0.0
    %1148 = vmatpush.msra.mxu0 0.0
    %1149 = vmatpush.msra.mxu0 0.0
    %1150 = vmatpush.msra.mxu0 0.0
    %1151 = vmatpush.msra.mxu0 0.0
    %1152 = vmatpush.msra.mxu0 0.0
    %1153 = vmatpush.msra.mxu0 %v1133
    %1154 = vmatmul.f32.gmra.mxu0 %v1136
    %v1155 = vpop.f32.mrf.mxu0
    %v1156 = vadd.f32 0.0, %v1155
    %1157 = vdwg.mxu0
    %1160 = vrot.lane.b32.xlu0 %v1129, 8
    %v1161 = vpop.permute.xlu0 %1160
    %1162 = vrot.lane.b32.xlu0 %v1156, 8
    %v1163 = vpop.permute.xlu0 %1162
    %1166 = vst.msk [vmem:[#allocation2] sm:$0xff] %vm414, %v1161
    %1167 = vst.msk [vmem:[#allocation2 + $0x8] sm:$0xff] %vm414, %v1163
    %1168 = vrot.lane.b32.xlu0 %v847, 112
    %v1169 = vpop.permute.xlu0 %1168
    %1170 = vrot.lane.b32.xlu0 %v876, 112
    %v1171 = vpop.permute.xlu0 %1170
    %v1172 = vsel %vm151, %v1169, 0
    %v1174 = vsel %vm151, %v1171, 0
    %1176 = vmatpush.xpose.msra.mxu0 0.0
    %1177 = vmatpush.xpose.msra.mxu0 0.0
    %1178 = vmatpush.xpose.msra.mxu0 0.0
    %1179 = vmatpush.xpose.msra.mxu0 0.0
    %1180 = vmatpush.xpose.msra.mxu0 0.0
    %1181 = vmatpush.xpose.msra.mxu0 0.0
    %1182 = vmatpush.xpose.msra.mxu0 0.0
    %1183 = vmatpush.xpose.msra.mxu0 0.0
    %1184 = vmatpush.xpose.msra.mxu0 0.0
    %1185 = vmatpush.xpose.msra.mxu0 0.0
    %1186 = vmatpush.xpose.msra.mxu0 0.0
    %1187 = vmatpush.xpose.msra.mxu0 0.0
    %1188 = vmatpush.xpose.msra.mxu0 0.0
    %1189 = vmatpush.xpose.msra.mxu0 0.0
    %1190 = vmatpush.xpose.msra.mxu0 0.0
    %1191 = vmatpush.xpose.msra.mxu0 %v1174
    %1192 = vmatmul.f32.gmra.mxu0 %v1172
    %v1193 = vpop.f32.mrf.mxu0
    %v1194 = vadd.f32 %v57, %v1193
    %1195 = vdwg.mxu0
    %1196 = vrot.lane.b32.xlu0 %v850, 112
    %v1197 = vpop.permute.xlu0 %1196
    %1198 = vrot.lane.b32.xlu0 %v879, 112
    %v1199 = vpop.permute.xlu0 %1198
    %v1200 = vsel %vm151, %v1197, 0
    %v1202 = vsel %vm151, %v1199, 0
    %1204 = vmatpush.xpose.msra.mxu0 0.0
    %1205 = vmatpush.xpose.msra.mxu0 0.0
    %1206 = vmatpush.xpose.msra.mxu0 0.0
    %1207 = vmatpush.xpose.msra.mxu0 0.0
    %1208 = vmatpush.xpose.msra.mxu0 0.0
    %1209 = vmatpush.xpose.msra.mxu0 0.0
    %1210 = vmatpush.xpose.msra.mxu0 0.0
    %1211 = vmatpush.xpose.msra.mxu0 0.0
    %1212 = vmatpush.xpose.msra.mxu0 0.0
    %1213 = vmatpush.xpose.msra.mxu0 0.0
    %1214 = vmatpush.xpose.msra.mxu0 0.0
    %1215 = vmatpush.xpose.msra.mxu0 0.0
    %1216 = vmatpush.xpose.msra.mxu0 0.0
    %1217 = vmatpush.xpose.msra.mxu0 0.0
    %1218 = vmatpush.xpose.msra.mxu0 0.0
    %1219 = vmatpush.xpose.msra.mxu0 %v1202
    %1220 = vmatmul.f32.gmra.mxu0 %v1200
    %v1221 = vpop.f32.mrf.mxu0
    %v1222 = vadd.f32 %v58, %v1221
    %1223 = vdwg.mxu0
    %v1224 = vsel %vm151, %v1194, -inf
    %1225 = vmax.xlane.f32.xlu0 %v1224
    %v1226 = vpop.xlane.xlu0 %1225
    %v1227 = vsel %vm151, %v1222, -inf
    %1228 = vmax.xlane.f32.xlu0 %v1227
    %v1229 = vpop.xlane.xlu0 %1228
    %v1230 = vsub.f32 %v1194, %v1226
    %v1231 = vsub.f32 %v1222, %v1229
    %v1232 = vmul.f32 %v1230, 1.442695
    %v1233 = vpow.pop %v1232
    %v1234 = vmul.f32 %v1231, 1.442695
    %v1235 = vpow.pop %v1234
    %v1236 = vsel %vm151, %v1233, 0.0
    %1237 = vadd.xlane.f32.xlu0 %v1236
    %v1238 = vpop.xlane.xlu0 %1237
    %v1239 = vsel %vm151, %v1235, 0.0
    %1240 = vadd.xlane.f32.xlu0 %v1239
    %v1241 = vpop.xlane.xlu0 %1240
    %v1242 = vrcp.pop %v1238
    %v1243 = vrcp.pop %v1241
    %v1244 = vmul.f32 %v1233, %v1242
    %v1245 = vmul.f32 %v1235, %v1243
    %1246 = vrot.lane.b32.xlu0 %v899, 112
    %v1247 = vpop.permute.xlu0 %1246
    %v1250 = vsel %vm151, %v1244, 0
    %1252 = vmatpush.msra.mxu0 0.0
    %1253 = vmatpush.msra.mxu0 0.0
    %1254 = vmatpush.msra.mxu0 0.0
    %1255 = vmatpush.msra.mxu0 0.0
    %1256 = vmatpush.msra.mxu0 0.0
    %1257 = vmatpush.msra.mxu0 0.0
    %1258 = vmatpush.msra.mxu0 0.0
    %1259 = vmatpush.msra.mxu0 0.0
    %1260 = vmatpush.msra.mxu0 0.0
    %1261 = vmatpush.msra.mxu0 0.0
    %1262 = vmatpush.msra.mxu0 0.0
    %1263 = vmatpush.msra.mxu0 0.0
    %1264 = vmatpush.msra.mxu0 0.0
    %1265 = vmatpush.msra.mxu0 0.0
    %1266 = vmatpush.msra.mxu0 0.0
    %1267 = vmatpush.msra.mxu0 %v1247
    %1268 = vmatmul.f32.gmra.mxu0 %v1250
    %v1269 = vpop.f32.mrf.mxu0
    %v1270 = vadd.f32 0.0, %v1269
    %1271 = vdwg.mxu0
    %1272 = vrot.lane.b32.xlu0 %v902, 112
    %v1273 = vpop.permute.xlu0 %1272
    %v1276 = vsel %vm151, %v1245, 0
    %1278 = vmatpush.msra.mxu0 0.0
    %1279 = vmatpush.msra.mxu0 0.0
    %1280 = vmatpush.msra.mxu0 0.0
    %1281 = vmatpush.msra.mxu0 0.0
    %1282 = vmatpush.msra.mxu0 0.0
    %1283 = vmatpush.msra.mxu0 0.0
    %1284 = vmatpush.msra.mxu0 0.0
    %1285 = vmatpush.msra.mxu0 0.0
    %1286 = vmatpush.msra.mxu0 0.0
    %1287 = vmatpush.msra.mxu0 0.0
    %1288 = vmatpush.msra.mxu0 0.0
    %1289 = vmatpush.msra.mxu0 0.0
    %1290 = vmatpush.msra.mxu0 0.0
    %1291 = vmatpush.msra.mxu0 0.0
    %1292 = vmatpush.msra.mxu0 0.0
    %1293 = vmatpush.msra.mxu0 %v1273
    %1294 = vmatmul.f32.gmra.mxu0 %v1276
    %v1295 = vpop.f32.mrf.mxu0
    %v1296 = vadd.f32 0.0, %v1295
    %1297 = vdwg.mxu0
    %1300 = vrot.lane.b32.xlu0 %v1270, 16
    %v1301 = vpop.permute.xlu0 %1300
    %1302 = vrot.lane.b32.xlu0 %v1296, 16
    %v1303 = vpop.permute.xlu0 %1302
    %1306 = vst.msk [vmem:[#allocation2] sm:$0xff] %vm555, %v1301
    %1307 = vst.msk [vmem:[#allocation2 + $0x8] sm:$0xff] %vm555, %v1303
    %1308 = vrot.lane.b32.xlu0 %v847, 104
    %v1309 = vpop.permute.xlu0 %1308
    %1310 = vrot.lane.b32.xlu0 %v876, 104
    %v1311 = vpop.permute.xlu0 %1310
    %v1312 = vsel %vm151, %v1309, 0
    %v1314 = vsel %vm151, %v1311, 0
    %1316 = vmatpush.xpose.msra.mxu0 0.0
    %1317 = vmatpush.xpose.msra.mxu0 0.0
    %1318 = vmatpush.xpose.msra.mxu0 0.0
    %1319 = vmatpush.xpose.msra.mxu0 0.0
    %1320 = vmatpush.xpose.msra.mxu0 0.0
    %1321 = vmatpush.xpose.msra.mxu0 0.0
    %1322 = vmatpush.xpose.msra.mxu0 0.0
    %1323 = vmatpush.xpose.msra.mxu0 0.0
    %1324 = vmatpush.xpose.msra.mxu0 0.0
    %1325 = vmatpush.xpose.msra.mxu0 0.0
    %1326 = vmatpush.xpose.msra.mxu0 0.0
    %1327 = vmatpush.xpose.msra.mxu0 0.0
    %1328 = vmatpush.xpose.msra.mxu0 0.0
    %1329 = vmatpush.xpose.msra.mxu0 0.0
    %1330 = vmatpush.xpose.msra.mxu0 0.0
    %1331 = vmatpush.xpose.msra.mxu0 %v1314
    %1332 = vmatmul.f32.gmra.mxu0 %v1312
    %v1333 = vpop.f32.mrf.mxu0
    %v1334 = vadd.f32 %v57, %v1333
    %1335 = vdwg.mxu0
    %1336 = vrot.lane.b32.xlu0 %v850, 104
    %v1337 = vpop.permute.xlu0 %1336
    %1338 = vrot.lane.b32.xlu0 %v879, 104
    %v1339 = vpop.permute.xlu0 %1338
    %v1340 = vsel %vm151, %v1337, 0
    %v1342 = vsel %vm151, %v1339, 0
    %1344 = vmatpush.xpose.msra.mxu0 0.0
    %1345 = vmatpush.xpose.msra.mxu0 0.0
    %1346 = vmatpush.xpose.msra.mxu0 0.0
    %1347 = vmatpush.xpose.msra.mxu0 0.0
    %1348 = vmatpush.xpose.msra.mxu0 0.0
    %1349 = vmatpush.xpose.msra.mxu0 0.0
    %1350 = vmatpush.xpose.msra.mxu0 0.0
    %1351 = vmatpush.xpose.msra.mxu0 0.0
    %1352 = vmatpush.xpose.msra.mxu0 0.0
    %1353 = vmatpush.xpose.msra.mxu0 0.0
    %1354 = vmatpush.xpose.msra.mxu0 0.0
    %1355 = vmatpush.xpose.msra.mxu0 0.0
    %1356 = vmatpush.xpose.msra.mxu0 0.0
    %1357 = vmatpush.xpose.msra.mxu0 0.0
    %1358 = vmatpush.xpose.msra.mxu0 0.0
    %1359 = vmatpush.xpose.msra.mxu0 %v1342
    %1360 = vmatmul.f32.gmra.mxu0 %v1340
    %v1361 = vpop.f32.mrf.mxu0
    %v1362 = vadd.f32 %v58, %v1361
    %1363 = vdwg.mxu0
    %v1364 = vsel %vm151, %v1334, -inf
    %1365 = vmax.xlane.f32.xlu0 %v1364
    %v1366 = vpop.xlane.xlu0 %1365
    %v1367 = vsel %vm151, %v1362, -inf
    %1368 = vmax.xlane.f32.xlu0 %v1367
    %v1369 = vpop.xlane.xlu0 %1368
    %v1370 = vsub.f32 %v1334, %v1366
    %v1371 = vsub.f32 %v1362, %v1369
    %v1372 = vmul.f32 %v1370, 1.442695
    %v1373 = vpow.pop %v1372
    %v1374 = vmul.f32 %v1371, 1.442695
    %v1375 = vpow.pop %v1374
    %v1376 = vsel %vm151, %v1373, 0.0
    %1377 = vadd.xlane.f32.xlu0 %v1376
    %v1378 = vpop.xlane.xlu0 %1377
    %v1379 = vsel %vm151, %v1375, 0.0
    %1380 = vadd.xlane.f32.xlu0 %v1379
    %v1381 = vpop.xlane.xlu0 %1380
    %v1382 = vrcp.pop %v1378
    %v1383 = vrcp.pop %v1381
    %v1384 = vmul.f32 %v1373, %v1382
    %v1385 = vmul.f32 %v1375, %v1383
    %1386 = vrot.lane.b32.xlu0 %v899, 104
    %v1387 = vpop.permute.xlu0 %1386
    %v1390 = vsel %vm151, %v1384, 0
    %1392 = vmatpush.msra.mxu0 0.0
    %1393 = vmatpush.msra.mxu0 0.0
    %1394 = vmatpush.msra.mxu0 0.0
    %1395 = vmatpush.msra.mxu0 0.0
    %1396 = vmatpush.msra.mxu0 0.0
    %1397 = vmatpush.msra.mxu0 0.0
    %1398 = vmatpush.msra.mxu0 0.0
    %1399 = vmatpush.msra.mxu0 0.0
    %1400 = vmatpush.msra.mxu0 0.0
    %1401 = vmatpush.msra.mxu0 0.0
    %1402 = vmatpush.msra.mxu0 0.0
    %1403 = vmatpush.msra.mxu0 0.0
    %1404 = vmatpush.msra.mxu0 0.0
    %1405 = vmatpush.msra.mxu0 0.0
    %1406 = vmatpush.msra.mxu0 0.0
    %1407 = vmatpush.msra.mxu0 %v1387
    %1408 = vmatmul.f32.gmra.mxu0 %v1390
    %v1409 = vpop.f32.mrf.mxu0
    %v1410 = vadd.f32 0.0, %v1409
    %1411 = vdwg.mxu0
    %1412 = vrot.lane.b32.xlu0 %v902, 104
    %v1413 = vpop.permute.xlu0 %1412
    %v1416 = vsel %vm151, %v1385, 0
    %1418 = vmatpush.msra.mxu0 0.0
    %1419 = vmatpush.msra.mxu0 0.0
    %1420 = vmatpush.msra.mxu0 0.0
    %1421 = vmatpush.msra.mxu0 0.0
    %1422 = vmatpush.msra.mxu0 0.0
    %1423 = vmatpush.msra.mxu0 0.0
    %1424 = vmatpush.msra.mxu0 0.0
    %1425 = vmatpush.msra.mxu0 0.0
    %1426 = vmatpush.msra.mxu0 0.0
    %1427 = vmatpush.msra.mxu0 0.0
    %1428 = vmatpush.msra.mxu0 0.0
    %1429 = vmatpush.msra.mxu0 0.0
    %1430 = vmatpush.msra.mxu0 0.0
    %1431 = vmatpush.msra.mxu0 0.0
    %1432 = vmatpush.msra.mxu0 0.0
    %1433 = vmatpush.msra.mxu0 %v1413
    %1434 = vmatmul.f32.gmra.mxu0 %v1416
    %v1435 = vpop.f32.mrf.mxu0
    %v1436 = vadd.f32 0.0, %v1435
    %1437 = vdwg.mxu0
    %1440 = vrot.lane.b32.xlu0 %v1410, 24
    %v1441 = vpop.permute.xlu0 %1440
    %1442 = vrot.lane.b32.xlu0 %v1436, 24
    %v1443 = vpop.permute.xlu0 %1442
    %1446 = vst.msk [vmem:[#allocation2] sm:$0xff] %vm696, %v1441
    %1447 = vst.msk [vmem:[#allocation2 + $0x8] sm:$0xff] %vm696, %v1443
    %v1448 = vld [vmem:[#allocation2] sm:$0xff]
    %v1449 = vld [vmem:[#allocation2 + $0x8] sm:$0xff]
    %v1451 = vsel %vm75, %v1448, 0
    %v1454 = vsel %vm75, %v1449, 0
    %1456 = vmatpush.msra.mxu0 0.0
    %1457 = vmatpush.msra.mxu0 0.0
    %1458 = vmatpush.msra.mxu0 0.0
    %1459 = vmatpush.msra.mxu0 0.0
    %1460 = vmatpush.msra.mxu0 0.0
    %1461 = vmatpush.msra.mxu0 0.0
    %1462 = vmatpush.msra.mxu0 0.0
    %1463 = vmatpush.msra.mxu0 0.0
    %1464 = vmatpush.msra.mxu0 0.0
    %1465 = vmatpush.msra.mxu0 0.0
    %1466 = vmatpush.msra.mxu0 0.0
    %1467 = vmatpush.msra.mxu0 0.0
    %1468 = vmatpush.msra.mxu0 %v822
    %1469 = vmatpush.msra.mxu0 %v821
    %1470 = vmatpush.msra.mxu0 %v820
    %1471 = vmatpush.msra.mxu0 %v819
    %1472 = vmatmul.f32.gmra.mxu0 %v1451
    %v1473 = vpop.f32.mrf.mxu0
    %v1474 = vadd.f32 %v779, %v1473
    %1475 = vmatmul.f32.gmra.mxu0 %v1454
    %v1476 = vpop.f32.mrf.mxu0
    %v1477 = vadd.f32 %v780, %v1476
    %1478 = vdwg.mxu0
    %v1479 = vsel %vm75, %v1474, 0.0
    %1480 = vadd.xlane.f32.xlu0 %v1479
    %v1481 = vpop.xlane.xlu0 %1480
    %v1482 = vsel %vm75, %v1477, 0.0
    %1483 = vadd.xlane.f32.xlu0 %v1482
    %v1484 = vpop.xlane.xlu0 %1483
    %v1485 = vmul.f32 %v1481, %v742
    %v1486 = vmul.f32 %v1484, %v742
    %v1487 = vsub.f32 %v1474, %v1485
    %v1488 = vsub.f32 %v1477, %v1486
    %v1489 = vmul.f32 %v1487, %v1487
    %v1490 = vmul.f32 %v1488, %v1488
    %v1491 = vsel %vm75, %v1489, 0.0
    %1492 = vadd.xlane.f32.xlu0 %v1491
    %v1493 = vpop.xlane.xlu0 %1492
    %v1494 = vsel %vm75, %v1490, 0.0
    %1495 = vadd.xlane.f32.xlu0 %v1494
    %v1496 = vpop.xlane.xlu0 %1495
    %v1497 = vmul.f32 %v1493, %v742
    %v1498 = vmul.f32 %v1496, %v742
    %v1499 = vadd.f32 %v1497, 1e-05
    %v1500 = vadd.f32 %v1498, 1e-05
    %v1501 = vrsqrt.pop %v1499
    %v1502 = vmul.f32 %v1501, %v1499
    %v1503 = vmul.f32 %v1502, %v1501
    %v1504 = vmul.f32 0.5, %v1503
    %v1505 = vsub.f32 1.5, %v1504
    %v1506 = vmul.f32 %v1501, %v1505
    %vm1507 = vweird.f32 %v1499
    %vm1508 = vweird.f32 %v1501
    %vm1509 = vmor %vm1507, %vm1508
    %v1510 = vsel %vm1509, %v1501, %v1506
    %v1511 = vrsqrt.pop %v1500
    %v1512 = vmul.f32 %v1511, %v1500
    %v1513 = vmul.f32 %v1512, %v1511
    %v1514 = vmul.f32 0.5, %v1513
    %v1515 = vsub.f32 1.5, %v1514
    %v1516 = vmul.f32 %v1511, %v1515
    %vm1517 = vweird.f32 %v1500
    %vm1518 = vweird.f32 %v1511
    %vm1519 = vmor %vm1517, %vm1518
    %v1520 = vsel %vm1519, %v1511, %v1516
    %v1521 = vmul.f32 %v1487, %v1510
    %v1522 = vmul.f32 %v1488, %v1520
    %1523 = vst.msk [vmem:[%s16] sm:$0xff] %vm151, %v976
    %1524 = vst.msk [vmem:[%s16 + $0x8] sm:$0xff] %vm151, %v977
    %1525 = vrot.lane.b32.xlu0 %v1102, 8
    %v1526 = vpop.permute.xlu0 %1525
    %1527 = vrot.lane.b32.xlu0 %v1103, 8
    %v1528 = vpop.permute.xlu0 %1527
    %1531 = vst.msk [vmem:[%s16] sm:$0xff] %vm414, %v1526
    %1532 = vst.msk [vmem:[%s16 + $0x8] sm:$0xff] %vm414, %v1528
    %1533 = vrot.lane.b32.xlu0 %v1244, 16
    %v1534 = vpop.permute.xlu0 %1533
    %1535 = vrot.lane.b32.xlu0 %v1245, 16
    %v1536 = vpop.permute.xlu0 %1535
    %1539 = vst.msk [vmem:[%s16] sm:$0xff] %vm555, %v1534
    %1540 = vst.msk [vmem:[%s16 + $0x8] sm:$0xff] %vm555, %v1536
    %1541 = vrot.lane.b32.xlu0 %v1384, 24
    %v1542 = vpop.permute.xlu0 %1541
    %1543 = vrot.lane.b32.xlu0 %v1385, 24
    %v1544 = vpop.permute.xlu0 %1543
    %1547 = vst.msk [vmem:[%s16] sm:$0xff] %vm696, %v1542
    %1548 = vst.msk [vmem:[%s16 + $0x8] sm:$0xff] %vm696, %v1544
    %v1549 = vld [vmem:[%s12] sm:$0xff]
    %v1550 = vld [vmem:[%s12 + $0x8] sm:$0xff]
    %v1551 = vld [vmem:[%s12 + $0x10] sm:$0xff]
    %v1552 = vld [vmem:[%s12 + $0x18] sm:$0xff]
    %v1553 = vld [vmem:[%s13] sm:$0xff]
    %v1554 = vld [vmem:[%s13 + $0x8] sm:$0xff]
    %v1555 = vld [vmem:[%s13 + $0x10] sm:$0xff]
    %v1556 = vld [vmem:[%s13 + $0x18] sm:$0xff]
    %v1557 = vld [vmem:[%s13 + $0x20] sm:$0xff]
    %v1558 = vld [vmem:[%s13 + $0x28] sm:$0xff]
    %v1559 = vld [vmem:[%s13 + $0x30] sm:$0xff]
    %v1560 = vld [vmem:[%s13 + $0x38] sm:$0xff]
    %v1562 = vsel %vm75, %v1521, 0
    %v1565 = vsel %vm75, %v1522, 0
    %1567 = vmatpush.msra.mxu0 0.0
    %1568 = vmatpush.msra.mxu0 0.0
    %1569 = vmatpush.msra.mxu0 0.0
    %1570 = vmatpush.msra.mxu0 0.0
    %1571 = vmatpush.msra.mxu0 0.0
    %1572 = vmatpush.msra.mxu0 0.0
    %1573 = vmatpush.msra.mxu0 0.0
    %1574 = vmatpush.msra.mxu0 0.0
    %1575 = vmatpush.msra.mxu0 0.0
    %1576 = vmatpush.msra.mxu0 0.0
    %1577 = vmatpush.msra.mxu0 0.0
    %1578 = vmatpush.msra.mxu0 0.0
    %1579 = vmatpush.msra.mxu0 %v1552
    %1580 = vmatpush.msra.mxu0 %v1551
    %1581 = vmatpush.msra.mxu0 %v1550
    %1582 = vmatpush.msra.mxu0 %v1549
    %1583 = vmatmul.f32.gmra.mxu0 %v1562
    %v1584 = vpop.f32.mrf.mxu0
    %v1585 = vadd.f32 0.0, %v1584
    %1586 = vmatmul.f32.gmra.mxu0 %v1565
    %v1587 = vpop.f32.mrf.mxu0
    %v1588 = vadd.f32 0.0, %v1587
    %1589 = vdwg.mxu0
    %v1590 = vmax.f32 %v1585, 0.0
    %v1591 = vmax.f32 %v1588, 0.0
    %vm1592 = vcmask 523264
    %v1594 = vsel %vm1592, %v1590, 0
    %v1597 = vsel %vm1592, %v1591, 0
    %1599 = vmatpush.msra.mxu0 0.0
    %1600 = vmatpush.msra.mxu0 0.0
    %1601 = vmatpush.msra.mxu0 0.0
    %1602 = vmatpush.msra.mxu0 0.0
    %1603 = vmatpush.msra.mxu0 0.0
    %1604 = vmatpush.msra.mxu0 0.0
    %1605 = vmatpush.msra.mxu0 0.0
    %1606 = vmatpush.msra.mxu0 0.0
    %1607 = vmatpush.msra.mxu0 %v1560
    %1608 = vmatpush.msra.mxu0 %v1559
    %1609 = vmatpush.msra.mxu0 %v1558
    %1610 = vmatpush.msra.mxu0 %v1557
    %1611 = vmatpush.msra.mxu0 %v1556
    %1612 = vmatpush.msra.mxu0 %v1555
    %1613 = vmatpush.msra.mxu0 %v1554
    %1614 = vmatpush.msra.mxu0 %v1553
    %1615 = vmatmul.f32.gmra.mxu0 %v1594
    %v1616 = vpop.f32.mrf.mxu0
    %v1617 = vadd.f32 %v1521, %v1616
    %1618 = vmatmul.f32.gmra.mxu0 %v1597
    %v1619 = vpop.f32.mrf.mxu0
    %v1620 = vadd.f32 %v1522, %v1619
    %1621 = vdwg.mxu0
    %v1622 = vsel %vm75, %v1617, 0.0
    %1623 = vadd.xlane.f32.xlu0 %v1622
    %v1624 = vpop.xlane.xlu0 %1623
    %v1625 = vsel %vm75, %v1620, 0.0
    %1626 = vadd.xlane.f32.xlu0 %v1625
    %v1627 = vpop.xlane.xlu0 %1626
    %v1628 = vmul.f32 %v1624, %v742
    %v1629 = vmul.f32 %v1627, %v742
    %v1630 = vsub.f32 %v1617, %v1628
    %v1631 = vsub.f32 %v1620, %v1629
    %v1632 = vmul.f32 %v1630, %v1630
    %v1633 = vmul.f32 %v1631, %v1631
    %v1634 = vsel %vm75, %v1632, 0.0
    %1635 = vadd.xlane.f32.xlu0 %v1634
    %v1636 = vpop.xlane.xlu0 %1635
    %v1637 = vsel %vm75, %v1633, 0.0
    %1638 = vadd.xlane.f32.xlu0 %v1637
    %v1639 = vpop.xlane.xlu0 %1638
    %v1640 = vmul.f32 %v1636, %v742
    %v1641 = vmul.f32 %v1639, %v742
    %v1642 = vadd.f32 %v1640, 1e-05
    %v1643 = vadd.f32 %v1641, 1e-05
    %v1644 = vrsqrt.pop %v1642
    %v1645 = vmul.f32 %v1644, %v1642
    %v1646 = vmul.f32 %v1645, %v1644
    %v1647 = vmul.f32 0.5, %v1646
    %v1648 = vsub.f32 1.5, %v1647
    %v1649 = vmul.f32 %v1644, %v1648
    %vm1650 = vweird.f32 %v1642
    %vm1651 = vweird.f32 %v1644
    %vm1652 = vmor %vm1650, %vm1651
    %v1653 = vsel %vm1652, %v1644, %v1649
    %v1654 = vrsqrt.pop %v1643
    %v1655 = vmul.f32 %v1654, %v1643
    %v1656 = vmul.f32 %v1655, %v1654
    %v1657 = vmul.f32 0.5, %v1656
    %v1658 = vsub.f32 1.5, %v1657
    %v1659 = vmul.f32 %v1654, %v1658
    %vm1660 = vweird.f32 %v1643
    %vm1661 = vweird.f32 %v1654
    %vm1662 = vmor %vm1660, %vm1661
    %v1663 = vsel %vm1662, %v1654, %v1659
    %v1664 = vmul.f32 %v1630, %v1653
    %v1665 = vmul.f32 %v1631, %v1663
    %s1666 = scalar_lea.vmem %s4, 32
    %v1667 = vld [vmem:[%s1666] sm:$0xff]
    %v1668 = vld [vmem:[%s1666 + $0x8] sm:$0xff]
    %v1669 = vld [vmem:[%s1666 + $0x10] sm:$0xff]
    %v1670 = vld [vmem:[%s1666 + $0x18] sm:$0xff]
    %s1671 = scalar_lea.vmem %s5, 32
    %v1672 = vld [vmem:[%s1671] sm:$0xff]
    %v1673 = vld [vmem:[%s1671 + $0x8] sm:$0xff]
    %v1674 = vld [vmem:[%s1671 + $0x10] sm:$0xff]
    %v1675 = vld [vmem:[%s1671 + $0x18] sm:$0xff]
    %s1676 = scalar_lea.vmem %s6, 32
    %v1677 = vld [vmem:[%s1676] sm:$0xff]
    %v1678 = vld [vmem:[%s1676 + $0x8] sm:$0xff]
    %v1679 = vld [vmem:[%s1676 + $0x10] sm:$0xff]
    %v1680 = vld [vmem:[%s1676 + $0x18] sm:$0xff]
    %s1681 = scalar_lea.vmem %s7, 32
    %v1682 = vld [vmem:[%s1681] sm:$0xff]
    %v1683 = vld [vmem:[%s1681 + $0x8] sm:$0xff]
    %v1684 = vld [vmem:[%s1681 + $0x10] sm:$0xff]
    %v1685 = vld [vmem:[%s1681 + $0x18] sm:$0xff]
    %v1687 = vsel %vm75, %v1664, 0
    %v1690 = vsel %vm75, %v1665, 0
    %1692 = vmatpush.msra.mxu0 0.0
    %1693 = vmatpush.msra.mxu0 0.0
    %1694 = vmatpush.msra.mxu0 0.0
    %1695 = vmatpush.msra.mxu0 0.0
    %1696 = vmatpush.msra.mxu0 0.0
    %1697 = vmatpush.msra.mxu0 0.0
    %1698 = vmatpush.msra.mxu0 0.0
    %1699 = vmatpush.msra.mxu0 0.0
    %1700 = vmatpush.msra.mxu0 0.0
    %1701 = vmatpush.msra.mxu0 0.0
    %1702 = vmatpush.msra.mxu0 0.0
    %1703 = vmatpush.msra.mxu0 0.0
    %1704 = vmatpush.msra.mxu0 %v1670
    %1705 = vmatpush.msra.mxu0 %v1669
    %1706 = vmatpush.msra.mxu0 %v1668
    %1707 = vmatpush.msra.mxu0 %v1667
    %1708 = vmatmul.f32.gmra.mxu0 %v1687
    %v1709 = vpop.f32.mrf.mxu0
    %v1710 = vadd.f32 0.0, %v1709
    %1711 = vmatmul.f32.gmra.mxu0 %v1690
    %v1712 = vpop.f32.mrf.mxu0
    %v1713 = vadd.f32 0.0, %v1712
    %1714 = vdwg.mxu0
    %1715 = vmatpush.msra.mxu0 0.0
    %1716 = vmatpush.msra.mxu0 0.0
    %1717 = vmatpush.msra.mxu0 0.0
    %1718 = vmatpush.msra.mxu0 0.0
    %1719 = vmatpush.msra.mxu0 0.0
    %1720 = vmatpush.msra.mxu0 0.0
    %1721 = vmatpush.msra.mxu0 0.0
    %1722 = vmatpush.msra.mxu0 0.0
    %1723 = vmatpush.msra.mxu0 0.0
    %1724 = vmatpush.msra.mxu0 0.0
    %1725 = vmatpush.msra.mxu0 0.0
    %1726 = vmatpush.msra.mxu0 0.0
    %1727 = vmatpush.msra.mxu0 %v1675
    %1728 = vmatpush.msra.mxu0 %v1674
    %1729 = vmatpush.msra.mxu0 %v1673
    %1730 = vmatpush.msra.mxu0 %v1672
    %1731 = vmatmul.f32.gmra.mxu0 %v1687
    %v1732 = vpop.f32.mrf.mxu0
    %v1733 = vadd.f32 0.0, %v1732
    %1734 = vmatmul.f32.gmra.mxu0 %v1690
    %v1735 = vpop.f32.mrf.mxu0
    %v1736 = vadd.f32 0.0, %v1735
    %1737 = vdwg.mxu0
    %1738 = vmatpush.msra.mxu0 0.0
    %1739 = vmatpush.msra.mxu0 0.0
    %1740 = vmatpush.msra.mxu0 0.0
    %1741 = vmatpush.msra.mxu0 0.0
    %1742 = vmatpush.msra.mxu0 0.0
    %1743 = vmatpush.msra.mxu0 0.0
    %1744 = vmatpush.msra.mxu0 0.0
    %1745 = vmatpush.msra.mxu0 0.0
    %1746 = vmatpush.msra.mxu0 0.0
    %1747 = vmatpush.msra.mxu0 0.0
    %1748 = vmatpush.msra.mxu0 0.0
    %1749 = vmatpush.msra.mxu0 0.0
    %1750 = vmatpush.msra.mxu0 %v1680
    %1751 = vmatpush.msra.mxu0 %v1679
    %1752 = vmatpush.msra.mxu0 %v1678
    %1753 = vmatpush.msra.mxu0 %v1677
    %1754 = vmatmul.f32.gmra.mxu0 %v1687
    %v1755 = vpop.f32.mrf.mxu0
    %v1756 = vadd.f32 0.0, %v1755
    %1757 = vmatmul.f32.gmra.mxu0 %v1690
    %v1758 = vpop.f32.mrf.mxu0
    %v1759 = vadd.f32 0.0, %v1758
    %1760 = vdwg.mxu0
    %v1762 = vsel %vm151, %v1710, 0
    %v1765 = vsel %vm151, %v1733, 0
    %1767 = vmatpush.xpose.msra.mxu0 0.0
    %1768 = vmatpush.xpose.msra.mxu0 0.0
    %1769 = vmatpush.xpose.msra.mxu0 0.0
    %1770 = vmatpush.xpose.msra.mxu0 0.0
    %1771 = vmatpush.xpose.msra.mxu0 0.0
    %1772 = vmatpush.xpose.msra.mxu0 0.0
    %1773 = vmatpush.xpose.msra.mxu0 0.0
    %1774 = vmatpush.xpose.msra.mxu0 0.0
    %1775 = vmatpush.xpose.msra.mxu0 0.0
    %1776 = vmatpush.xpose.msra.mxu0 0.0
    %1777 = vmatpush.xpose.msra.mxu0 0.0
    %1778 = vmatpush.xpose.msra.mxu0 0.0
    %1779 = vmatpush.xpose.msra.mxu0 0.0
    %1780 = vmatpush.xpose.msra.mxu0 0.0
    %1781 = vmatpush.xpose.msra.mxu0 0.0
    %1782 = vmatpush.xpose.msra.mxu0 %v1765
    %1783 = vmatmul.f32.gmra.mxu0 %v1762
    %v1784 = vpop.f32.mrf.mxu0
    %v1785 = vadd.f32 %v55, %v1784
    %1786 = vdwg.mxu0
    %v1788 = vsel %vm151, %v1713, 0
    %v1791 = vsel %vm151, %v1736, 0
    %1793 = vmatpush.xpose.msra.mxu0 0.0
    %1794 = vmatpush.xpose.msra.mxu0 0.0
    %1795 = vmatpush.xpose.msra.mxu0 0.0
    %1796 = vmatpush.xpose.msra.mxu0 0.0
    %1797 = vmatpush.xpose.msra.mxu0 0.0
    %1798 = vmatpush.xpose.msra.mxu0 0.0
    %1799 = vmatpush.xpose.msra.mxu0 0.0
    %1800 = vmatpush.xpose.msra.mxu0 0.0
    %1801 = vmatpush.xpose.msra.mxu0 0.0
    %1802 = vmatpush.xpose.msra.mxu0 0.0
    %1803 = vmatpush.xpose.msra.mxu0 0.0
    %1804 = vmatpush.xpose.msra.mxu0 0.0
    %1805 = vmatpush.xpose.msra.mxu0 0.0
    %1806 = vmatpush.xpose.msra.mxu0 0.0
    %1807 = vmatpush.xpose.msra.mxu0 0.0
    %1808 = vmatpush.xpose.msra.mxu0 %v1791
    %1809 = vmatmul.f32.gmra.mxu0 %v1788
    %v1810 = vpop.f32.mrf.mxu0
    %v1811 = vadd.f32 %v56, %v1810
    %1812 = vdwg.mxu0
    %v1813 = vsel %vm151, %v1785, -inf
    %1814 = vmax.xlane.f32.xlu0 %v1813
    %v1815 = vpop.xlane.xlu0 %1814
    %v1816 = vsel %vm151, %v1811, -inf
    %1817 = vmax.xlane.f32.xlu0 %v1816
    %v1818 = vpop.xlane.xlu0 %1817
    %v1819 = vsub.f32 %v1785, %v1815
    %v1820 = vsub.f32 %v1811, %v1818
    %v1821 = vmul.f32 %v1819, 1.442695
    %v1822 = vpow.pop %v1821
    %v1823 = vmul.f32 %v1820, 1.442695
    %v1824 = vpow.pop %v1823
    %v1825 = vsel %vm151, %v1822, 0.0
    %1826 = vadd.xlane.f32.xlu0 %v1825
    %v1827 = vpop.xlane.xlu0 %1826
    %v1828 = vsel %vm151, %v1824, 0.0
    %1829 = vadd.xlane.f32.xlu0 %v1828
    %v1830 = vpop.xlane.xlu0 %1829
    %v1831 = vrcp.pop %v1827
    %v1832 = vrcp.pop %v1830
    %v1833 = vmul.f32 %v1822, %v1831
    %v1834 = vmul.f32 %v1824, %v1832
    %v1836 = vsel %vm151, %v1833, 0
    %1838 = vmatpush.msra.mxu0 0.0
    %1839 = vmatpush.msra.mxu0 0.0
    %1840 = vmatpush.msra.mxu0 0.0
    %1841 = vmatpush.msra.mxu0 0.0
    %1842 = vmatpush.msra.mxu0 0.0
    %1843 = vmatpush.msra.mxu0 0.0
    %1844 = vmatpush.msra.mxu0 0.0
    %1845 = vmatpush.msra.mxu0 0.0
    %1846 = vmatpush.msra.mxu0 0.0
    %1847 = vmatpush.msra.mxu0 0.0
    %1848 = vmatpush.msra.mxu0 0.0
    %1849 = vmatpush.msra.mxu0 0.0
    %1850 = vmatpush.msra.mxu0 0.0
    %1851 = vmatpush.msra.mxu0 0.0
    %1852 = vmatpush.msra.mxu0 0.0
    %1853 = vmatpush.msra.mxu0 %v1756
    %1854 = vmatmul.f32.gmra.mxu0 %v1836
    %v1855 = vpop.f32.mrf.mxu0
    %v1856 = vadd.f32 0.0, %v1855
    %1857 = vdwg.mxu0
    %v1859 = vsel %vm151, %v1834, 0
    %1861 = vmatpush.msra.mxu0 0.0
    %1862 = vmatpush.msra.mxu0 0.0
    %1863 = vmatpush.msra.mxu0 0.0
    %1864 = vmatpush.msra.mxu0 0.0
    %1865 = vmatpush.msra.mxu0 0.0
    %1866 = vmatpush.msra.mxu0 0.0
    %1867 = vmatpush.msra.mxu0 0.0
    %1868 = vmatpush.msra.mxu0 0.0
    %1869 = vmatpush.msra.mxu0 0.0
    %1870 = vmatpush.msra.mxu0 0.0
    %1871 = vmatpush.msra.mxu0 0.0
    %1872 = vmatpush.msra.mxu0 0.0
    %1873 = vmatpush.msra.mxu0 0.0
    %1874 = vmatpush.msra.mxu0 0.0
    %1875 = vmatpush.msra.mxu0 0.0
    %1876 = vmatpush.msra.mxu0 %v1759
    %1877 = vmatmul.f32.gmra.mxu0 %v1859
    %v1878 = vpop.f32.mrf.mxu0
    %v1879 = vadd.f32 0.0, %v1878
    %1880 = vdwg.mxu0
    %1881 = vst.msk [vmem:[#allocation2] sm:$0xff] %vm151, %v1856
    %1882 = vst.msk [vmem:[#allocation2 + $0x8] sm:$0xff] %vm151, %v1879
    %1883 = vrot.lane.b32.xlu0 %v1710, 120
    %v1884 = vpop.permute.xlu0 %1883
    %1885 = vrot.lane.b32.xlu0 %v1733, 120
    %v1886 = vpop.permute.xlu0 %1885
    %v1887 = vsel %vm151, %v1884, 0
    %v1889 = vsel %vm151, %v1886, 0
    %1891 = vmatpush.xpose.msra.mxu0 0.0
    %1892 = vmatpush.xpose.msra.mxu0 0.0
    %1893 = vmatpush.xpose.msra.mxu0 0.0
    %1894 = vmatpush.xpose.msra.mxu0 0.0
    %1895 = vmatpush.xpose.msra.mxu0 0.0
    %1896 = vmatpush.xpose.msra.mxu0 0.0
    %1897 = vmatpush.xpose.msra.mxu0 0.0
    %1898 = vmatpush.xpose.msra.mxu0 0.0
    %1899 = vmatpush.xpose.msra.mxu0 0.0
    %1900 = vmatpush.xpose.msra.mxu0 0.0
    %1901 = vmatpush.xpose.msra.mxu0 0.0
    %1902 = vmatpush.xpose.msra.mxu0 0.0
    %1903 = vmatpush.xpose.msra.mxu0 0.0
    %1904 = vmatpush.xpose.msra.mxu0 0.0
    %1905 = vmatpush.xpose.msra.mxu0 0.0
    %1906 = vmatpush.xpose.msra.mxu0 %v1889
    %1907 = vmatmul.f32.gmra.mxu0 %v1887
    %v1908 = vpop.f32.mrf.mxu0
    %v1909 = vadd.f32 %v55, %v1908
    %1910 = vdwg.mxu0
    %1911 = vrot.lane.b32.xlu0 %v1713, 120
    %v1912 = vpop.permute.xlu0 %1911
    %1913 = vrot.lane.b32.xlu0 %v1736, 120
    %v1914 = vpop.permute.xlu0 %1913
    %v1915 = vsel %vm151, %v1912, 0
    %v1917 = vsel %vm151, %v1914, 0
    %1919 = vmatpush.xpose.msra.mxu0 0.0
    %1920 = vmatpush.xpose.msra.mxu0 0.0
    %1921 = vmatpush.xpose.msra.mxu0 0.0
    %1922 = vmatpush.xpose.msra.mxu0 0.0
    %1923 = vmatpush.xpose.msra.mxu0 0.0
    %1924 = vmatpush.xpose.msra.mxu0 0.0
    %1925 = vmatpush.xpose.msra.mxu0 0.0
    %1926 = vmatpush.xpose.msra.mxu0 0.0
    %1927 = vmatpush.xpose.msra.mxu0 0.0
    %1928 = vmatpush.xpose.msra.mxu0 0.0
    %1929 = vmatpush.xpose.msra.mxu0 0.0
    %1930 = vmatpush.xpose.msra.mxu0 0.0
    %1931 = vmatpush.xpose.msra.mxu0 0.0
    %1932 = vmatpush.xpose.msra.mxu0 0.0
    %1933 = vmatpush.xpose.msra.mxu0 0.0
    %1934 = vmatpush.xpose.msra.mxu0 %v1917
    %1935 = vmatmul.f32.gmra.mxu0 %v1915
    %v1936 = vpop.f32.mrf.mxu0
    %v1937 = vadd.f32 %v56, %v1936
    %1938 = vdwg.mxu0
    %v1939 = vsel %vm151, %v1909, -inf
    %1940 = vmax.xlane.f32.xlu0 %v1939
    %v1941 = vpop.xlane.xlu0 %1940
    %v1942 = vsel %vm151, %v1937, -inf
    %1943 = vmax.xlane.f32.xlu0 %v1942
    %v1944 = vpop.xlane.xlu0 %1943
    %v1945 = vsub.f32 %v1909, %v1941
    %v1946 = vsub.f32 %v1937, %v1944
    %v1947 = vmul.f32 %v1945, 1.442695
    %v1948 = vpow.pop %v1947
    %v1949 = vmul.f32 %v1946, 1.442695
    %v1950 = vpow.pop %v1949
    %v1951 = vsel %vm151, %v1948, 0.0
    %1952 = vadd.xlane.f32.xlu0 %v1951
    %v1953 = vpop.xlane.xlu0 %1952
    %v1954 = vsel %vm151, %v1950, 0.0
    %1955 = vadd.xlane.f32.xlu0 %v1954
    %v1956 = vpop.xlane.xlu0 %1955
    %v1957 = vrcp.pop %v1953
    %v1958 = vrcp.pop %v1956
    %v1959 = vmul.f32 %v1948, %v1957
    %v1960 = vmul.f32 %v1950, %v1958
    %1962 = vrot.lane.b32.xlu0 %v1756, 120
    %v1963 = vpop.permute.xlu0 %1962
    %v1966 = vsel %vm151, %v1959, 0
    %1968 = vmatpush.msra.mxu0 0.0
    %1969 = vmatpush.msra.mxu0 0.0
    %1970 = vmatpush.msra.mxu0 0.0
    %1971 = vmatpush.msra.mxu0 0.0
    %1972 = vmatpush.msra.mxu0 0.0
    %1973 = vmatpush.msra.mxu0 0.0
    %1974 = vmatpush.msra.mxu0 0.0
    %1975 = vmatpush.msra.mxu0 0.0
    %1976 = vmatpush.msra.mxu0 0.0
    %1977 = vmatpush.msra.mxu0 0.0
    %1978 = vmatpush.msra.mxu0 0.0
    %1979 = vmatpush.msra.mxu0 0.0
    %1980 = vmatpush.msra.mxu0 0.0
    %1981 = vmatpush.msra.mxu0 0.0
    %1982 = vmatpush.msra.mxu0 0.0
    %1983 = vmatpush.msra.mxu0 %v1963
    %1984 = vmatmul.f32.gmra.mxu0 %v1966
    %v1985 = vpop.f32.mrf.mxu0
    %v1986 = vadd.f32 0.0, %v1985
    %1987 = vdwg.mxu0
    %1989 = vrot.lane.b32.xlu0 %v1759, 120
    %v1990 = vpop.permute.xlu0 %1989
    %v1993 = vsel %vm151, %v1960, 0
    %1995 = vmatpush.msra.mxu0 0.0
    %1996 = vmatpush.msra.mxu0 0.0
    %1997 = vmatpush.msra.mxu0 0.0
    %1998 = vmatpush.msra.mxu0 0.0
    %1999 = vmatpush.msra.mxu0 0.0
    %2000 = vmatpush.msra.mxu0 0.0
    %2001 = vmatpush.msra.mxu0 0.0
    %2002 = vmatpush.msra.mxu0 0.0
    %2003 = vmatpush.msra.mxu0 0.0
    %2004 = vmatpush.msra.mxu0 0.0
    %2005 = vmatpush.msra.mxu0 0.0
    %2006 = vmatpush.msra.mxu0 0.0
    %2007 = vmatpush.msra.mxu0 0.0
    %2008 = vmatpush.msra.mxu0 0.0
    %2009 = vmatpush.msra.mxu0 0.0
    %2010 = vmatpush.msra.mxu0 %v1990
    %2011 = vmatmul.f32.gmra.mxu0 %v1993
    %v2012 = vpop.f32.mrf.mxu0
    %v2013 = vadd.f32 0.0, %v2012
    %2014 = vdwg.mxu0
    %2017 = vrot.lane.b32.xlu0 %v1986, 8
    %v2018 = vpop.permute.xlu0 %2017
    %2019 = vrot.lane.b32.xlu0 %v2013, 8
    %v2020 = vpop.permute.xlu0 %2019
    %2023 = vst.msk [vmem:[#allocation2] sm:$0xff] %vm414, %v2018
    %2024 = vst.msk [vmem:[#allocation2 + $0x8] sm:$0xff] %vm414, %v2020
    %2025 = vrot.lane.b32.xlu0 %v1710, 112
    %v2026 = vpop.permute.xlu0 %2025
    %2027 = vrot.lane.b32.xlu0 %v1733, 112
    %v2028 = vpop.permute.xlu0 %2027
    %v2029 = vsel %vm151, %v2026, 0
    %v2031 = vsel %vm151, %v2028, 0
    %2033 = vmatpush.xpose.msra.mxu0 0.0
    %2034 = vmatpush.xpose.msra.mxu0 0.0
    %2035 = vmatpush.xpose.msra.mxu0 0.0
    %2036 = vmatpush.xpose.msra.mxu0 0.0
    %2037 = vmatpush.xpose.msra.mxu0 0.0
    %2038 = vmatpush.xpose.msra.mxu0 0.0
    %2039 = vmatpush.xpose.msra.mxu0 0.0
    %2040 = vmatpush.xpose.msra.mxu0 0.0
    %2041 = vmatpush.xpose.msra.mxu0 0.0
    %2042 = vmatpush.xpose.msra.mxu0 0.0
    %2043 = vmatpush.xpose.msra.mxu0 0.0
    %2044 = vmatpush.xpose.msra.mxu0 0.0
    %2045 = vmatpush.xpose.msra.mxu0 0.0
    %2046 = vmatpush.xpose.msra.mxu0 0.0
    %2047 = vmatpush.xpose.msra.mxu0 0.0
    %2048 = vmatpush.xpose.msra.mxu0 %v2031
    %2049 = vmatmul.f32.gmra.mxu0 %v2029
    %v2050 = vpop.f32.mrf.mxu0
    %v2051 = vadd.f32 %v55, %v2050
    %2052 = vdwg.mxu0
    %2053 = vrot.lane.b32.xlu0 %v1713, 112
    %v2054 = vpop.permute.xlu0 %2053
    %2055 = vrot.lane.b32.xlu0 %v1736, 112
    %v2056 = vpop.permute.xlu0 %2055
    %v2057 = vsel %vm151, %v2054, 0
    %v2059 = vsel %vm151, %v2056, 0
    %2061 = vmatpush.xpose.msra.mxu0 0.0
    %2062 = vmatpush.xpose.msra.mxu0 0.0
    %2063 = vmatpush.xpose.msra.mxu0 0.0
    %2064 = vmatpush.xpose.msra.mxu0 0.0
    %2065 = vmatpush.xpose.msra.mxu0 0.0
    %2066 = vmatpush.xpose.msra.mxu0 0.0
    %2067 = vmatpush.xpose.msra.mxu0 0.0
    %2068 = vmatpush.xpose.msra.mxu0 0.0
    %2069 = vmatpush.xpose.msra.mxu0 0.0
    %2070 = vmatpush.xpose.msra.mxu0 0.0
    %2071 = vmatpush.xpose.msra.mxu0 0.0
    %2072 = vmatpush.xpose.msra.mxu0 0.0
    %2073 = vmatpush.xpose.msra.mxu0 0.0
    %2074 = vmatpush.xpose.msra.mxu0 0.0
    %2075 = vmatpush.xpose.msra.mxu0 0.0
    %2076 = vmatpush.xpose.msra.mxu0 %v2059
    %2077 = vmatmul.f32.gmra.mxu0 %v2057
    %v2078 = vpop.f32.mrf.mxu0
    %v2079 = vadd.f32 %v56, %v2078
    %2080 = vdwg.mxu0
    %v2081 = vsel %vm151, %v2051, -inf
    %2082 = vmax.xlane.f32.xlu0 %v2081
    %v2083 = vpop.xlane.xlu0 %2082
    %v2084 = vsel %vm151, %v2079, -inf
    %2085 = vmax.xlane.f32.xlu0 %v2084
    %v2086 = vpop.xlane.xlu0 %2085
    %v2087 = vsub.f32 %v2051, %v2083
    %v2088 = vsub.f32 %v2079, %v2086
    %v2089 = vmul.f32 %v2087, 1.442695
    %v2090 = vpow.pop %v2089
    %v2091 = vmul.f32 %v2088, 1.442695
    %v2092 = vpow.pop %v2091
    %v2093 = vsel %vm151, %v2090, 0.0
    %2094 = vadd.xlane.f32.xlu0 %v2093
    %v2095 = vpop.xlane.xlu0 %2094
    %v2096 = vsel %vm151, %v2092, 0.0
    %2097 = vadd.xlane.f32.xlu0 %v2096
    %v2098 = vpop.xlane.xlu0 %2097
    %v2099 = vrcp.pop %v2095
    %v2100 = vrcp.pop %v2098
    %v2101 = vmul.f32 %v2090, %v2099
    %v2102 = vmul.f32 %v2092, %v2100
    %2103 = vrot.lane.b32.xlu0 %v1756, 112
    %v2104 = vpop.permute.xlu0 %2103
    %v2107 = vsel %vm151, %v2101, 0
    %2109 = vmatpush.msra.mxu0 0.0
    %2110 = vmatpush.msra.mxu0 0.0
    %2111 = vmatpush.msra.mxu0 0.0
    %2112 = vmatpush.msra.mxu0 0.0
    %2113 = vmatpush.msra.mxu0 0.0
    %2114 = vmatpush.msra.mxu0 0.0
    %2115 = vmatpush.msra.mxu0 0.0
    %2116 = vmatpush.msra.mxu0 0.0
    %2117 = vmatpush.msra.mxu0 0.0
    %2118 = vmatpush.msra.mxu0 0.0
    %2119 = vmatpush.msra.mxu0 0.0
    %2120 = vmatpush.msra.mxu0 0.0
    %2121 = vmatpush.msra.mxu0 0.0
    %2122 = vmatpush.msra.mxu0 0.0
    %2123 = vmatpush.msra.mxu0 0.0
    %2124 = vmatpush.msra.mxu0 %v2104
    %2125 = vmatmul.f32.gmra.mxu0 %v2107
    %v2126 = vpop.f32.mrf.mxu0
    %v2127 = vadd.f32 0.0, %v2126
    %2128 = vdwg.mxu0
    %2129 = vrot.lane.b32.xlu0 %v1759, 112
    %v2130 = vpop.permute.xlu0 %2129
    %v2133 = vsel %vm151, %v2102, 0
    %2135 = vmatpush.msra.mxu0 0.0
    %2136 = vmatpush.msra.mxu0 0.0
    %2137 = vmatpush.msra.mxu0 0.0
    %2138 = vmatpush.msra.mxu0 0.0
    %2139 = vmatpush.msra.mxu0 0.0
    %2140 = vmatpush.msra.mxu0 0.0
    %2141 = vmatpush.msra.mxu0 0.0
    %2142 = vmatpush.msra.mxu0 0.0
    %2143 = vmatpush.msra.mxu0 0.0
    %2144 = vmatpush.msra.mxu0 0.0
    %2145 = vmatpush.msra.mxu0 0.0
    %2146 = vmatpush.msra.mxu0 0.0
    %2147 = vmatpush.msra.mxu0 0.0
    %2148 = vmatpush.msra.mxu0 0.0
    %2149 = vmatpush.msra.mxu0 0.0
    %2150 = vmatpush.msra.mxu0 %v2130
    %2151 = vmatmul.f32.gmra.mxu0 %v2133
    %v2152 = vpop.f32.mrf.mxu0
    %v2153 = vadd.f32 0.0, %v2152
    %2154 = vdwg.mxu0
    %2157 = vrot.lane.b32.xlu0 %v2127, 16
    %v2158 = vpop.permute.xlu0 %2157
    %2159 = vrot.lane.b32.xlu0 %v2153, 16
    %v2160 = vpop.permute.xlu0 %2159
    %2163 = vst.msk [vmem:[#allocation2] sm:$0xff] %vm555, %v2158
    %2164 = vst.msk [vmem:[#allocation2 + $0x8] sm:$0xff] %vm555, %v2160
    %2165 = vrot.lane.b32.xlu0 %v1710, 104
    %v2166 = vpop.permute.xlu0 %2165
    %2167 = vrot.lane.b32.xlu0 %v1733, 104
    %v2168 = vpop.permute.xlu0 %2167
    %v2169 = vsel %vm151, %v2166, 0
    %v2171 = vsel %vm151, %v2168, 0
    %2173 = vmatpush.xpose.msra.mxu0 0.0
    %2174 = vmatpush.xpose.msra.mxu0 0.0
    %2175 = vmatpush.xpose.msra.mxu0 0.0
    %2176 = vmatpush.xpose.msra.mxu0 0.0
    %2177 = vmatpush.xpose.msra.mxu0 0.0
    %2178 = vmatpush.xpose.msra.mxu0 0.0
    %2179 = vmatpush.xpose.msra.mxu0 0.0
    %2180 = vmatpush.xpose.msra.mxu0 0.0
    %2181 = vmatpush.xpose.msra.mxu0 0.0
    %2182 = vmatpush.xpose.msra.mxu0 0.0
    %2183 = vmatpush.xpose.msra.mxu0 0.0
    %2184 = vmatpush.xpose.msra.mxu0 0.0
    %2185 = vmatpush.xpose.msra.mxu0 0.0
    %2186 = vmatpush.xpose.msra.mxu0 0.0
    %2187 = vmatpush.xpose.msra.mxu0 0.0
    %2188 = vmatpush.xpose.msra.mxu0 %v2171
    %2189 = vmatmul.f32.gmra.mxu0 %v2169
    %v2190 = vpop.f32.mrf.mxu0
    %v2191 = vadd.f32 %v55, %v2190
    %2192 = vdwg.mxu0
    %2193 = vrot.lane.b32.xlu0 %v1713, 104
    %v2194 = vpop.permute.xlu0 %2193
    %2195 = vrot.lane.b32.xlu0 %v1736, 104
    %v2196 = vpop.permute.xlu0 %2195
    %v2197 = vsel %vm151, %v2194, 0
    %v2199 = vsel %vm151, %v2196, 0
    %2201 = vmatpush.xpose.msra.mxu0 0.0
    %2202 = vmatpush.xpose.msra.mxu0 0.0
    %2203 = vmatpush.xpose.msra.mxu0 0.0
    %2204 = vmatpush.xpose.msra.mxu0 0.0
    %2205 = vmatpush.xpose.msra.mxu0 0.0
    %2206 = vmatpush.xpose.msra.mxu0 0.0
    %2207 = vmatpush.xpose.msra.mxu0 0.0
    %2208 = vmatpush.xpose.msra.mxu0 0.0
    %2209 = vmatpush.xpose.msra.mxu0 0.0
    %2210 = vmatpush.xpose.msra.mxu0 0.0
    %2211 = vmatpush.xpose.msra.mxu0 0.0
    %2212 = vmatpush.xpose.msra.mxu0 0.0
    %2213 = vmatpush.xpose.msra.mxu0 0.0
    %2214 = vmatpush.xpose.msra.mxu0 0.0
    %2215 = vmatpush.xpose.msra.mxu0 0.0
    %2216 = vmatpush.xpose.msra.mxu0 %v2199
    %2217 = vmatmul.f32.gmra.mxu0 %v2197
    %v2218 = vpop.f32.mrf.mxu0
    %v2219 = vadd.f32 %v56, %v2218
    %2220 = vdwg.mxu0
    %v2221 = vsel %vm151, %v2191, -inf
    %2222 = vmax.xlane.f32.xlu0 %v2221
    %v2223 = vpop.xlane.xlu0 %2222
    %v2224 = vsel %vm151, %v2219, -inf
    %2225 = vmax.xlane.f32.xlu0 %v2224
    %v2226 = vpop.xlane.xlu0 %2225
    %v2227 = vsub.f32 %v2191, %v2223
    %v2228 = vsub.f32 %v2219, %v2226
    %v2229 = vmul.f32 %v2227, 1.442695
    %v2230 = vpow.pop %v2229
    %v2231 = vmul.f32 %v2228, 1.442695
    %v2232 = vpow.pop %v2231
    %v2233 = vsel %vm151, %v2230, 0.0
    %2234 = vadd.xlane.f32.xlu0 %v2233
    %v2235 = vpop.xlane.xlu0 %2234
    %v2236 = vsel %vm151, %v2232, 0.0
    %2237 = vadd.xlane.f32.xlu0 %v2236
    %v2238 = vpop.xlane.xlu0 %2237
    %v2239 = vrcp.pop %v2235
    %v2240 = vrcp.pop %v2238
    %v2241 = vmul.f32 %v2230, %v2239
    %v2242 = vmul.f32 %v2232, %v2240
    %2243 = vrot.lane.b32.xlu0 %v1756, 104
    %v2244 = vpop.permute.xlu0 %2243
    %v2247 = vsel %vm151, %v2241, 0
    %2249 = vmatpush.msra.mxu0 0.0
    %2250 = vmatpush.msra.mxu0 0.0
    %2251 = vmatpush.msra.mxu0 0.0
    %2252 = vmatpush.msra.mxu0 0.0
    %2253 = vmatpush.msra.mxu0 0.0
    %2254 = vmatpush.msra.mxu0 0.0
    %2255 = vmatpush.msra.mxu0 0.0
    %2256 = vmatpush.msra.mxu0 0.0
    %2257 = vmatpush.msra.mxu0 0.0
    %2258 = vmatpush.msra.mxu0 0.0
    %2259 = vmatpush.msra.mxu0 0.0
    %2260 = vmatpush.msra.mxu0 0.0
    %2261 = vmatpush.msra.mxu0 0.0
    %2262 = vmatpush.msra.mxu0 0.0
    %2263 = vmatpush.msra.mxu0 0.0
    %2264 = vmatpush.msra.mxu0 %v2244
    %2265 = vmatmul.f32.gmra.mxu0 %v2247
    %v2266 = vpop.f32.mrf.mxu0
    %v2267 = vadd.f32 0.0, %v2266
    %2268 = vdwg.mxu0
    %2269 = vrot.lane.b32.xlu0 %v1759, 104
    %v2270 = vpop.permute.xlu0 %2269
    %v2273 = vsel %vm151, %v2242, 0
    %2275 = vmatpush.msra.mxu0 0.0
    %2276 = vmatpush.msra.mxu0 0.0
    %2277 = vmatpush.msra.mxu0 0.0
    %2278 = vmatpush.msra.mxu0 0.0
    %2279 = vmatpush.msra.mxu0 0.0
    %2280 = vmatpush.msra.mxu0 0.0
    %2281 = vmatpush.msra.mxu0 0.0
    %2282 = vmatpush.msra.mxu0 0.0
    %2283 = vmatpush.msra.mxu0 0.0
    %2284 = vmatpush.msra.mxu0 0.0
    %2285 = vmatpush.msra.mxu0 0.0
    %2286 = vmatpush.msra.mxu0 0.0
    %2287 = vmatpush.msra.mxu0 0.0
    %2288 = vmatpush.msra.mxu0 0.0
    %2289 = vmatpush.msra.mxu0 0.0
    %2290 = vmatpush.msra.mxu0 %v2270
    %2291 = vmatmul.f32.gmra.mxu0 %v2273
    %v2292 = vpop.f32.mrf.mxu0
    %v2293 = vadd.f32 0.0, %v2292
    %2294 = vdwg.mxu0
    %2297 = vrot.lane.b32.xlu0 %v2267, 24
    %v2298 = vpop.permute.xlu0 %2297
    %2299 = vrot.lane.b32.xlu0 %v2293, 24
    %v2300 = vpop.permute.xlu0 %2299
    %2303 = vst.msk [vmem:[#allocation2] sm:$0xff] %vm696, %v2298
    %2304 = vst.msk [vmem:[#allocation2 + $0x8] sm:$0xff] %vm696, %v2300
    %v2305 = vld [vmem:[#allocation2] sm:$0xff]
    %v2306 = vld [vmem:[#allocation2 + $0x8] sm:$0xff]
    %v2308 = vsel %vm75, %v2305, 0
    %v2311 = vsel %vm75, %v2306, 0
    %2313 = vmatpush.msra.mxu0 0.0
    %2314 = vmatpush.msra.mxu0 0.0
    %2315 = vmatpush.msra.mxu0 0.0
    %2316 = vmatpush.msra.mxu0 0.0
    %2317 = vmatpush.msra.mxu0 0.0
    %2318 = vmatpush.msra.mxu0 0.0
    %2319 = vmatpush.msra.mxu0 0.0
    %2320 = vmatpush.msra.mxu0 0.0
    %2321 = vmatpush.msra.mxu0 0.0
    %2322 = vmatpush.msra.mxu0 0.0
    %2323 = vmatpush.msra.mxu0 0.0
    %2324 = vmatpush.msra.mxu0 0.0
    %2325 = vmatpush.msra.mxu0 %v1685
    %2326 = vmatpush.msra.mxu0 %v1684
    %2327 = vmatpush.msra.mxu0 %v1683
    %2328 = vmatpush.msra.mxu0 %v1682
    %2329 = vmatmul.f32.gmra.mxu0 %v2308
    %v2330 = vpop.f32.mrf.mxu0
    %v2331 = vadd.f32 %v1664, %v2330
    %2332 = vmatmul.f32.gmra.mxu0 %v2311
    %v2333 = vpop.f32.mrf.mxu0
    %v2334 = vadd.f32 %v1665, %v2333
    %2335 = vdwg.mxu0
    %v2336 = vsel %vm75, %v2331, 0.0
    %2337 = vadd.xlane.f32.xlu0 %v2336
    %v2338 = vpop.xlane.xlu0 %2337
    %v2339 = vsel %vm75, %v2334, 0.0
    %2340 = vadd.xlane.f32.xlu0 %v2339
    %v2341 = vpop.xlane.xlu0 %2340
    %v2342 = vmul.f32 %v2338, %v742
    %v2343 = vmul.f32 %v2341, %v742
    %v2344 = vsub.f32 %v2331, %v2342
    %v2345 = vsub.f32 %v2334, %v2343
    %v2346 = vmul.f32 %v2344, %v2344
    %v2347 = vmul.f32 %v2345, %v2345
    %v2348 = vsel %vm75, %v2346, 0.0
    %2349 = vadd.xlane.f32.xlu0 %v2348
    %v2350 = vpop.xlane.xlu0 %2349
    %v2351 = vsel %vm75, %v2347, 0.0
    %2352 = vadd.xlane.f32.xlu0 %v2351
    %v2353 = vpop.xlane.xlu0 %2352
    %v2354 = vmul.f32 %v2350, %v742
    %v2355 = vmul.f32 %v2353, %v742
    %v2356 = vadd.f32 %v2354, 1e-05
    %v2357 = vadd.f32 %v2355, 1e-05
    %v2358 = vrsqrt.pop %v2356
    %v2359 = vmul.f32 %v2358, %v2356
    %v2360 = vmul.f32 %v2359, %v2358
    %v2361 = vmul.f32 0.5, %v2360
    %v2362 = vsub.f32 1.5, %v2361
    %v2363 = vmul.f32 %v2358, %v2362
    %vm2364 = vweird.f32 %v2356
    %vm2365 = vweird.f32 %v2358
    %vm2366 = vmor %vm2364, %vm2365
    %v2367 = vsel %vm2366, %v2358, %v2363
    %v2368 = vrsqrt.pop %v2357
    %v2369 = vmul.f32 %v2368, %v2357
    %v2370 = vmul.f32 %v2369, %v2368
    %v2371 = vmul.f32 0.5, %v2370
    %v2372 = vsub.f32 1.5, %v2371
    %v2373 = vmul.f32 %v2368, %v2372
    %vm2374 = vweird.f32 %v2357
    %vm2375 = vweird.f32 %v2368
    %vm2376 = vmor %vm2374, %vm2375
    %v2377 = vsel %vm2376, %v2368, %v2373
    %v2378 = vmul.f32 %v2344, %v2367
    %v2379 = vmul.f32 %v2345, %v2377
    %s2380 = scalar_lea.vmem %s15, 16
    %2381 = vst.msk [vmem:[%s2380] sm:$0xff] %vm151, %v1833
    %2382 = vst.msk [vmem:[%s2380 + $0x8] sm:$0xff] %vm151, %v1834
    %2383 = vrot.lane.b32.xlu0 %v1959, 8
    %v2384 = vpop.permute.xlu0 %2383
    %2385 = vrot.lane.b32.xlu0 %v1960, 8
    %v2386 = vpop.permute.xlu0 %2385
    %2389 = vst.msk [vmem:[%s2380] sm:$0xff] %vm414, %v2384
    %2390 = vst.msk [vmem:[%s2380 + $0x8] sm:$0xff] %vm414, %v2386
    %2391 = vrot.lane.b32.xlu0 %v2101, 16
    %v2392 = vpop.permute.xlu0 %2391
    %2393 = vrot.lane.b32.xlu0 %v2102, 16
    %v2394 = vpop.permute.xlu0 %2393
    %2397 = vst.msk [vmem:[%s2380] sm:$0xff] %vm555, %v2392
    %2398 = vst.msk [vmem:[%s2380 + $0x8] sm:$0xff] %vm555, %v2394
    %2399 = vrot.lane.b32.xlu0 %v2241, 24
    %v2400 = vpop.permute.xlu0 %2399
    %2401 = vrot.lane.b32.xlu0 %v2242, 24
    %v2402 = vpop.permute.xlu0 %2401
    %2405 = vst.msk [vmem:[%s2380] sm:$0xff] %vm696, %v2400
    %2406 = vst.msk [vmem:[%s2380 + $0x8] sm:$0xff] %vm696, %v2402
    %s2407 = scalar_lea.vmem %s8, 32
    %v2408 = vld [vmem:[%s2407] sm:$0xff]
    %v2409 = vld [vmem:[%s2407 + $0x8] sm:$0xff]
    %v2410 = vld [vmem:[%s2407 + $0x10] sm:$0xff]
    %v2411 = vld [vmem:[%s2407 + $0x18] sm:$0xff]
    %s2412 = scalar_lea.vmem %s9, 32
    %v2413 = vld [vmem:[%s2412] sm:$0xff]
    %v2414 = vld [vmem:[%s2412 + $0x8] sm:$0xff]
    %v2415 = vld [vmem:[%s2412 + $0x10] sm:$0xff]
    %v2416 = vld [vmem:[%s2412 + $0x18] sm:$0xff]
    %s2417 = scalar_lea.vmem %s10, 32
    %v2418 = vld [vmem:[%s2417] sm:$0xff]
    %v2419 = vld [vmem:[%s2417 + $0x8] sm:$0xff]
    %v2420 = vld [vmem:[%s2417 + $0x10] sm:$0xff]
    %v2421 = vld [vmem:[%s2417 + $0x18] sm:$0xff]
    %s2422 = scalar_lea.vmem %s11, 32
    %v2423 = vld [vmem:[%s2422] sm:$0xff]
    %v2424 = vld [vmem:[%s2422 + $0x8] sm:$0xff]
    %v2425 = vld [vmem:[%s2422 + $0x10] sm:$0xff]
    %v2426 = vld [vmem:[%s2422 + $0x18] sm:$0xff]
    %v2428 = vsel %vm75, %v2378, 0
    %v2431 = vsel %vm75, %v2379, 0
    %2433 = vmatpush.msra.mxu0 0.0
    %2434 = vmatpush.msra.mxu0 0.0
    %2435 = vmatpush.msra.mxu0 0.0
    %2436 = vmatpush.msra.mxu0 0.0
    %2437 = vmatpush.msra.mxu0 0.0
    %2438 = vmatpush.msra.mxu0 0.0
    %2439 = vmatpush.msra.mxu0 0.0
    %2440 = vmatpush.msra.mxu0 0.0
    %2441 = vmatpush.msra.mxu0 0.0
    %2442 = vmatpush.msra.mxu0 0.0
    %2443 = vmatpush.msra.mxu0 0.0
    %2444 = vmatpush.msra.mxu0 0.0
    %2445 = vmatpush.msra.mxu0 %v2411
    %2446 = vmatpush.msra.mxu0 %v2410
    %2447 = vmatpush.msra.mxu0 %v2409
    %2448 = vmatpush.msra.mxu0 %v2408
    %2449 = vmatmul.f32.gmra.mxu0 %v2428
    %v2450 = vpop.f32.mrf.mxu0
    %v2451 = vadd.f32 0.0, %v2450
    %2452 = vmatmul.f32.gmra.mxu0 %v2431
    %v2453 = vpop.f32.mrf.mxu0
    %v2454 = vadd.f32 0.0, %v2453
    %2455 = vdwg.mxu0
    %2456 = vmatpush.msra.mxu0 0.0
    %2457 = vmatpush.msra.mxu0 0.0
    %2458 = vmatpush.msra.mxu0 0.0
    %2459 = vmatpush.msra.mxu0 0.0
    %2460 = vmatpush.msra.mxu0 0.0
    %2461 = vmatpush.msra.mxu0 0.0
    %2462 = vmatpush.msra.mxu0 0.0
    %2463 = vmatpush.msra.mxu0 0.0
    %2464 = vmatpush.msra.mxu0 0.0
    %2465 = vmatpush.msra.mxu0 0.0
    %2466 = vmatpush.msra.mxu0 0.0
    %2467 = vmatpush.msra.mxu0 0.0
    %2468 = vmatpush.msra.mxu0 %v2416
    %2469 = vmatpush.msra.mxu0 %v2415
    %2470 = vmatpush.msra.mxu0 %v2414
    %2471 = vmatpush.msra.mxu0 %v2413
    %2472 = vmatmul.f32.gmra.mxu0 %v853
    %v2473 = vpop.f32.mrf.mxu0
    %v2474 = vadd.f32 0.0, %v2473
    %2475 = vmatmul.f32.gmra.mxu0 %v856
    %v2476 = vpop.f32.mrf.mxu0
    %v2477 = vadd.f32 0.0, %v2476
    %2478 = vdwg.mxu0
    %2479 = vmatpush.msra.mxu0 0.0
    %2480 = vmatpush.msra.mxu0 0.0
    %2481 = vmatpush.msra.mxu0 0.0
    %2482 = vmatpush.msra.mxu0 0.0
    %2483 = vmatpush.msra.mxu0 0.0
    %2484 = vmatpush.msra.mxu0 0.0
    %2485 = vmatpush.msra.mxu0 0.0
    %2486 = vmatpush.msra.mxu0 0.0
    %2487 = vmatpush.msra.mxu0 0.0
    %2488 = vmatpush.msra.mxu0 0.0
    %2489 = vmatpush.msra.mxu0 0.0
    %2490 = vmatpush.msra.mxu0 0.0
    %2491 = vmatpush.msra.mxu0 %v2421
    %2492 = vmatpush.msra.mxu0 %v2420
    %2493 = vmatpush.msra.mxu0 %v2419
    %2494 = vmatpush.msra.mxu0 %v2418
    %2495 = vmatmul.f32.gmra.mxu0 %v853
    %v2496 = vpop.f32.mrf.mxu0
    %v2497 = vadd.f32 0.0, %v2496
    %2498 = vmatmul.f32.gmra.mxu0 %v856
    %v2499 = vpop.f32.mrf.mxu0
    %v2500 = vadd.f32 0.0, %v2499
    %2501 = vdwg.mxu0
    %v2503 = vsel %vm151, %v2451, 0
    %v2506 = vsel %vm151, %v2474, 0
    %2508 = vmatpush.xpose.msra.mxu0 0.0
    %2509 = vmatpush.xpose.msra.mxu0 0.0
    %2510 = vmatpush.xpose.msra.mxu0 0.0
    %2511 = vmatpush.xpose.msra.mxu0 0.0
    %2512 = vmatpush.xpose.msra.mxu0 0.0
    %2513 = vmatpush.xpose.msra.mxu0 0.0
    %2514 = vmatpush.xpose.msra.mxu0 0.0
    %2515 = vmatpush.xpose.msra.mxu0 0.0
    %2516 = vmatpush.xpose.msra.mxu0 0.0
    %2517 = vmatpush.xpose.msra.mxu0 0.0
    %2518 = vmatpush.xpose.msra.mxu0 0.0
    %2519 = vmatpush.xpose.msra.mxu0 0.0
    %2520 = vmatpush.xpose.msra.mxu0 0.0
    %2521 = vmatpush.xpose.msra.mxu0 0.0
    %2522 = vmatpush.xpose.msra.mxu0 0.0
    %2523 = vmatpush.xpose.msra.mxu0 %v2506
    %2524 = vmatmul.f32.gmra.mxu0 %v2503
    %v2525 = vpop.f32.mrf.mxu0
    %v2526 = vadd.f32 %v57, %v2525
    %2527 = vdwg.mxu0
    %v2529 = vsel %vm151, %v2454, 0
    %v2532 = vsel %vm151, %v2477, 0
    %2534 = vmatpush.xpose.msra.mxu0 0.0
    %2535 = vmatpush.xpose.msra.mxu0 0.0
    %2536 = vmatpush.xpose.msra.mxu0 0.0
    %2537 = vmatpush.xpose.msra.mxu0 0.0
    %2538 = vmatpush.xpose.msra.mxu0 0.0
    %2539 = vmatpush.xpose.msra.mxu0 0.0
    %2540 = vmatpush.xpose.msra.mxu0 0.0
    %2541 = vmatpush.xpose.msra.mxu0 0.0
    %2542 = vmatpush.xpose.msra.mxu0 0.0
    %2543 = vmatpush.xpose.msra.mxu0 0.0
    %2544 = vmatpush.xpose.msra.mxu0 0.0
    %2545 = vmatpush.xpose.msra.mxu0 0.0
    %2546 = vmatpush.xpose.msra.mxu0 0.0
    %2547 = vmatpush.xpose.msra.mxu0 0.0
    %2548 = vmatpush.xpose.msra.mxu0 0.0
    %2549 = vmatpush.xpose.msra.mxu0 %v2532
    %2550 = vmatmul.f32.gmra.mxu0 %v2529
    %v2551 = vpop.f32.mrf.mxu0
    %v2552 = vadd.f32 %v58, %v2551
    %2553 = vdwg.mxu0
    %v2554 = vsel %vm151, %v2526, -inf
    %2555 = vmax.xlane.f32.xlu0 %v2554
    %v2556 = vpop.xlane.xlu0 %2555
    %v2557 = vsel %vm151, %v2552, -inf
    %2558 = vmax.xlane.f32.xlu0 %v2557
    %v2559 = vpop.xlane.xlu0 %2558
    %v2560 = vsub.f32 %v2526, %v2556
    %v2561 = vsub.f32 %v2552, %v2559
    %v2562 = vmul.f32 %v2560, 1.442695
    %v2563 = vpow.pop %v2562
    %v2564 = vmul.f32 %v2561, 1.442695
    %v2565 = vpow.pop %v2564
    %v2566 = vsel %vm151, %v2563, 0.0
    %2567 = vadd.xlane.f32.xlu0 %v2566
    %v2568 = vpop.xlane.xlu0 %2567
    %v2569 = vsel %vm151, %v2565, 0.0
    %2570 = vadd.xlane.f32.xlu0 %v2569
    %v2571 = vpop.xlane.xlu0 %2570
    %v2572 = vrcp.pop %v2568
    %v2573 = vrcp.pop %v2571
    %v2574 = vmul.f32 %v2563, %v2572
    %v2575 = vmul.f32 %v2565, %v2573
    %v2577 = vsel %vm151, %v2574, 0
    %2579 = vmatpush.msra.mxu0 0.0
    %2580 = vmatpush.msra.mxu0 0.0
    %2581 = vmatpush.msra.mxu0 0.0
    %2582 = vmatpush.msra.mxu0 0.0
    %2583 = vmatpush.msra.mxu0 0.0
    %2584 = vmatpush.msra.mxu0 0.0
    %2585 = vmatpush.msra.mxu0 0.0
    %2586 = vmatpush.msra.mxu0 0.0
    %2587 = vmatpush.msra.mxu0 0.0
    %2588 = vmatpush.msra.mxu0 0.0
    %2589 = vmatpush.msra.mxu0 0.0
    %2590 = vmatpush.msra.mxu0 0.0
    %2591 = vmatpush.msra.mxu0 0.0
    %2592 = vmatpush.msra.mxu0 0.0
    %2593 = vmatpush.msra.mxu0 0.0
    %2594 = vmatpush.msra.mxu0 %v2497
    %2595 = vmatmul.f32.gmra.mxu0 %v2577
    %v2596 = vpop.f32.mrf.mxu0
    %v2597 = vadd.f32 0.0, %v2596
    %2598 = vdwg.mxu0
    %v2600 = vsel %vm151, %v2575, 0
    %2602 = vmatpush.msra.mxu0 0.0
    %2603 = vmatpush.msra.mxu0 0.0
    %2604 = vmatpush.msra.mxu0 0.0
    %2605 = vmatpush.msra.mxu0 0.0
    %2606 = vmatpush.msra.mxu0 0.0
    %2607 = vmatpush.msra.mxu0 0.0
    %2608 = vmatpush.msra.mxu0 0.0
    %2609 = vmatpush.msra.mxu0 0.0
    %2610 = vmatpush.msra.mxu0 0.0
    %2611 = vmatpush.msra.mxu0 0.0
    %2612 = vmatpush.msra.mxu0 0.0
    %2613 = vmatpush.msra.mxu0 0.0
    %2614 = vmatpush.msra.mxu0 0.0
    %2615 = vmatpush.msra.mxu0 0.0
    %2616 = vmatpush.msra.mxu0 0.0
    %2617 = vmatpush.msra.mxu0 %v2500
    %2618 = vmatmul.f32.gmra.mxu0 %v2600
    %v2619 = vpop.f32.mrf.mxu0
    %v2620 = vadd.f32 0.0, %v2619
    %2621 = vdwg.mxu0
    %2622 = vst.msk [vmem:[#allocation2] sm:$0xff] %vm151, %v2597
    %2623 = vst.msk [vmem:[#allocation2 + $0x8] sm:$0xff] %vm151, %v2620
    %2624 = vrot.lane.b32.xlu0 %v2451, 120
    %v2625 = vpop.permute.xlu0 %2624
    %2626 = vrot.lane.b32.xlu0 %v2474, 120
    %v2627 = vpop.permute.xlu0 %2626
    %v2628 = vsel %vm151, %v2625, 0
    %v2630 = vsel %vm151, %v2627, 0
    %2632 = vmatpush.xpose.msra.mxu0 0.0
    %2633 = vmatpush.xpose.msra.mxu0 0.0
    %2634 = vmatpush.xpose.msra.mxu0 0.0
    %2635 = vmatpush.xpose.msra.mxu0 0.0
    %2636 = vmatpush.xpose.msra.mxu0 0.0
    %2637 = vmatpush.xpose.msra.mxu0 0.0
    %2638 = vmatpush.xpose.msra.mxu0 0.0
    %2639 = vmatpush.xpose.msra.mxu0 0.0
    %2640 = vmatpush.xpose.msra.mxu0 0.0
    %2641 = vmatpush.xpose.msra.mxu0 0.0
    %2642 = vmatpush.xpose.msra.mxu0 0.0
    %2643 = vmatpush.xpose.msra.mxu0 0.0
    %2644 = vmatpush.xpose.msra.mxu0 0.0
    %2645 = vmatpush.xpose.msra.mxu0 0.0
    %2646 = vmatpush.xpose.msra.mxu0 0.0
    %2647 = vmatpush.xpose.msra.mxu0 %v2630
    %2648 = vmatmul.f32.gmra.mxu0 %v2628
    %v2649 = vpop.f32.mrf.mxu0
    %v2650 = vadd.f32 %v57, %v2649
    %2651 = vdwg.mxu0
    %2652 = vrot.lane.b32.xlu0 %v2454, 120
    %v2653 = vpop.permute.xlu0 %2652
    %2654 = vrot.lane.b32.xlu0 %v2477, 120
    %v2655 = vpop.permute.xlu0 %2654
    %v2656 = vsel %vm151, %v2653, 0
    %v2658 = vsel %vm151, %v2655, 0
    %2660 = vmatpush.xpose.msra.mxu0 0.0
    %2661 = vmatpush.xpose.msra.mxu0 0.0
    %2662 = vmatpush.xpose.msra.mxu0 0.0
    %2663 = vmatpush.xpose.msra.mxu0 0.0
    %2664 = vmatpush.xpose.msra.mxu0 0.0
    %2665 = vmatpush.xpose.msra.mxu0 0.0
    %2666 = vmatpush.xpose.msra.mxu0 0.0
    %2667 = vmatpush.xpose.msra.mxu0 0.0
    %2668 = vmatpush.xpose.msra.mxu0 0.0
    %2669 = vmatpush.xpose.msra.mxu0 0.0
    %2670 = vmatpush.xpose.msra.mxu0 0.0
    %2671 = vmatpush.xpose.msra.mxu0 0.0
    %2672 = vmatpush.xpose.msra.mxu0 0.0
    %2673 = vmatpush.xpose.msra.mxu0 0.0
    %2674 = vmatpush.xpose.msra.mxu0 0.0
    %2675 = vmatpush.xpose.msra.mxu0 %v2658
    %2676 = vmatmul.f32.gmra.mxu0 %v2656
    %v2677 = vpop.f32.mrf.mxu0
    %v2678 = vadd.f32 %v58, %v2677
    %2679 = vdwg.mxu0
    %v2680 = vsel %vm151, %v2650, -inf
    %2681 = vmax.xlane.f32.xlu0 %v2680
    %v2682 = vpop.xlane.xlu0 %2681
    %v2683 = vsel %vm151, %v2678, -inf
    %2684 = vmax.xlane.f32.xlu0 %v2683
    %v2685 = vpop.xlane.xlu0 %2684
    %v2686 = vsub.f32 %v2650, %v2682
    %v2687 = vsub.f32 %v2678, %v2685
    %v2688 = vmul.f32 %v2686, 1.442695
    %v2689 = vpow.pop %v2688
    %v2690 = vmul.f32 %v2687, 1.442695
    %v2691 = vpow.pop %v2690
    %v2692 = vsel %vm151, %v2689, 0.0
    %2693 = vadd.xlane.f32.xlu0 %v2692
    %v2694 = vpop.xlane.xlu0 %2693
    %v2695 = vsel %vm151, %v2691, 0.0
    %2696 = vadd.xlane.f32.xlu0 %v2695
    %v2697 = vpop.xlane.xlu0 %2696
    %v2698 = vrcp.pop %v2694
    %v2699 = vrcp.pop %v2697
    %v2700 = vmul.f32 %v2689, %v2698
    %v2701 = vmul.f32 %v2691, %v2699
    %2703 = vrot.lane.b32.xlu0 %v2497, 120
    %v2704 = vpop.permute.xlu0 %2703
    %v2707 = vsel %vm151, %v2700, 0
    %2709 = vmatpush.msra.mxu0 0.0
    %2710 = vmatpush.msra.mxu0 0.0
    %2711 = vmatpush.msra.mxu0 0.0
    %2712 = vmatpush.msra.mxu0 0.0
    %2713 = vmatpush.msra.mxu0 0.0
    %2714 = vmatpush.msra.mxu0 0.0
    %2715 = vmatpush.msra.mxu0 0.0
    %2716 = vmatpush.msra.mxu0 0.0
    %2717 = vmatpush.msra.mxu0 0.0
    %2718 = vmatpush.msra.mxu0 0.0
    %2719 = vmatpush.msra.mxu0 0.0
    %2720 = vmatpush.msra.mxu0 0.0
    %2721 = vmatpush.msra.mxu0 0.0
    %2722 = vmatpush.msra.mxu0 0.0
    %2723 = vmatpush.msra.mxu0 0.0
    %2724 = vmatpush.msra.mxu0 %v2704
    %2725 = vmatmul.f32.gmra.mxu0 %v2707
    %v2726 = vpop.f32.mrf.mxu0
    %v2727 = vadd.f32 0.0, %v2726
    %2728 = vdwg.mxu0
    %2730 = vrot.lane.b32.xlu0 %v2500, 120
    %v2731 = vpop.permute.xlu0 %2730
    %v2734 = vsel %vm151, %v2701, 0
    %2736 = vmatpush.msra.mxu0 0.0
    %2737 = vmatpush.msra.mxu0 0.0
    %2738 = vmatpush.msra.mxu0 0.0
    %2739 = vmatpush.msra.mxu0 0.0
    %2740 = vmatpush.msra.mxu0 0.0
    %2741 = vmatpush.msra.mxu0 0.0
    %2742 = vmatpush.msra.mxu0 0.0
    %2743 = vmatpush.msra.mxu0 0.0
    %2744 = vmatpush.msra.mxu0 0.0
    %2745 = vmatpush.msra.mxu0 0.0
    %2746 = vmatpush.msra.mxu0 0.0
    %2747 = vmatpush.msra.mxu0 0.0
    %2748 = vmatpush.msra.mxu0 0.0
    %2749 = vmatpush.msra.mxu0 0.0
    %2750 = vmatpush.msra.mxu0 0.0
    %2751 = vmatpush.msra.mxu0 %v2731
    %2752 = vmatmul.f32.gmra.mxu0 %v2734
    %v2753 = vpop.f32.mrf.mxu0
    %v2754 = vadd.f32 0.0, %v2753
    %2755 = vdwg.mxu0
    %2758 = vrot.lane.b32.xlu0 %v2727, 8
    %v2759 = vpop.permute.xlu0 %2758
    %2760 = vrot.lane.b32.xlu0 %v2754, 8
    %v2761 = vpop.permute.xlu0 %2760
    %2764 = vst.msk [vmem:[#allocation2] sm:$0xff] %vm414, %v2759
    %2765 = vst.msk [vmem:[#allocation2 + $0x8] sm:$0xff] %vm414, %v2761
    %2766 = vrot.lane.b32.xlu0 %v2451, 112
    %v2767 = vpop.permute.xlu0 %2766
    %2768 = vrot.lane.b32.xlu0 %v2474, 112
    %v2769 = vpop.permute.xlu0 %2768
    %v2770 = vsel %vm151, %v2767, 0
    %v2772 = vsel %vm151, %v2769, 0
    %2774 = vmatpush.xpose.msra.mxu0 0.0
    %2775 = vmatpush.xpose.msra.mxu0 0.0
    %2776 = vmatpush.xpose.msra.mxu0 0.0
    %2777 = vmatpush.xpose.msra.mxu0 0.0
    %2778 = vmatpush.xpose.msra.mxu0 0.0
    %2779 = vmatpush.xpose.msra.mxu0 0.0
    %2780 = vmatpush.xpose.msra.mxu0 0.0
    %2781 = vmatpush.xpose.msra.mxu0 0.0
    %2782 = vmatpush.xpose.msra.mxu0 0.0
    %2783 = vmatpush.xpose.msra.mxu0 0.0
    %2784 = vmatpush.xpose.msra.mxu0 0.0
    %2785 = vmatpush.xpose.msra.mxu0 0.0
    %2786 = vmatpush.xpose.msra.mxu0 0.0
    %2787 = vmatpush.xpose.msra.mxu0 0.0
    %2788 = vmatpush.xpose.msra.mxu0 0.0
    %2789 = vmatpush.xpose.msra.mxu0 %v2772
    %2790 = vmatmul.f32.gmra.mxu0 %v2770
    %v2791 = vpop.f32.mrf.mxu0
    %v2792 = vadd.f32 %v57, %v2791
    %2793 = vdwg.mxu0
    %2794 = vrot.lane.b32.xlu0 %v2454, 112
    %v2795 = vpop.permute.xlu0 %2794
    %2796 = vrot.lane.b32.xlu0 %v2477, 112
    %v2797 = vpop.permute.xlu0 %2796
    %v2798 = vsel %vm151, %v2795, 0
    %v2800 = vsel %vm151, %v2797, 0
    %2802 = vmatpush.xpose.msra.mxu0 0.0
    %2803 = vmatpush.xpose.msra.mxu0 0.0
    %2804 = vmatpush.xpose.msra.mxu0 0.0
    %2805 = vmatpush.xpose.msra.mxu0 0.0
    %2806 = vmatpush.xpose.msra.mxu0 0.0
    %2807 = vmatpush.xpose.msra.mxu0 0.0
    %2808 = vmatpush.xpose.msra.mxu0 0.0
    %2809 = vmatpush.xpose.msra.mxu0 0.0
    %2810 = vmatpush.xpose.msra.mxu0 0.0
    %2811 = vmatpush.xpose.msra.mxu0 0.0
    %2812 = vmatpush.xpose.msra.mxu0 0.0
    %2813 = vmatpush.xpose.msra.mxu0 0.0
    %2814 = vmatpush.xpose.msra.mxu0 0.0
    %2815 = vmatpush.xpose.msra.mxu0 0.0
    %2816 = vmatpush.xpose.msra.mxu0 0.0
    %2817 = vmatpush.xpose.msra.mxu0 %v2800
    %2818 = vmatmul.f32.gmra.mxu0 %v2798
    %v2819 = vpop.f32.mrf.mxu0
    %v2820 = vadd.f32 %v58, %v2819
    %2821 = vdwg.mxu0
    %v2822 = vsel %vm151, %v2792, -inf
    %2823 = vmax.xlane.f32.xlu0 %v2822
    %v2824 = vpop.xlane.xlu0 %2823
    %v2825 = vsel %vm151, %v2820, -inf
    %2826 = vmax.xlane.f32.xlu0 %v2825
    %v2827 = vpop.xlane.xlu0 %2826
    %v2828 = vsub.f32 %v2792, %v2824
    %v2829 = vsub.f32 %v2820, %v2827
    %v2830 = vmul.f32 %v2828, 1.442695
    %v2831 = vpow.pop %v2830
    %v2832 = vmul.f32 %v2829, 1.442695
    %v2833 = vpow.pop %v2832
    %v2834 = vsel %vm151, %v2831, 0.0
    %2835 = vadd.xlane.f32.xlu0 %v2834
    %v2836 = vpop.xlane.xlu0 %2835
    %v2837 = vsel %vm151, %v2833, 0.0
    %2838 = vadd.xlane.f32.xlu0 %v2837
    %v2839 = vpop.xlane.xlu0 %2838
    %v2840 = vrcp.pop %v2836
    %v2841 = vrcp.pop %v2839
    %v2842 = vmul.f32 %v2831, %v2840
    %v2843 = vmul.f32 %v2833, %v2841
    %2844 = vrot.lane.b32.xlu0 %v2497, 112
    %v2845 = vpop.permute.xlu0 %2844
    %v2848 = vsel %vm151, %v2842, 0
    %2850 = vmatpush.msra.mxu0 0.0
    %2851 = vmatpush.msra.mxu0 0.0
    %2852 = vmatpush.msra.mxu0 0.0
    %2853 = vmatpush.msra.mxu0 0.0
    %2854 = vmatpush.msra.mxu0 0.0
    %2855 = vmatpush.msra.mxu0 0.0
    %2856 = vmatpush.msra.mxu0 0.0
    %2857 = vmatpush.msra.mxu0 0.0
    %2858 = vmatpush.msra.mxu0 0.0
    %2859 = vmatpush.msra.mxu0 0.0
    %2860 = vmatpush.msra.mxu0 0.0
    %2861 = vmatpush.msra.mxu0 0.0
    %2862 = vmatpush.msra.mxu0 0.0
    %2863 = vmatpush.msra.mxu0 0.0
    %2864 = vmatpush.msra.mxu0 0.0
    %2865 = vmatpush.msra.mxu0 %v2845
    %2866 = vmatmul.f32.gmra.mxu0 %v2848
    %v2867 = vpop.f32.mrf.mxu0
    %v2868 = vadd.f32 0.0, %v2867
    %2869 = vdwg.mxu0
    %2870 = vrot.lane.b32.xlu0 %v2500, 112
    %v2871 = vpop.permute.xlu0 %2870
    %v2874 = vsel %vm151, %v2843, 0
    %2876 = vmatpush.msra.mxu0 0.0
    %2877 = vmatpush.msra.mxu0 0.0
    %2878 = vmatpush.msra.mxu0 0.0
    %2879 = vmatpush.msra.mxu0 0.0
    %2880 = vmatpush.msra.mxu0 0.0
    %2881 = vmatpush.msra.mxu0 0.0
    %2882 = vmatpush.msra.mxu0 0.0
    %2883 = vmatpush.msra.mxu0 0.0
    %2884 = vmatpush.msra.mxu0 0.0
    %2885 = vmatpush.msra.mxu0 0.0
    %2886 = vmatpush.msra.mxu0 0.0
    %2887 = vmatpush.msra.mxu0 0.0
    %2888 = vmatpush.msra.mxu0 0.0
    %2889 = vmatpush.msra.mxu0 0.0
    %2890 = vmatpush.msra.mxu0 0.0
    %2891 = vmatpush.msra.mxu0 %v2871
    %2892 = vmatmul.f32.gmra.mxu0 %v2874
    %v2893 = vpop.f32.mrf.mxu0
    %v2894 = vadd.f32 0.0, %v2893
    %2895 = vdwg.mxu0
    %2898 = vrot.lane.b32.xlu0 %v2868, 16
    %v2899 = vpop.permute.xlu0 %2898
    %2900 = vrot.lane.b32.xlu0 %v2894, 16
    %v2901 = vpop.permute.xlu0 %2900
    %2904 = vst.msk [vmem:[#allocation2] sm:$0xff] %vm555, %v2899
    %2905 = vst.msk [vmem:[#allocation2 + $0x8] sm:$0xff] %vm555, %v2901
    %2906 = vrot.lane.b32.xlu0 %v2451, 104
    %v2907 = vpop.permute.xlu0 %2906
    %2908 = vrot.lane.b32.xlu0 %v2474, 104
    %v2909 = vpop.permute.xlu0 %2908
    %v2910 = vsel %vm151, %v2907, 0
    %v2912 = vsel %vm151, %v2909, 0
    %2914 = vmatpush.xpose.msra.mxu0 0.0
    %2915 = vmatpush.xpose.msra.mxu0 0.0
    %2916 = vmatpush.xpose.msra.mxu0 0.0
    %2917 = vmatpush.xpose.msra.mxu0 0.0
    %2918 = vmatpush.xpose.msra.mxu0 0.0
    %2919 = vmatpush.xpose.msra.mxu0 0.0
    %2920 = vmatpush.xpose.msra.mxu0 0.0
    %2921 = vmatpush.xpose.msra.mxu0 0.0
    %2922 = vmatpush.xpose.msra.mxu0 0.0
    %2923 = vmatpush.xpose.msra.mxu0 0.0
    %2924 = vmatpush.xpose.msra.mxu0 0.0
    %2925 = vmatpush.xpose.msra.mxu0 0.0
    %2926 = vmatpush.xpose.msra.mxu0 0.0
    %2927 = vmatpush.xpose.msra.mxu0 0.0
    %2928 = vmatpush.xpose.msra.mxu0 0.0
    %2929 = vmatpush.xpose.msra.mxu0 %v2912
    %2930 = vmatmul.f32.gmra.mxu0 %v2910
    %v2931 = vpop.f32.mrf.mxu0
    %v2932 = vadd.f32 %v57, %v2931
    %2933 = vdwg.mxu0
    %2934 = vrot.lane.b32.xlu0 %v2454, 104
    %v2935 = vpop.permute.xlu0 %2934
    %2936 = vrot.lane.b32.xlu0 %v2477, 104
    %v2937 = vpop.permute.xlu0 %2936
    %v2938 = vsel %vm151, %v2935, 0
    %v2940 = vsel %vm151, %v2937, 0
    %2942 = vmatpush.xpose.msra.mxu0 0.0
    %2943 = vmatpush.xpose.msra.mxu0 0.0
    %2944 = vmatpush.xpose.msra.mxu0 0.0
    %2945 = vmatpush.xpose.msra.mxu0 0.0
    %2946 = vmatpush.xpose.msra.mxu0 0.0
    %2947 = vmatpush.xpose.msra.mxu0 0.0
    %2948 = vmatpush.xpose.msra.mxu0 0.0
    %2949 = vmatpush.xpose.msra.mxu0 0.0
    %2950 = vmatpush.xpose.msra.mxu0 0.0
    %2951 = vmatpush.xpose.msra.mxu0 0.0
    %2952 = vmatpush.xpose.msra.mxu0 0.0
    %2953 = vmatpush.xpose.msra.mxu0 0.0
    %2954 = vmatpush.xpose.msra.mxu0 0.0
    %2955 = vmatpush.xpose.msra.mxu0 0.0
    %2956 = vmatpush.xpose.msra.mxu0 0.0
    %2957 = vmatpush.xpose.msra.mxu0 %v2940
    %2958 = vmatmul.f32.gmra.mxu0 %v2938
    %v2959 = vpop.f32.mrf.mxu0
    %v2960 = vadd.f32 %v58, %v2959
    %2961 = vdwg.mxu0
    %v2962 = vsel %vm151, %v2932, -inf
    %2963 = vmax.xlane.f32.xlu0 %v2962
    %v2964 = vpop.xlane.xlu0 %2963
    %v2965 = vsel %vm151, %v2960, -inf
    %2966 = vmax.xlane.f32.xlu0 %v2965
    %v2967 = vpop.xlane.xlu0 %2966
    %v2968 = vsub.f32 %v2932, %v2964
    %v2969 = vsub.f32 %v2960, %v2967
    %v2970 = vmul.f32 %v2968, 1.442695
    %v2971 = vpow.pop %v2970
    %v2972 = vmul.f32 %v2969, 1.442695
    %v2973 = vpow.pop %v2972
    %v2974 = vsel %vm151, %v2971, 0.0
    %2975 = vadd.xlane.f32.xlu0 %v2974
    %v2976 = vpop.xlane.xlu0 %2975
    %v2977 = vsel %vm151, %v2973, 0.0
    %2978 = vadd.xlane.f32.xlu0 %v2977
    %v2979 = vpop.xlane.xlu0 %2978
    %v2980 = vrcp.pop %v2976
    %v2981 = vrcp.pop %v2979
    %v2982 = vmul.f32 %v2971, %v2980
    %v2983 = vmul.f32 %v2973, %v2981
    %2984 = vrot.lane.b32.xlu0 %v2497, 104
    %v2985 = vpop.permute.xlu0 %2984
    %v2988 = vsel %vm151, %v2982, 0
    %2990 = vmatpush.msra.mxu0 0.0
    %2991 = vmatpush.msra.mxu0 0.0
    %2992 = vmatpush.msra.mxu0 0.0
    %2993 = vmatpush.msra.mxu0 0.0
    %2994 = vmatpush.msra.mxu0 0.0
    %2995 = vmatpush.msra.mxu0 0.0
    %2996 = vmatpush.msra.mxu0 0.0
    %2997 = vmatpush.msra.mxu0 0.0
    %2998 = vmatpush.msra.mxu0 0.0
    %2999 = vmatpush.msra.mxu0 0.0
    %3000 = vmatpush.msra.mxu0 0.0
    %3001 = vmatpush.msra.mxu0 0.0
    %3002 = vmatpush.msra.mxu0 0.0
    %3003 = vmatpush.msra.mxu0 0.0
    %3004 = vmatpush.msra.mxu0 0.0
    %3005 = vmatpush.msra.mxu0 %v2985
    %3006 = vmatmul.f32.gmra.mxu0 %v2988
    %v3007 = vpop.f32.mrf.mxu0
    %v3008 = vadd.f32 0.0, %v3007
    %3009 = vdwg.mxu0
    %3010 = vrot.lane.b32.xlu0 %v2500, 104
    %v3011 = vpop.permute.xlu0 %3010
    %v3014 = vsel %vm151, %v2983, 0
    %3016 = vmatpush.msra.mxu0 0.0
    %3017 = vmatpush.msra.mxu0 0.0
    %3018 = vmatpush.msra.mxu0 0.0
    %3019 = vmatpush.msra.mxu0 0.0
    %3020 = vmatpush.msra.mxu0 0.0
    %3021 = vmatpush.msra.mxu0 0.0
    %3022 = vmatpush.msra.mxu0 0.0
    %3023 = vmatpush.msra.mxu0 0.0
    %3024 = vmatpush.msra.mxu0 0.0
    %3025 = vmatpush.msra.mxu0 0.0
    %3026 = vmatpush.msra.mxu0 0.0
    %3027 = vmatpush.msra.mxu0 0.0
    %3028 = vmatpush.msra.mxu0 0.0
    %3029 = vmatpush.msra.mxu0 0.0
    %3030 = vmatpush.msra.mxu0 0.0
    %3031 = vmatpush.msra.mxu0 %v3011
    %3032 = vmatmul.f32.gmra.mxu0 %v3014
    %v3033 = vpop.f32.mrf.mxu0
    %v3034 = vadd.f32 0.0, %v3033
    %3035 = vdwg.mxu0
    %3038 = vrot.lane.b32.xlu0 %v3008, 24
    %v3039 = vpop.permute.xlu0 %3038
    %3040 = vrot.lane.b32.xlu0 %v3034, 24
    %v3041 = vpop.permute.xlu0 %3040
    %3044 = vst.msk [vmem:[#allocation2] sm:$0xff] %vm696, %v3039
    %3045 = vst.msk [vmem:[#allocation2 + $0x8] sm:$0xff] %vm696, %v3041
    %v3046 = vld [vmem:[#allocation2] sm:$0xff]
    %v3047 = vld [vmem:[#allocation2 + $0x8] sm:$0xff]
    %v3049 = vsel %vm75, %v3046, 0
    %v3052 = vsel %vm75, %v3047, 0
    %3054 = vmatpush.msra.mxu0 0.0
    %3055 = vmatpush.msra.mxu0 0.0
    %3056 = vmatpush.msra.mxu0 0.0
    %3057 = vmatpush.msra.mxu0 0.0
    %3058 = vmatpush.msra.mxu0 0.0
    %3059 = vmatpush.msra.mxu0 0.0
    %3060 = vmatpush.msra.mxu0 0.0
    %3061 = vmatpush.msra.mxu0 0.0
    %3062 = vmatpush.msra.mxu0 0.0
    %3063 = vmatpush.msra.mxu0 0.0
    %3064 = vmatpush.msra.mxu0 0.0
    %3065 = vmatpush.msra.mxu0 0.0
    %3066 = vmatpush.msra.mxu0 %v2426
    %3067 = vmatpush.msra.mxu0 %v2425
    %3068 = vmatpush.msra.mxu0 %v2424
    %3069 = vmatpush.msra.mxu0 %v2423
    %3070 = vmatmul.f32.gmra.mxu0 %v3049
    %v3071 = vpop.f32.mrf.mxu0
    %v3072 = vadd.f32 %v2378, %v3071
    %3073 = vmatmul.f32.gmra.mxu0 %v3052
    %v3074 = vpop.f32.mrf.mxu0
    %v3075 = vadd.f32 %v2379, %v3074
    %3076 = vdwg.mxu0
    %v3077 = vsel %vm75, %v3072, 0.0
    %3078 = vadd.xlane.f32.xlu0 %v3077
    %v3079 = vpop.xlane.xlu0 %3078
    %v3080 = vsel %vm75, %v3075, 0.0
    %3081 = vadd.xlane.f32.xlu0 %v3080
    %v3082 = vpop.xlane.xlu0 %3081
    %v3083 = vmul.f32 %v3079, %v742
    %v3084 = vmul.f32 %v3082, %v742
    %v3085 = vsub.f32 %v3072, %v3083
    %v3086 = vsub.f32 %v3075, %v3084
    %v3087 = vmul.f32 %v3085, %v3085
    %v3088 = vmul.f32 %v3086, %v3086
    %v3089 = vsel %vm75, %v3087, 0.0
    %3090 = vadd.xlane.f32.xlu0 %v3089
    %v3091 = vpop.xlane.xlu0 %3090
    %v3092 = vsel %vm75, %v3088, 0.0
    %3093 = vadd.xlane.f32.xlu0 %v3092
    %v3094 = vpop.xlane.xlu0 %3093
    %v3095 = vmul.f32 %v3091, %v742
    %v3096 = vmul.f32 %v3094, %v742
    %v3097 = vadd.f32 %v3095, 1e-05
    %v3098 = vadd.f32 %v3096, 1e-05
    %v3099 = vrsqrt.pop %v3097
    %v3100 = vmul.f32 %v3099, %v3097
    %v3101 = vmul.f32 %v3100, %v3099
    %v3102 = vmul.f32 0.5, %v3101
    %v3103 = vsub.f32 1.5, %v3102
    %v3104 = vmul.f32 %v3099, %v3103
    %vm3105 = vweird.f32 %v3097
    %vm3106 = vweird.f32 %v3099
    %vm3107 = vmor %vm3105, %vm3106
    %v3108 = vsel %vm3107, %v3099, %v3104
    %v3109 = vrsqrt.pop %v3098
    %v3110 = vmul.f32 %v3109, %v3098
    %v3111 = vmul.f32 %v3110, %v3109
    %v3112 = vmul.f32 0.5, %v3111
    %v3113 = vsub.f32 1.5, %v3112
    %v3114 = vmul.f32 %v3109, %v3113
    %vm3115 = vweird.f32 %v3098
    %vm3116 = vweird.f32 %v3109
    %vm3117 = vmor %vm3115, %vm3116
    %v3118 = vsel %vm3117, %v3109, %v3114
    %v3119 = vmul.f32 %v3085, %v3108
    %v3120 = vmul.f32 %v3086, %v3118
    %s3121 = scalar_lea.vmem %s16, 16
    %3122 = vst.msk [vmem:[%s3121] sm:$0xff] %vm151, %v2574
    %3123 = vst.msk [vmem:[%s3121 + $0x8] sm:$0xff] %vm151, %v2575
    %3124 = vrot.lane.b32.xlu0 %v2700, 8
    %v3125 = vpop.permute.xlu0 %3124
    %3126 = vrot.lane.b32.xlu0 %v2701, 8
    %v3127 = vpop.permute.xlu0 %3126
    %3130 = vst.msk [vmem:[%s3121] sm:$0xff] %vm414, %v3125
    %3131 = vst.msk [vmem:[%s3121 + $0x8] sm:$0xff] %vm414, %v3127
    %3132 = vrot.lane.b32.xlu0 %v2842, 16
    %v3133 = vpop.permute.xlu0 %3132
    %3134 = vrot.lane.b32.xlu0 %v2843, 16
    %v3135 = vpop.permute.xlu0 %3134
    %3138 = vst.msk [vmem:[%s3121] sm:$0xff] %vm555, %v3133
    %3139 = vst.msk [vmem:[%s3121 + $0x8] sm:$0xff] %vm555, %v3135
    %3140 = vrot.lane.b32.xlu0 %v2982, 24
    %v3141 = vpop.permute.xlu0 %3140
    %3142 = vrot.lane.b32.xlu0 %v2983, 24
    %v3143 = vpop.permute.xlu0 %3142
    %3146 = vst.msk [vmem:[%s3121] sm:$0xff] %vm696, %v3141
    %3147 = vst.msk [vmem:[%s3121 + $0x8] sm:$0xff] %vm696, %v3143
    %s3148 = scalar_lea.vmem %s12, 32
    %v3149 = vld [vmem:[%s3148] sm:$0xff]
    %v3150 = vld [vmem:[%s3148 + $0x8] sm:$0xff]
    %v3151 = vld [vmem:[%s3148 + $0x10] sm:$0xff]
    %v3152 = vld [vmem:[%s3148 + $0x18] sm:$0xff]
    %s3153 = scalar_lea.vmem %s13, 64
    %v3154 = vld [vmem:[%s3153] sm:$0xff]
    %v3155 = vld [vmem:[%s3153 + $0x8] sm:$0xff]
    %v3156 = vld [vmem:[%s3153 + $0x10] sm:$0xff]
    %v3157 = vld [vmem:[%s3153 + $0x18] sm:$0xff]
    %v3158 = vld [vmem:[%s3153 + $0x20] sm:$0xff]
    %v3159 = vld [vmem:[%s3153 + $0x28] sm:$0xff]
    %v3160 = vld [vmem:[%s3153 + $0x30] sm:$0xff]
    %v3161 = vld [vmem:[%s3153 + $0x38] sm:$0xff]
    %v3163 = vsel %vm75, %v3119, 0
    %v3166 = vsel %vm75, %v3120, 0
    %3168 = vmatpush.msra.mxu0 0.0
    %3169 = vmatpush.msra.mxu0 0.0
    %3170 = vmatpush.msra.mxu0 0.0
    %3171 = vmatpush.msra.mxu0 0.0
    %3172 = vmatpush.msra.mxu0 0.0
    %3173 = vmatpush.msra.mxu0 0.0
    %3174 = vmatpush.msra.mxu0 0.0
    %3175 = vmatpush.msra.mxu0 0.0
    %3176 = vmatpush.msra.mxu0 0.0
    %3177 = vmatpush.msra.mxu0 0.0
    %3178 = vmatpush.msra.mxu0 0.0
    %3179 = vmatpush.msra.mxu0 0.0
    %3180 = vmatpush.msra.mxu0 %v3152
    %3181 = vmatpush.msra.mxu0 %v3151
    %3182 = vmatpush.msra.mxu0 %v3150
    %3183 = vmatpush.msra.mxu0 %v3149
    %3184 = vmatmul.f32.gmra.mxu0 %v3163
    %v3185 = vpop.f32.mrf.mxu0
    %v3186 = vadd.f32 0.0, %v3185
    %3187 = vmatmul.f32.gmra.mxu0 %v3166
    %v3188 = vpop.f32.mrf.mxu0
    %v3189 = vadd.f32 0.0, %v3188
    %3190 = vdwg.mxu0
    %v3191 = vmax.f32 %v3186, 0.0
    %v3192 = vmax.f32 %v3189, 0.0
    %v3194 = vsel %vm1592, %v3191, 0
    %v3197 = vsel %vm1592, %v3192, 0
    %3199 = vmatpush.msra.mxu0 0.0
    %3200 = vmatpush.msra.mxu0 0.0
    %3201 = vmatpush.msra.mxu0 0.0
    %3202 = vmatpush.msra.mxu0 0.0
    %3203 = vmatpush.msra.mxu0 0.0
    %3204 = vmatpush.msra.mxu0 0.0
    %3205 = vmatpush.msra.mxu0 0.0
    %3206 = vmatpush.msra.mxu0 0.0
    %3207 = vmatpush.msra.mxu0 %v3161
    %3208 = vmatpush.msra.mxu0 %v3160
    %3209 = vmatpush.msra.mxu0 %v3159
    %3210 = vmatpush.msra.mxu0 %v3158
    %3211 = vmatpush.msra.mxu0 %v3157
    %3212 = vmatpush.msra.mxu0 %v3156
    %3213 = vmatpush.msra.mxu0 %v3155
    %3214 = vmatpush.msra.mxu0 %v3154
    %3215 = vmatmul.f32.gmra.mxu0 %v3194
    %v3216 = vpop.f32.mrf.mxu0
    %v3217 = vadd.f32 %v3119, %v3216
    %3218 = vmatmul.f32.gmra.mxu0 %v3197
    %v3219 = vpop.f32.mrf.mxu0
    %v3220 = vadd.f32 %v3120, %v3219
    %3221 = vdwg.mxu0
    %v3222 = vsel %vm75, %v3217, 0.0
    %3223 = vadd.xlane.f32.xlu0 %v3222
    %v3224 = vpop.xlane.xlu0 %3223
    %v3225 = vsel %vm75, %v3220, 0.0
    %3226 = vadd.xlane.f32.xlu0 %v3225
    %v3227 = vpop.xlane.xlu0 %3226
    %v3228 = vmul.f32 %v3224, %v742
    %v3229 = vmul.f32 %v3227, %v742
    %v3230 = vsub.f32 %v3217, %v3228
    %v3231 = vsub.f32 %v3220, %v3229
    %v3232 = vmul.f32 %v3230, %v3230
    %v3233 = vmul.f32 %v3231, %v3231
    %v3234 = vsel %vm75, %v3232, 0.0
    %3235 = vadd.xlane.f32.xlu0 %v3234
    %v3236 = vpop.xlane.xlu0 %3235
    %v3237 = vsel %vm75, %v3233, 0.0
    %3238 = vadd.xlane.f32.xlu0 %v3237
    %v3239 = vpop.xlane.xlu0 %3238
    %v3240 = vmul.f32 %v3236, %v742
    %v3241 = vmul.f32 %v3239, %v742
    %v3242 = vadd.f32 %v3240, 1e-05
    %v3243 = vadd.f32 %v3241, 1e-05
    %v3244 = vrsqrt.pop %v3242
    %v3245 = vmul.f32 %v3244, %v3242
    %v3246 = vmul.f32 %v3245, %v3244
    %v3247 = vmul.f32 0.5, %v3246
    %v3248 = vsub.f32 1.5, %v3247
    %v3249 = vmul.f32 %v3244, %v3248
    %vm3250 = vweird.f32 %v3242
    %vm3251 = vweird.f32 %v3244
    %vm3252 = vmor %vm3250, %vm3251
    %v3253 = vsel %vm3252, %v3244, %v3249
    %v3254 = vrsqrt.pop %v3243
    %v3255 = vmul.f32 %v3254, %v3243
    %v3256 = vmul.f32 %v3255, %v3254
    %v3257 = vmul.f32 0.5, %v3256
    %v3258 = vsub.f32 1.5, %v3257
    %v3259 = vmul.f32 %v3254, %v3258
    %vm3260 = vweird.f32 %v3243
    %vm3261 = vweird.f32 %v3254
    %vm3262 = vmor %vm3260, %vm3261
    %v3263 = vsel %vm3262, %v3254, %v3259
    %v3264 = vmul.f32 %v3230, %v3253
    %v3265 = vmul.f32 %v3231, %v3263
    %3266 = vst.msk [vmem:[#allocation3] sm:$0xff] %vm75, %v3264
    %3267 = vst.msk [vmem:[#allocation3 + $0x8] sm:$0xff] %vm75, %v3265
    // Predicated region
    $region58: #{decoder_forward.1} parent=1 // pred_check
      _
    $region59: #{decoder_forward.1} parent=1 // pred_check_branch
      %3269 = sbr.rel (0) target = $region61
    $region60: #{decoder_forward.1} parent=1 // pred_region
      %3271 = vsyncadd [#allocation4], 0
      %s3272 = sshll.u32 [#allocation3], 4
      %s3273 = int_to_ptr.vmem [resolvable:$true] %s3272
      %s3274 = sshll.u32 %s14, 4
      %s3275 = int_to_ptr.hbm [resolvable:$true] %s3274
      %3280 = dma.vmem_to_hbm [thread:$0]  %s3273, 256, %s3275, [#allocation4], 128, 128, 8
    $region61: #{decoder_forward.1} parent=1 // pred_fallthru
      _
    // Predicated region
    $region62: #{decoder_forward.1} parent=1 // pred_check
      _
    $region63: #{decoder_forward.1} parent=1 // pred_check_branch
      %3282 = sbr.rel (0) target = $region65
    $region64: #{decoder_forward.1} parent=1 // pred_region
      _
    $region65: #{decoder_forward.1} parent=1 // pred_fallthru
      _
    // Predicated region
    $region66: #{decoder_forward.1} parent=1 // pred_check
      _
    $region67: #{decoder_forward.1} parent=1 // pred_check_branch
      %3284 = sbr.rel (0) target = $region69
    $region68: #{decoder_forward.1} parent=1 // pred_region
      _
    $region69: #{decoder_forward.1} parent=1 // pred_fallthru
      _
    // Predicated region
    $region70: #{decoder_forward.1} parent=1 // pred_check
      _
    $region71: #{decoder_forward.1} parent=1 // pred_check_branch
      %3286 = sbr.rel (0) target = $region73
    $region72: #{decoder_forward.1} parent=1 // pred_region
      %3288 = dma.done [#allocation4], 256
    $region73: #{decoder_forward.1} parent=1 // pred_fallthru
      _
    // Predicated region
    $region74: #{decoder_forward.1} parent=1 // pred_check
      _
    $region75: #{decoder_forward.1} parent=1 // pred_check_branch
      %3290 = sbr.rel (0) target = $region77
    $region76: #{decoder_forward.1} parent=1 // pred_region
      _
    $region77: #{decoder_forward.1} parent=1 // pred_fallthru
      _
    // Predicated region
    $region78: #{decoder_forward.1} parent=1 // pred_check
      _
    $region79: #{decoder_forward.1} parent=1 // pred_check_branch
      %3292 = sbr.rel (0) target = $region81
    $region80: #{decoder_forward.1} parent=1 // pred_region
      _
    $region81: #{decoder_forward.1} parent=1 // pred_fallthru
      _
    %3293 = vsyncpa [#allocation4], 1

</llo_original>
